<compile_context>
chip_gen: v6e
topology: v6e:2x2x1
jax: 0.10.0
libtpu: 0.0.40
codegen_flags: <defaults>
</compile_context>

<pallas_src>
import math
import functools

import jax
import jax.numpy as jnp
from jax.experimental import pallas as pl
from jax.experimental.pallas import tpu as pltpu


def _cdc_kernel(x_ref, w_ref, o_ref, xk_ref, *, tap_offsets, L, C_in):
    """One grid step = one batch element.

    x_ref  : (1, C_in, Rflat)      zero-padded input, flattened over (T+2, H+2, W+2) with a
                                   small flat guard pad so every tap offset is >= 0
    w_ref  : (C_out, 27*C_in)      folded conv weights, tap-major along the K axis
    o_ref  : (1, C_out, L)         output in padded spatial geometry, L = T*(H+2)*(W+2)
    xk_ref : (27*C_in, L) scratch  K-packed activations
    """
    # Pack all 27 (kt, kh, kw) taps along the contraction (sublane) axis.  Each tap is a
    # static flat-offset window of the single padded buffer (no im2col in HBM).
    for tap, off in enumerate(tap_offsets):
        xk_ref[pl.ds(tap * C_in, C_in), :] = x_ref[0, :, pl.ds(off, L)]

    # One MXU matmul with K = 27*C_in; the spatial axis (L) is lane-dense in the output.
    o_ref[0] = jnp.dot(w_ref[...], xk_ref[...],
                       preferred_element_type=jnp.float32).astype(o_ref.dtype)


def t_cdc_avg(x_ncdhw, weight_oidhw, theta=0.7, compute_dtype=jnp.float32):
    """Pallas implementation of T_CDC_Avg.forward (kernel_size=3, stride=1, pad=1, no bias)."""
    N, C_in, T, H, W = x_ncdhw.shape
    C_out, C_in_w, kt_, kh_, kw_ = weight_oidhw.shape
    assert (kt_, kh_, kw_) == (3, 3, 3) and C_in_w == C_in

    Hp, Wp = H + 2, W + 2
    P2 = Hp * Wp
    L = T * P2                    # rows of padded-geometry output per batch
    guard = W + 3                 # flat guard so the (kt=0, kh=0, kw=0) tap offset is 0
    Rflat = (T + 2) * P2 + 2 * guard

    # ---- parameter packing (plain JAX glue) ----
    w = weight_oidhw.astype(jnp.float32)
    # kernel_diff = sum_{kh,kw} (W[:, :, 0] + W[:, :, 2])           (C_out, C_in)
    kd = w[:, :, 0].sum(axis=(2, 3)) + w[:, :, 2].sum(axis=(2, 3))
    # Fold  -theta * AvgPool_t(x) @ kd  into the (kh=1, kw=1) spatial column of the conv.
    center = jnp.zeros((3, 3, 3), jnp.float32).at[:, 1, 1].set(1.0)
    w_fold = w - (float(theta) / 3.0) * kd[:, :, None, None, None] * center[None, None]
    # (C_out, C_in, kt, kh, kw) -> (C_out, 27*C_in), K ordered (kt, kh, kw, c_in)
    w_packed = jnp.transpose(w_fold, (2, 3, 4, 1, 0)).reshape(27 * C_in, C_out).T
    w_packed = w_packed.astype(compute_dtype)

    # ---- input packing: pad once, flatten, guard-pad the flat axis (stays channels-first) ----
    xp = jnp.pad(x_ncdhw, ((0, 0), (0, 0), (1, 1), (1, 1), (1, 1)))
    xflat = xp.reshape(N, C_in, (T + 2) * P2)
    xflat = jnp.pad(xflat, ((0, 0), (0, 0), (guard, guard))).astype(compute_dtype)

    # Static flat offset of each (kt, kh, kw) tap relative to the padded-geometry output.
    tap_offsets = tuple(guard + kt * P2 + (kh - 1) * Wp + (kw - 1)
                        for kt in range(3) for kh in range(3) for kw in range(3))

    kernel = functools.partial(_cdc_kernel, tap_offsets=tap_offsets, L=L, C_in=C_in)

    # NOTE: for large T*H*W*C_in (v7x has 64 MiB VMEM) add a T-tile grid axis with a 1-frame
    # halo and raise vmem_limit_bytes; at these sizes one block per batch fits comfortably.
    out_pad = pl.pallas_call(
        kernel,
        out_shape=jax.ShapeDtypeStruct((N, C_out, L), jnp.float32),
        grid_spec=pltpu.PrefetchScalarGridSpec(
            num_scalar_prefetch=0,
            grid=(N,),
            in_specs=[
                pl.BlockSpec((1, C_in, Rflat), lambda n: (n, 0, 0)),
                pl.BlockSpec((C_out, 27 * C_in), lambda n: (0, 0)),
            ],
            out_specs=pl.BlockSpec((1, C_out, L), lambda n: (n, 0, 0)),
            scratch_shapes=[pltpu.VMEM((27 * C_in, L), compute_dtype)],
        ),
        compiler_params=pltpu.CompilerParams(dimension_semantics=("parallel",)),
    )(xflat, w_packed)

    # Crop the padded-geometry junk border; already NCDHW.
    out = out_pad.reshape(N, C_out, T, Hp, Wp)[:, :, :, 1:H + 1, 1:W + 1]
    return out


def reference(x_ncdhw, weight_oidhw, theta=0.7):
    """Plain-JAX reference matching the PyTorch forward."""
    N, C_in, T, H, W = x_ncdhw.shape
    out_normal = jax.lax.conv_general_dilated(
        x_ncdhw, weight_oidhw, window_strides=(1, 1, 1),
        padding=((1, 1), (1, 1), (1, 1)),
        dimension_numbers=('NCDHW', 'OIDHW', 'NCDHW'))
    xpad = jnp.pad(x_ncdhw, ((0, 0), (0, 0), (1, 1), (0, 0), (0, 0)))
    local_avg = (xpad[:, :, 0:T] + xpad[:, :, 1:1 + T] + xpad[:, :, 2:2 + T]) / 3.0
    kd = (weight_oidhw[:, :, 0].sum(axis=(2, 3))
          + weight_oidhw[:, :, 2].sum(axis=(2, 3)))                  # (C_out, C_in)
    out_diff = jnp.einsum('ncthw,oc->nothw', local_avg, kd)
    return out_normal - theta * out_diff


if __name__ == "__main__":
    N, C_in, C_out, T, H, W = 2, 4, 8, 8, 16, 16
    theta = 0.7

    key = jax.random.PRNGKey(0)
    kx, kw_key = jax.random.split(key)
    x = jax.random.normal(kx, (N, C_in, T, H, W), dtype=jnp.float32)
    # Deterministic Conv3d-style init (uniform with PyTorch-like fan-in bound).
    bound = 1.0 / math.sqrt(C_in * 3 * 3 * 3)
    weight = jax.random.uniform(kw_key, (C_out, C_in, 3, 3, 3),
                                dtype=jnp.float32, minval=-bound, maxval=bound)

    ref = reference(x, weight, theta=theta)

    # f32 compute path (matches the PyTorch module numerics).
    out = jax.block_until_ready(t_cdc_avg(x, weight, theta=theta))
    assert out.shape == ref.shape == (N, C_out, T, H, W)
    max_err = float(jnp.max(jnp.abs(out - ref)))
    assert bool(jnp.allclose(out, ref, atol=1e-4, rtol=1e-4)), f"f32 max_err={max_err}"

    # bf16 compute path (halves HBM traffic, bf16 MXU on v6e/v7x); accumulation stays f32.
    out_bf16 = jax.block_until_ready(
        t_cdc_avg(x, weight, theta=theta, compute_dtype=jnp.bfloat16))
    max_err_bf16 = float(jnp.max(jnp.abs(out_bf16 - ref)))
    assert bool(jnp.allclose(out_bf16, ref, atol=5e-2, rtol=5e-2)), \
        f"bf16 max_err={max_err_bf16}"

    print("KERNEL_OK")
</pallas_src>

<mosaic_0001>
module attributes {stable_mosaic.version = 11 : i64} {
  func.func @_cdc_kernel(%arg0: i32, %arg1: memref<1x4x3278xf32, #tpu.memory_space<vmem>>, %arg2: memref<8x108xf32, #tpu.memory_space<vmem>>, %arg3: memref<1x8x2592xf32, #tpu.memory_space<vmem>>, %arg4: memref<108x2592xf32, #tpu.memory_space<vmem>>) attributes {dimension_semantics = [#tpu.dimension_semantics<parallel>], iteration_bounds = array<i64: 2>, scalar_prefetch = 0 : i64, scratch_operands = 1 : i64, tpu.core_type = #tpu.core_type<tc>, window_params = [{transform_indices = @transform_0, window_bounds = array<i64: 1, 4, 3278>}, {pipeline_mode = #tpu.pipeline_mode<synchronous>, transform_indices = @transform_1, window_bounds = array<i64: 8, 108>}, {transform_indices = @transform_2, window_bounds = array<i64: 1, 8, 2592>}]} {
    %c0 = arith.constant 0 : index
    %c0_0 = arith.constant 0 : index
    %c0_1 = arith.constant 0 : index
    %0 = vector.load %arg1[%c0, %c0_0, %c0_1] : memref<1x4x3278xf32, #tpu.memory_space<vmem>>, vector<1x4x2592xf32>
    %1 = vector.shape_cast %0 : vector<1x4x2592xf32> to vector<4x2592xf32>
    %c0_2 = arith.constant 0 : index
    %c0_3 = arith.constant 0 : index
    %2 = vector.load %arg4[%c0_2, %c0_3] : memref<108x2592xf32, #tpu.memory_space<vmem>>, vector<4x2592xf32>
    tpu.vector_store %arg4[%c0_2, %c0_3], %1 {strides = array<i32>} : memref<108x2592xf32, #tpu.memory_space<vmem>>, vector<4x2592xf32>,
    %c0_4 = arith.constant 0 : index
    %c0_5 = arith.constant 0 : index
    %c1 = arith.constant 1 : index
    %3 = vector.load %arg1[%c0_4, %c0_5, %c1] : memref<1x4x3278xf32, #tpu.memory_space<vmem>>, vector<1x4x2592xf32>
    %4 = vector.shape_cast %3 : vector<1x4x2592xf32> to vector<4x2592xf32>
    %c4 = arith.constant 4 : index
    %c0_6 = arith.constant 0 : index
    %5 = vector.load %arg4[%c4, %c0_6] : memref<108x2592xf32, #tpu.memory_space<vmem>>, vector<4x2592xf32>
    tpu.vector_store %arg4[%c4, %c0_6], %4 {strides = array<i32>} : memref<108x2592xf32, #tpu.memory_space<vmem>>, vector<4x2592xf32>,
    %c0_7 = arith.constant 0 : index
    %c0_8 = arith.constant 0 : index
    %c2 = arith.constant 2 : index
    %6 = vector.load %arg1[%c0_7, %c0_8, %c2] : memref<1x4x3278xf32, #tpu.memory_space<vmem>>, vector<1x4x2592xf32>
    %7 = vector.shape_cast %6 : vector<1x4x2592xf32> to vector<4x2592xf32>
    %c8 = arith.constant 8 : index
    %c0_9 = arith.constant 0 : index
    %8 = vector.load %arg4[%c8, %c0_9] : memref<108x2592xf32, #tpu.memory_space<vmem>>, vector<4x2592xf32>
    tpu.vector_store %arg4[%c8, %c0_9], %7 {strides = array<i32>} : memref<108x2592xf32, #tpu.memory_space<vmem>>, vector<4x2592xf32>,
    %c0_10 = arith.constant 0 : index
    %c0_11 = arith.constant 0 : index
    %c18 = arith.constant 18 : index
    %9 = vector.load %arg1[%c0_10, %c0_11, %c18] : memref<1x4x3278xf32, #tpu.memory_space<vmem>>, vector<1x4x2592xf32>
    %10 = vector.shape_cast %9 : vector<1x4x2592xf32> to vector<4x2592xf32>
    %c12 = arith.constant 12 : index
    %c0_12 = arith.constant 0 : index
    %11 = vector.load %arg4[%c12, %c0_12] : memref<108x2592xf32, #tpu.memory_space<vmem>>, vector<4x2592xf32>
    tpu.vector_store %arg4[%c12, %c0_12], %10 {strides = array<i32>} : memref<108x2592xf32, #tpu.memory_space<vmem>>, vector<4x2592xf32>,
    %c0_13 = arith.constant 0 : index
    %c0_14 = arith.constant 0 : index
    %c19 = arith.constant 19 : index
    %12 = vector.load %arg1[%c0_13, %c0_14, %c19] : memref<1x4x3278xf32, #tpu.memory_space<vmem>>, vector<1x4x2592xf32>
    %13 = vector.shape_cast %12 : vector<1x4x2592xf32> to vector<4x2592xf32>
    %c16 = arith.constant 16 : index
    %c0_15 = arith.constant 0 : index
    %14 = vector.load %arg4[%c16, %c0_15] : memref<108x2592xf32, #tpu.memory_space<vmem>>, vector<4x2592xf32>
    tpu.vector_store %arg4[%c16, %c0_15], %13 {strides = array<i32>} : memref<108x2592xf32, #tpu.memory_space<vmem>>, vector<4x2592xf32>,
    %c0_16 = arith.constant 0 : index
    %c0_17 = arith.constant 0 : index
    %c20 = arith.constant 20 : index
    %15 = vector.load %arg1[%c0_16, %c0_17, %c20] : memref<1x4x3278xf32, #tpu.memory_space<vmem>>, vector<1x4x2592xf32>
    %16 = vector.shape_cast %15 : vector<1x4x2592xf32> to vector<4x2592xf32>
    %c20_18 = arith.constant 20 : index
    %c0_19 = arith.constant 0 : index
    %17 = vector.load %arg4[%c20_18, %c0_19] : memref<108x2592xf32, #tpu.memory_space<vmem>>, vector<4x2592xf32>
    tpu.vector_store %arg4[%c20_18, %c0_19], %16 {strides = array<i32>} : memref<108x2592xf32, #tpu.memory_space<vmem>>, vector<4x2592xf32>,
    %c0_20 = arith.constant 0 : index
    %c0_21 = arith.constant 0 : index
    %c36 = arith.constant 36 : index
    %18 = vector.load %arg1[%c0_20, %c0_21, %c36] : memref<1x4x3278xf32, #tpu.memory_space<vmem>>, vector<1x4x2592xf32>
    %19 = vector.shape_cast %18 : vector<1x4x2592xf32> to vector<4x2592xf32>
    %c24 = arith.constant 24 : index
    %c0_22 = arith.constant 0 : index
    %20 = vector.load %arg4[%c24, %c0_22] : memref<108x2592xf32, #tpu.memory_space<vmem>>, vector<4x2592xf32>
    tpu.vector_store %arg4[%c24, %c0_22], %19 {strides = array<i32>} : memref<108x2592xf32, #tpu.memory_space<vmem>>, vector<4x2592xf32>,
    %c0_23 = arith.constant 0 : index
    %c0_24 = arith.constant 0 : index
    %c37 = arith.constant 37 : index
    %21 = vector.load %arg1[%c0_23, %c0_24, %c37] : memref<1x4x3278xf32, #tpu.memory_space<vmem>>, vector<1x4x2592xf32>
    %22 = vector.shape_cast %21 : vector<1x4x2592xf32> to vector<4x2592xf32>
    %c28 = arith.constant 28 : index
    %c0_25 = arith.constant 0 : index
    %23 = vector.load %arg4[%c28, %c0_25] : memref<108x2592xf32, #tpu.memory_space<vmem>>, vector<4x2592xf32>
    tpu.vector_store %arg4[%c28, %c0_25], %22 {strides = array<i32>} : memref<108x2592xf32, #tpu.memory_space<vmem>>, vector<4x2592xf32>,
    %c0_26 = arith.constant 0 : index
    %c0_27 = arith.constant 0 : index
    %c38 = arith.constant 38 : index
    %24 = vector.load %arg1[%c0_26, %c0_27, %c38] : memref<1x4x3278xf32, #tpu.memory_space<vmem>>, vector<1x4x2592xf32>
    %25 = vector.shape_cast %24 : vector<1x4x2592xf32> to vector<4x2592xf32>
    %c32 = arith.constant 32 : index
    %c0_28 = arith.constant 0 : index
    %26 = vector.load %arg4[%c32, %c0_28] : memref<108x2592xf32, #tpu.memory_space<vmem>>, vector<4x2592xf32>
    tpu.vector_store %arg4[%c32, %c0_28], %25 {strides = array<i32>} : memref<108x2592xf32, #tpu.memory_space<vmem>>, vector<4x2592xf32>,
    %c0_29 = arith.constant 0 : index
    %c0_30 = arith.constant 0 : index
    %c324 = arith.constant 324 : index
    %27 = vector.load %arg1[%c0_29, %c0_30, %c324] : memref<1x4x3278xf32, #tpu.memory_space<vmem>>, vector<1x4x2592xf32>
    %28 = vector.shape_cast %27 : vector<1x4x2592xf32> to vector<4x2592xf32>
    %c36_31 = arith.constant 36 : index
    %c0_32 = arith.constant 0 : index
    %29 = vector.load %arg4[%c36_31, %c0_32] : memref<108x2592xf32, #tpu.memory_space<vmem>>, vector<4x2592xf32>
    tpu.vector_store %arg4[%c36_31, %c0_32], %28 {strides = array<i32>} : memref<108x2592xf32, #tpu.memory_space<vmem>>, vector<4x2592xf32>,
    %c0_33 = arith.constant 0 : index
    %c0_34 = arith.constant 0 : index
    %c325 = arith.constant 325 : index
    %30 = vector.load %arg1[%c0_33, %c0_34, %c325] : memref<1x4x3278xf32, #tpu.memory_space<vmem>>, vector<1x4x2592xf32>
    %31 = vector.shape_cast %30 : vector<1x4x2592xf32> to vector<4x2592xf32>
    %c40 = arith.constant 40 : index
    %c0_35 = arith.constant 0 : index
    %32 = vector.load %arg4[%c40, %c0_35] : memref<108x2592xf32, #tpu.memory_space<vmem>>, vector<4x2592xf32>
    tpu.vector_store %arg4[%c40, %c0_35], %31 {strides = array<i32>} : memref<108x2592xf32, #tpu.memory_space<vmem>>, vector<4x2592xf32>,
    %c0_36 = arith.constant 0 : index
    %c0_37 = arith.constant 0 : index
    %c326 = arith.constant 326 : index
    %33 = vector.load %arg1[%c0_36, %c0_37, %c326] : memref<1x4x3278xf32, #tpu.memory_space<vmem>>, vector<1x4x2592xf32>
    %34 = vector.shape_cast %33 : vector<1x4x2592xf32> to vector<4x2592xf32>
    %c44 = arith.constant 44 : index
    %c0_38 = arith.constant 0 : index
    %35 = vector.load %arg4[%c44, %c0_38] : memref<108x2592xf32, #tpu.memory_space<vmem>>, vector<4x2592xf32>
    tpu.vector_store %arg4[%c44, %c0_38], %34 {strides = array<i32>} : memref<108x2592xf32, #tpu.memory_space<vmem>>, vector<4x2592xf32>,
    %c0_39 = arith.constant 0 : index
    %c0_40 = arith.constant 0 : index
    %c342 = arith.constant 342 : index
    %36 = vector.load %arg1[%c0_39, %c0_40, %c342] : memref<1x4x3278xf32, #tpu.memory_space<vmem>>, vector<1x4x2592xf32>
    %37 = vector.shape_cast %36 : vector<1x4x2592xf32> to vector<4x2592xf32>
    %c48 = arith.constant 48 : index
    %c0_41 = arith.constant 0 : index
    %38 = vector.load %arg4[%c48, %c0_41] : memref<108x2592xf32, #tpu.memory_space<vmem>>, vector<4x2592xf32>
    tpu.vector_store %arg4[%c48, %c0_41], %37 {strides = array<i32>} : memref<108x2592xf32, #tpu.memory_space<vmem>>, vector<4x2592xf32>,
    %c0_42 = arith.constant 0 : index
    %c0_43 = arith.constant 0 : index
    %c343 = arith.constant 343 : index
    %39 = vector.load %arg1[%c0_42, %c0_43, %c343] : memref<1x4x3278xf32, #tpu.memory_space<vmem>>, vector<1x4x2592xf32>
    %40 = vector.shape_cast %39 : vector<1x4x2592xf32> to vector<4x2592xf32>
    %c52 = arith.constant 52 : index
    %c0_44 = arith.constant 0 : index
    %41 = vector.load %arg4[%c52, %c0_44] : memref<108x2592xf32, #tpu.memory_space<vmem>>, vector<4x2592xf32>
    tpu.vector_store %arg4[%c52, %c0_44], %40 {strides = array<i32>} : memref<108x2592xf32, #tpu.memory_space<vmem>>, vector<4x2592xf32>,
    %c0_45 = arith.constant 0 : index
    %c0_46 = arith.constant 0 : index
    %c344 = arith.constant 344 : index
    %42 = vector.load %arg1[%c0_45, %c0_46, %c344] : memref<1x4x3278xf32, #tpu.memory_space<vmem>>, vector<1x4x2592xf32>
    %43 = vector.shape_cast %42 : vector<1x4x2592xf32> to vector<4x2592xf32>
    %c56 = arith.constant 56 : index
    %c0_47 = arith.constant 0 : index
    %44 = vector.load %arg4[%c56, %c0_47] : memref<108x2592xf32, #tpu.memory_space<vmem>>, vector<4x2592xf32>
    tpu.vector_store %arg4[%c56, %c0_47], %43 {strides = array<i32>} : memref<108x2592xf32, #tpu.memory_space<vmem>>, vector<4x2592xf32>,
    %c0_48 = arith.constant 0 : index
    %c0_49 = arith.constant 0 : index
    %c360 = arith.constant 360 : index
    %45 = vector.load %arg1[%c0_48, %c0_49, %c360] : memref<1x4x3278xf32, #tpu.memory_space<vmem>>, vector<1x4x2592xf32>
    %46 = vector.shape_cast %45 : vector<1x4x2592xf32> to vector<4x2592xf32>
    %c60 = arith.constant 60 : index
    %c0_50 = arith.constant 0 : index
    %47 = vector.load %arg4[%c60, %c0_50] : memref<108x2592xf32, #tpu.memory_space<vmem>>, vector<4x2592xf32>
    tpu.vector_store %arg4[%c60, %c0_50], %46 {strides = array<i32>} : memref<108x2592xf32, #tpu.memory_space<vmem>>, vector<4x2592xf32>,
    %c0_51 = arith.constant 0 : index
    %c0_52 = arith.constant 0 : index
    %c361 = arith.constant 361 : index
    %48 = vector.load %arg1[%c0_51, %c0_52, %c361] : memref<1x4x3278xf32, #tpu.memory_space<vmem>>, vector<1x4x2592xf32>
    %49 = vector.shape_cast %48 : vector<1x4x2592xf32> to vector<4x2592xf32>
    %c64 = arith.constant 64 : index
    %c0_53 = arith.constant 0 : index
    %50 = vector.load %arg4[%c64, %c0_53] : memref<108x2592xf32, #tpu.memory_space<vmem>>, vector<4x2592xf32>
    tpu.vector_store %arg4[%c64, %c0_53], %49 {strides = array<i32>} : memref<108x2592xf32, #tpu.memory_space<vmem>>, vector<4x2592xf32>,
    %c0_54 = arith.constant 0 : index
    %c0_55 = arith.constant 0 : index
    %c362 = arith.constant 362 : index
    %51 = vector.load %arg1[%c0_54, %c0_55, %c362] : memref<1x4x3278xf32, #tpu.memory_space<vmem>>, vector<1x4x2592xf32>
    %52 = vector.shape_cast %51 : vector<1x4x2592xf32> to vector<4x2592xf32>
    %c68 = arith.constant 68 : index
    %c0_56 = arith.constant 0 : index
    %53 = vector.load %arg4[%c68, %c0_56] : memref<108x2592xf32, #tpu.memory_space<vmem>>, vector<4x2592xf32>
    tpu.vector_store %arg4[%c68, %c0_56], %52 {strides = array<i32>} : memref<108x2592xf32, #tpu.memory_space<vmem>>, vector<4x2592xf32>,
    %c0_57 = arith.constant 0 : index
    %c0_58 = arith.constant 0 : index
    %c648 = arith.constant 648 : index
    %54 = vector.load %arg1[%c0_57, %c0_58, %c648] : memref<1x4x3278xf32, #tpu.memory_space<vmem>>, vector<1x4x2592xf32>
    %55 = vector.shape_cast %54 : vector<1x4x2592xf32> to vector<4x2592xf32>
    %c72 = arith.constant 72 : index
    %c0_59 = arith.constant 0 : index
    %56 = vector.load %arg4[%c72, %c0_59] : memref<108x2592xf32, #tpu.memory_space<vmem>>, vector<4x2592xf32>
    tpu.vector_store %arg4[%c72, %c0_59], %55 {strides = array<i32>} : memref<108x2592xf32, #tpu.memory_space<vmem>>, vector<4x2592xf32>,
    %c0_60 = arith.constant 0 : index
    %c0_61 = arith.constant 0 : index
    %c649 = arith.constant 649 : index
    %57 = vector.load %arg1[%c0_60, %c0_61, %c649] : memref<1x4x3278xf32, #tpu.memory_space<vmem>>, vector<1x4x2592xf32>
    %58 = vector.shape_cast %57 : vector<1x4x2592xf32> to vector<4x2592xf32>
    %c76 = arith.constant 76 : index
    %c0_62 = arith.constant 0 : index
    %59 = vector.load %arg4[%c76, %c0_62] : memref<108x2592xf32, #tpu.memory_space<vmem>>, vector<4x2592xf32>
    tpu.vector_store %arg4[%c76, %c0_62], %58 {strides = array<i32>} : memref<108x2592xf32, #tpu.memory_space<vmem>>, vector<4x2592xf32>,
    %c0_63 = arith.constant 0 : index
    %c0_64 = arith.constant 0 : index
    %c650 = arith.constant 650 : index
    %60 = vector.load %arg1[%c0_63, %c0_64, %c650] : memref<1x4x3278xf32, #tpu.memory_space<vmem>>, vector<1x4x2592xf32>
    %61 = vector.shape_cast %60 : vector<1x4x2592xf32> to vector<4x2592xf32>
    %c80 = arith.constant 80 : index
    %c0_65 = arith.constant 0 : index
    %62 = vector.load %arg4[%c80, %c0_65] : memref<108x2592xf32, #tpu.memory_space<vmem>>, vector<4x2592xf32>
    tpu.vector_store %arg4[%c80, %c0_65], %61 {strides = array<i32>} : memref<108x2592xf32, #tpu.memory_space<vmem>>, vector<4x2592xf32>,
    %c0_66 = arith.constant 0 : index
    %c0_67 = arith.constant 0 : index
    %c666 = arith.constant 666 : index
    %63 = vector.load %arg1[%c0_66, %c0_67, %c666] : memref<1x4x3278xf32, #tpu.memory_space<vmem>>, vector<1x4x2592xf32>
    %64 = vector.shape_cast %63 : vector<1x4x2592xf32> to vector<4x2592xf32>
    %c84 = arith.constant 84 : index
    %c0_68 = arith.constant 0 : index
    %65 = vector.load %arg4[%c84, %c0_68] : memref<108x2592xf32, #tpu.memory_space<vmem>>, vector<4x2592xf32>
    tpu.vector_store %arg4[%c84, %c0_68], %64 {strides = array<i32>} : memref<108x2592xf32, #tpu.memory_space<vmem>>, vector<4x2592xf32>,
    %c0_69 = arith.constant 0 : index
    %c0_70 = arith.constant 0 : index
    %c667 = arith.constant 667 : index
    %66 = vector.load %arg1[%c0_69, %c0_70, %c667] : memref<1x4x3278xf32, #tpu.memory_space<vmem>>, vector<1x4x2592xf32>
    %67 = vector.shape_cast %66 : vector<1x4x2592xf32> to vector<4x2592xf32>
    %c88 = arith.constant 88 : index
    %c0_71 = arith.constant 0 : index
    %68 = vector.load %arg4[%c88, %c0_71] : memref<108x2592xf32, #tpu.memory_space<vmem>>, vector<4x2592xf32>
    tpu.vector_store %arg4[%c88, %c0_71], %67 {strides = array<i32>} : memref<108x2592xf32, #tpu.memory_space<vmem>>, vector<4x2592xf32>,
    %c0_72 = arith.constant 0 : index
    %c0_73 = arith.constant 0 : index
    %c668 = arith.constant 668 : index
    %69 = vector.load %arg1[%c0_72, %c0_73, %c668] : memref<1x4x3278xf32, #tpu.memory_space<vmem>>, vector<1x4x2592xf32>
    %70 = vector.shape_cast %69 : vector<1x4x2592xf32> to vector<4x2592xf32>
    %c92 = arith.constant 92 : index
    %c0_74 = arith.constant 0 : index
    %71 = vector.load %arg4[%c92, %c0_74] : memref<108x2592xf32, #tpu.memory_space<vmem>>, vector<4x2592xf32>
    tpu.vector_store %arg4[%c92, %c0_74], %70 {strides = array<i32>} : memref<108x2592xf32, #tpu.memory_space<vmem>>, vector<4x2592xf32>,
    %c0_75 = arith.constant 0 : index
    %c0_76 = arith.constant 0 : index
    %c684 = arith.constant 684 : index
    %72 = vector.load %arg1[%c0_75, %c0_76, %c684] : memref<1x4x3278xf32, #tpu.memory_space<vmem>>, vector<1x4x2592xf32>
    %73 = vector.shape_cast %72 : vector<1x4x2592xf32> to vector<4x2592xf32>
    %c96 = arith.constant 96 : index
    %c0_77 = arith.constant 0 : index
    %74 = vector.load %arg4[%c96, %c0_77] : memref<108x2592xf32, #tpu.memory_space<vmem>>, vector<4x2592xf32>
    tpu.vector_store %arg4[%c96, %c0_77], %73 {strides = array<i32>} : memref<108x2592xf32, #tpu.memory_space<vmem>>, vector<4x2592xf32>,
    %c0_78 = arith.constant 0 : index
    %c0_79 = arith.constant 0 : index
    %c685 = arith.constant 685 : index
    %75 = vector.load %arg1[%c0_78, %c0_79, %c685] : memref<1x4x3278xf32, #tpu.memory_space<vmem>>, vector<1x4x2592xf32>
    %76 = vector.shape_cast %75 : vector<1x4x2592xf32> to vector<4x2592xf32>
    %c100 = arith.constant 100 : index
    %c0_80 = arith.constant 0 : index
    %77 = vector.load %arg4[%c100, %c0_80] : memref<108x2592xf32, #tpu.memory_space<vmem>>, vector<4x2592xf32>
    tpu.vector_store %arg4[%c100, %c0_80], %76 {strides = array<i32>} : memref<108x2592xf32, #tpu.memory_space<vmem>>, vector<4x2592xf32>,
    %c0_81 = arith.constant 0 : index
    %c0_82 = arith.constant 0 : index
    %c686 = arith.constant 686 : index
    %78 = vector.load %arg1[%c0_81, %c0_82, %c686] : memref<1x4x3278xf32, #tpu.memory_space<vmem>>, vector<1x4x2592xf32>
    %79 = vector.shape_cast %78 : vector<1x4x2592xf32> to vector<4x2592xf32>
    %c104 = arith.constant 104 : index
    %c0_83 = arith.constant 0 : index
    %80 = vector.load %arg4[%c104, %c0_83] : memref<108x2592xf32, #tpu.memory_space<vmem>>, vector<4x2592xf32>
    tpu.vector_store %arg4[%c104, %c0_83], %79 {strides = array<i32>} : memref<108x2592xf32, #tpu.memory_space<vmem>>, vector<4x2592xf32>,
    %c0_84 = arith.constant 0 : index
    %c0_85 = arith.constant 0 : index
    %81 = vector.load %arg2[%c0_84, %c0_85] : memref<8x108xf32, #tpu.memory_space<vmem>>, vector<8x108xf32>
    %c0_86 = arith.constant 0 : index
    %c0_87 = arith.constant 0 : index
    %82 = vector.load %arg4[%c0_86, %c0_87] : memref<108x2592xf32, #tpu.memory_space<vmem>>, vector<108x2592xf32>
    %cst = arith.constant dense<0.000000e+00> : vector<8x2592xf32>
    %83 = tpu.matmul %81, %82, %cst {dimension_numbers = #tpu.dot_dimension_numbers<[1], [0], [0], [1], [0, 0, 1, 1], [], []>} : vector<8x108xf32>, vector<108x2592xf32>, vector<8x2592xf32> -> vector<8x2592xf32>
    %c0_88 = arith.constant 0 : index
    %c0_89 = arith.constant 0 : index
    %c0_90 = arith.constant 0 : index
    %84 = vector.load %arg3[%c0_88, %c0_89, %c0_90] : memref<1x8x2592xf32, #tpu.memory_space<vmem>>, vector<1x8x2592xf32>
    %85 = vector.shape_cast %84 : vector<1x8x2592xf32> to vector<8x2592xf32>
    %86 = vector.shape_cast %83 : vector<8x2592xf32> to vector<1x8x2592xf32>
    tpu.vector_store %arg3[%c0_88, %c0_89, %c0_90], %86 {strides = array<i32>} : memref<1x8x2592xf32, #tpu.memory_space<vmem>>, vector<1x8x2592xf32>,
    return
  }
  func.func @transform_0(%arg0: i32) -> (i32, i32, i32) {
    %c0_i32 = arith.constant 0 : i32
    %c0_i32_0 = arith.constant 0 : i32
    %c0_i32_1 = arith.constant 0 : i32
    return %arg0, %c0_i32, %c0_i32_0 : i32, i32, i32
  }
  func.func @transform_1(%arg0: i32) -> (i32, i32) {
    %c0_i32 = arith.constant 0 : i32
    %c0_i32_0 = arith.constant 0 : i32
    %c0_i32_1 = arith.constant 0 : i32
    return %c0_i32, %c0_i32_0 : i32, i32
  }
  func.func @transform_2(%arg0: i32) -> (i32, i32, i32) {
    %c0_i32 = arith.constant 0 : i32
    %c0_i32_0 = arith.constant 0 : i32
    %c0_i32_1 = arith.constant 0 : i32
    return %arg0, %c0_i32, %c0_i32_0 : i32, i32, i32
  }
}

</mosaic_0001>

<llo_original>
// kernel: tpu_custom_call.1
$region0: #{tpu_custom_call.1}
  #allocation0 [shape = 'u32[]', space=smem, size = 0x4, offset = 0x4, fixed_abs, tag = 'smem constant byte address 0x4 - core index']
  #allocation1 [shape = 'u32[144,128]{1,0:T(1,128)}', space=vmem, size = 0x12000, scoped, tag = 'internal scratch']
  #allocation2 [shape = 'f32[108,2592]{1,0:T(8,128)}', space=vmem, size = 0x126000, scoped, tag = 'scratch operand']
  %s0 = inlined_call_operand.hbm [shape: f32[2,4,3278], index: 0, kind: input, shape index: {}]
  %s1 = inlined_call_operand.hbm [shape: f32[8,108], index: 1, kind: input, shape index: {}]
  %s2 = inlined_call_operand.hbm [shape: f32[2,8,2592], index: 2, kind: output, shape index: {}]
  %s3 = sld [smem:[#allocation0]]
  $region49: #{tpu_custom_call.1} parent=0
    _
  %s5 = ssub.s32 1, %s3
  %s6 = scalar_select 0, %s5, %s3
  $region1: #{tpu_custom_call.1} parent=0
    #allocation3 [shape = 'u8[106496]{0}', space=vmem, size = 0x1a000, scoped, tag = 'input window, operand 0']
    #allocation4 [shape = 's32[2]{0}', space=sflag, size = 0x8, scoped, tag = 'scoped memory for tpu_custom_call.1']
    #allocation5 [shape = 's32[2]{0}', space=sflag, size = 0x8, scoped, tag = 'scoped memory for tpu_custom_call.1']
    #allocation6 [shape = 'u8[4096]{0}', space=vmem, size = 0x1000, scoped, tag = 'input window, operand 1, single buffered']
    #allocation7 [shape = 's32[1]{0}', space=sflag, size = 0x4, scoped, tag = 'scoped memory for tpu_custom_call.1']
    #allocation8 [shape = 'u8[172032]{0}', space=vmem, size = 0x2a000, scoped, tag = 'output window, operand 0']
    %7 = vsyncpa [#allocation4], 0
    %s8 = scalar_lea.sflag [#allocation4], 1
    %9 = vsyncpa %s8, 0
    %10 = vsyncpa [#allocation7], 0
    %11 = vsyncpa [#allocation5], 0
    %s12 = scalar_lea.sflag [#allocation5], 1
    %13 = vsyncpa %s12, 0
    loop: start=0, step=1, limit=4
    $region2: #{tpu_custom_call.1} parent=1 // loop_pre_header
      _
    $region3: #{tpu_custom_call.1} parent=1 // loop_header
      %s15 = sphi 0, %s19
      %p16 = scmp.ge.s32.totalorder %s15, 4
      %s25 = sphi 0, %s27
      %s28 = sphi 0, %s25
      %s29 = sphi 0, %s28
      %s45 = sphi 0, %s29
      %s49 = sphi 0, %s49
      %s51 = sphi 0, %s49
      %s52 = sphi 0, %s51
      %s66 = sphi 0, %s52
      %s72 = sphi 0, %s74
      %s75 = sphi 0, %s72
      %s76 = sphi 0, %s75
      %s92 = sphi 0, %s76
    $region4: #{tpu_custom_call.1} parent=1 // loop_header_branch
      %18 = sbr.rel (%p16) target = $region8
    $region5: #{tpu_custom_call.1} parent=1 // loop_body
      %s20 = ssub.s32 %s15, 1
      %s21 = ssub.s32 %s15, 2
      %s22 = sadd.s32 %s15, 1
      %s23 = ssub.s32 %s15, %s22
      %p24 = scmp.eq.s32.totalorder %s23, 0
      %s26 = sadd.s32 %s25, 1
      %s27 = scalar_select %p24, %s25, %s26
      %p30 = pneg %p24
      %p31 = scmp.eq.s32.totalorder %s15, 1
      %p32 = por %p30, %p31
      %p33 = scmp.ne.s32.totalorder %s25, %s28
      %p34 = scmp.eq.s32.totalorder %s15, 0
      %p35 = por %p33, %p34
      %p36 = scmp.ne.s32.totalorder %s25, %s28
      %p37 = scmp.eq.s32.totalorder %s20, 1
      %p38 = por %p36, %p37
      %p39 = scmp.ne.s32.totalorder %s28, %s29
      %p40 = scmp.eq.s32.totalorder %s20, 0
      %p41 = por %p39, %p40
      %p42 = scmp.ne.s32.totalorder %s28, %s29
      %p43 = scmp.eq.s32.totalorder %s21, 1
      %p44 = por %p42, %p43
      %p46 = scmp.ne.s32.totalorder %s29, %s45
      %p47 = scmp.eq.s32.totalorder %s21, 0
      %p48 = por %p46, %p47
      %s50 = sadd.s32 %s49, 1
      %p53 = scmp.eq.s32.totalorder %s15, 1
      %p54 = scmp.ne.s32.totalorder %s49, %s51
      %p55 = scmp.eq.s32.totalorder %s15, 0
      %p56 = por %p54, %p55
      %p57 = scmp.ne.s32.totalorder %s49, %s51
      %p58 = scmp.eq.s32.totalorder %s20, 1
      %p59 = por %p57, %p58
      %p60 = scmp.ne.s32.totalorder %s51, %s52
      %p61 = scmp.eq.s32.totalorder %s20, 0
      %p62 = por %p60, %p61
      %p63 = scmp.ne.s32.totalorder %s51, %s52
      %p64 = scmp.eq.s32.totalorder %s21, 1
      %p65 = por %p63, %p64
      %p67 = scmp.ne.s32.totalorder %s52, %s66
      %p68 = scmp.eq.s32.totalorder %s21, 0
      %p69 = por %p67, %p68
      %s70 = ssub.s32 %s15, %s22
      %p71 = scmp.eq.s32.totalorder %s70, 0
      %s73 = sadd.s32 %s72, 1
      %s74 = scalar_select %p71, %s72, %s73
      %p77 = pneg %p71
      %p78 = scmp.eq.s32.totalorder %s15, 1
      %p79 = por %p77, %p78
      %p80 = scmp.ne.s32.totalorder %s72, %s75
      %p81 = scmp.eq.s32.totalorder %s15, 0
      %p82 = por %p80, %p81
      %p83 = scmp.ne.s32.totalorder %s72, %s75
      %p84 = scmp.eq.s32.totalorder %s20, 1
      %p85 = por %p83, %p84
      %p86 = scmp.ne.s32.totalorder %s75, %s76
      %p87 = scmp.eq.s32.totalorder %s20, 0
      %p88 = por %p86, %p87
      %p89 = scmp.ne.s32.totalorder %s75, %s76
      %p90 = scmp.eq.s32.totalorder %s21, 1
      %p91 = por %p89, %p90
      %p93 = scmp.ne.s32.totalorder %s76, %s92
      %p94 = scmp.eq.s32.totalorder %s21, 0
      %p95 = por %p93, %p94
      %p96 = scmp.le.s32.totalorder 1, %s15
      %p97 = scmp.lt.s32.totalorder %s15, 3
      %p98 = pnand %p96, %p97
      %p99 = pneg %p98
      // Predicated region
      $region9: #{tpu_custom_call.1} parent=5 // pred_check
        _
      $region10: #{tpu_custom_call.1} parent=5 // pred_check_branch
        %101 = sbr.rel (%p98) target = $region12
      $region11: #{tpu_custom_call.1} parent=5 // pred_region
        %s102 = ssub.s32 %s15, 1
        // Predicated region
        $region13: #{tpu_custom_call.1} parent=11 // pred_check
          %p103 = pneg %p62
        $region14: #{tpu_custom_call.1} parent=11 // pred_check_branch
          %105 = sbr.rel (%p103) target = $region16
        $region15: #{tpu_custom_call.1} parent=11 // pred_region
          %s107 = ssub.s32 128, 128
          %108 = vsyncadd [#allocation7], %s107
          %s110 = sshll.u32 [#allocation6], 4
          %s111 = int_to_ptr.vmem [resolvable:$true] %s110
          %113 = dma.hbm_to_vmem [thread:$0]  %s1, 128, %s111, [#allocation7]
        $region16: #{tpu_custom_call.1} parent=11 // pred_fallthru
          _
      $region12: #{tpu_custom_call.1} parent=5 // pred_fallthru
        _
      %p114 = scmp.lt.s32.totalorder %s15, 2
      // Predicated region
      $region17: #{tpu_custom_call.1} parent=5 // pred_check
        %p115 = pneg %p114
      $region18: #{tpu_custom_call.1} parent=5 // pred_check_branch
        %117 = sbr.rel (%p115) target = $region20
      $region19: #{tpu_custom_call.1} parent=5 // pred_region
        // Predicated region
        $region21: #{tpu_custom_call.1} parent=19 // pred_check
          %p118 = pneg %p35
        $region22: #{tpu_custom_call.1} parent=19 // pred_check_branch
          %120 = sbr.rel (%p118) target = $region24
        $region23: #{tpu_custom_call.1} parent=19 // pred_region
          %s121 = sand.u32 %s25, 1
          %s122 = scalar_lea.sflag [#allocation4], %s121
          %s123 = sand.u32 %s25, 1
          %s124 = smul.addr %s123, 104
          %s125 = scalar_lea.vmem [#allocation3], %s124
          %s127 = ssub.s32 1664, 1664
          %128 = vsyncadd %s122, %s127
          %s129 = smul.addr %s15, 26
          %s130 = smul.addr %s129, 64
          %s131 = scalar_lea.hbm %s0, %s130
          %s133 = sshll.u32 %s125, 4
          %s134 = int_to_ptr.vmem [resolvable:$true] %s133
          %136 = dma.hbm_to_vmem [thread:$0]  %s131, 1664, %s134, %s122
        $region24: #{tpu_custom_call.1} parent=19 // pred_fallthru
          _
      $region20: #{tpu_custom_call.1} parent=5 // pred_fallthru
        _
      %p137 = scmp.le.s32.totalorder 1, %s15
      %p138 = scmp.lt.s32.totalorder %s15, 3
      %p139 = pnand %p137, %p138
      %p140 = pneg %p139
      // Predicated region
      $region25: #{tpu_custom_call.1} parent=5 // pred_check
        _
      $region26: #{tpu_custom_call.1} parent=5 // pred_check_branch
        %142 = sbr.rel (%p139) target = $region28
      $region27: #{tpu_custom_call.1} parent=5 // pred_region
        %s143 = ssub.s32 %s15, 1
        %s144 = sand.u32 %s28, 1
        %s145 = scalar_lea.sflag [#allocation4], %s144
        %s146 = sand.u32 %s28, 1
        %s147 = smul.addr %s146, 104
        %s148 = scalar_lea.vmem [#allocation3], %s147
        // Predicated region
        $region29: #{tpu_custom_call.1} parent=27 // pred_check
          %p149 = pneg %p41
        $region30: #{tpu_custom_call.1} parent=27 // pred_check_branch
          %151 = sbr.rel (%p149) target = $region32
        $region31: #{tpu_custom_call.1} parent=27 // pred_region
          %152 = dma.done %s145, 1664
        $region32: #{tpu_custom_call.1} parent=27 // pred_fallthru
          _
        // Predicated region
        $region33: #{tpu_custom_call.1} parent=27 // pred_check
          %p153 = pneg %p62
        $region34: #{tpu_custom_call.1} parent=27 // pred_check_branch
          %155 = sbr.rel (%p153) target = $region36
        $region35: #{tpu_custom_call.1} parent=27 // pred_region
          %156 = dma.done [#allocation7], 128
        $region36: #{tpu_custom_call.1} parent=27 // pred_fallthru
          _
        %s157 = sand.u32 %s28, 1
        %s158 = scalar_lea.sflag [#allocation4], %s157
        %s159 = sand.u32 %s28, 1
        %s160 = smul.addr %s159, 104
        %s161 = scalar_lea.vmem [#allocation3], %s160
        %p162 = pneg %p41
        %p163 = pneg %p38
        %p164 = pneg %p62
        %p165 = pneg %p59
        %p166 = pneg %p88
        %p167 = pneg %p85
        %s168 = sand.u32 %s75, 1
        %s169 = scalar_lea.sflag [#allocation5], %s168
        %s170 = sand.u32 %s75, 1
        %s171 = smul.addr %s170, 168
        %s172 = scalar_lea.vmem [#allocation8], %s171
        %v173 = vld [vmem:[%s148] sm:$0xff]
        %v174 = vld [vmem:[%s148 + $0x8] sm:$0xff]
        %v175 = vld [vmem:[%s148 + $0x10] sm:$0xff]
        %v176 = vld [vmem:[%s148 + $0x18] sm:$0xff]
        %v177 = vld [vmem:[%s148 + $0x20] sm:$0xff]
        %v178 = vld [vmem:[%s148 + $0x28] sm:$0xff]
        %v179 = vld [vmem:[%s148 + $0x30] sm:$0xff]
        %v180 = vld [vmem:[%s148 + $0x38] sm:$0xff]
        %v181 = vld [vmem:[%s148 + $0x40] sm:$0xff]
        %v182 = vld [vmem:[%s148 + $0x48] sm:$0xff]
        %v183 = vld [vmem:[%s148 + $0x50] sm:$0xf]
        %v194 = vcombine.high %v173, %v173
        %v195 = vcombine.high %v174, %v174
        %v196 = vcombine.high %v175, %v175
        %v197 = vcombine.high %v176, %v176
        %v198 = vcombine.high %v177, %v177
        %v199 = vcombine.high %v178, %v178
        %v200 = vcombine.high %v179, %v179
        %v201 = vcombine.high %v180, %v180
        %v202 = vcombine.high %v181, %v181
        %v203 = vcombine.high %v182, %v182
        %214 = vst [vmem:[#allocation2] sm:$0xf] %v173
        %215 = vst [vmem:[#allocation2 + $0x8] sm:$0xf] %v194
        %216 = vst [vmem:[#allocation2 + $0x10] sm:$0xf] %v174
        %217 = vst [vmem:[#allocation2 + $0x18] sm:$0xf] %v195
        %218 = vst [vmem:[#allocation2 + $0x20] sm:$0xf] %v175
        %219 = vst [vmem:[#allocation2 + $0x28] sm:$0xf] %v196
        %220 = vst [vmem:[#allocation2 + $0x30] sm:$0xf] %v176
        %221 = vst [vmem:[#allocation2 + $0x38] sm:$0xf] %v197
        %222 = vst [vmem:[#allocation2 + $0x40] sm:$0xf] %v177
        %223 = vst [vmem:[#allocation2 + $0x48] sm:$0xf] %v198
        %224 = vst [vmem:[#allocation2 + $0x50] sm:$0xf] %v178
        %225 = vst [vmem:[#allocation2 + $0x58] sm:$0xf] %v199
        %226 = vst [vmem:[#allocation2 + $0x60] sm:$0xf] %v179
        %227 = vst [vmem:[#allocation2 + $0x68] sm:$0xf] %v200
        %228 = vst [vmem:[#allocation2 + $0x70] sm:$0xf] %v180
        %229 = vst [vmem:[#allocation2 + $0x78] sm:$0xf] %v201
        %230 = vst [vmem:[#allocation2 + $0x80] sm:$0xf] %v181
        %231 = vst [vmem:[#allocation2 + $0x88] sm:$0xf] %v202
        %232 = vst [vmem:[#allocation2 + $0x90] sm:$0xf] %v182
        %233 = vst [vmem:[#allocation2 + $0x98] sm:$0xf] %v203
        %vm234 = vcmask 257024
        %235 = vst.msk [vmem:[#allocation2 + $0xa0] sm:$0xf] %vm234, %v183
        %v236 = vld [vmem:[%s148] sm:$0xff]
        %v237 = vld [vmem:[%s148 + $0x8] sm:$0xff]
        %v238 = vld [vmem:[%s148 + $0x10] sm:$0xff]
        %v239 = vld [vmem:[%s148 + $0x18] sm:$0xff]
        %v240 = vld [vmem:[%s148 + $0x20] sm:$0xff]
        %v241 = vld [vmem:[%s148 + $0x28] sm:$0xff]
        %v242 = vld [vmem:[%s148 + $0x30] sm:$0xff]
        %v243 = vld [vmem:[%s148 + $0x38] sm:$0xff]
        %v244 = vld [vmem:[%s148 + $0x40] sm:$0xff]
        %v245 = vld [vmem:[%s148 + $0x48] sm:$0xff]
        %v246 = vld [vmem:[%s148 + $0x50] sm:$0xf]
        %v258 = vcombine.low %v236, %v236
        %v259 = vcombine.low %v237, %v237
        %v260 = vcombine.low %v238, %v238
        %v261 = vcombine.low %v239, %v239
        %v262 = vcombine.low %v240, %v240
        %v263 = vcombine.low %v241, %v241
        %v264 = vcombine.low %v242, %v242
        %v265 = vcombine.low %v243, %v243
        %v266 = vcombine.low %v244, %v244
        %v267 = vcombine.low %v245, %v245
        %v268 = vcombine.low %v246, %v246
        %269 = vrot.lane.b32.xlu0 %v258, 127
        %v270 = vpop.permute.xlu0 %269
        %271 = vrot.lane.b32.xlu0 %v236, 127
        %v272 = vpop.permute.xlu0 %271
        %273 = vrot.lane.b32.xlu0 %v259, 127
        %v274 = vpop.permute.xlu0 %273
        %275 = vrot.lane.b32.xlu0 %v237, 127
        %v276 = vpop.permute.xlu0 %275
        %277 = vrot.lane.b32.xlu0 %v260, 127
        %v278 = vpop.permute.xlu0 %277
        %279 = vrot.lane.b32.xlu0 %v238, 127
        %v280 = vpop.permute.xlu0 %279
        %281 = vrot.lane.b32.xlu0 %v261, 127
        %v282 = vpop.permute.xlu0 %281
        %283 = vrot.lane.b32.xlu0 %v239, 127
        %v284 = vpop.permute.xlu0 %283
        %285 = vrot.lane.b32.xlu0 %v262, 127
        %v286 = vpop.permute.xlu0 %285
        %287 = vrot.lane.b32.xlu0 %v240, 127
        %v288 = vpop.permute.xlu0 %287
        %289 = vrot.lane.b32.xlu0 %v263, 127
        %v290 = vpop.permute.xlu0 %289
        %291 = vrot.lane.b32.xlu0 %v241, 127
        %v292 = vpop.permute.xlu0 %291
        %293 = vrot.lane.b32.xlu0 %v264, 127
        %v294 = vpop.permute.xlu0 %293
        %295 = vrot.lane.b32.xlu0 %v242, 127
        %v296 = vpop.permute.xlu0 %295
        %297 = vrot.lane.b32.xlu0 %v265, 127
        %v298 = vpop.permute.xlu0 %297
        %299 = vrot.lane.b32.xlu0 %v243, 127
        %v300 = vpop.permute.xlu0 %299
        %301 = vrot.lane.b32.xlu0 %v266, 127
        %v302 = vpop.permute.xlu0 %301
        %303 = vrot.lane.b32.xlu0 %v244, 127
        %v304 = vpop.permute.xlu0 %303
        %305 = vrot.lane.b32.xlu0 %v267, 127
        %v306 = vpop.permute.xlu0 %305
        %307 = vrot.lane.b32.xlu0 %v245, 127
        %v308 = vpop.permute.xlu0 %307
        %309 = vrot.lane.b32.xlu0 %v268, 127
        %v310 = vpop.permute.xlu0 %309
        %vm311 = vcmask 1039360
        %v312 = vsel %vm311, %v270, %v272
        %v313 = vsel %vm311, %v272, %v274
        %v314 = vsel %vm311, %v274, %v276
        %v315 = vsel %vm311, %v276, %v278
        %v316 = vsel %vm311, %v278, %v280
        %v317 = vsel %vm311, %v280, %v282
        %v318 = vsel %vm311, %v282, %v284
        %v319 = vsel %vm311, %v284, %v286
        %v320 = vsel %vm311, %v286, %v288
        %v321 = vsel %vm311, %v288, %v290
        %v322 = vsel %vm311, %v290, %v292
        %v323 = vsel %vm311, %v292, %v294
        %v324 = vsel %vm311, %v294, %v296
        %v325 = vsel %vm311, %v296, %v298
        %v326 = vsel %vm311, %v298, %v300
        %v327 = vsel %vm311, %v300, %v302
        %v328 = vsel %vm311, %v302, %v304
        %v329 = vsel %vm311, %v304, %v306
        %v330 = vsel %vm311, %v306, %v308
        %v331 = vsel %vm311, %v308, %v310
        %353 = vst [vmem:[#allocation2] sm:$0xf0] %v312
        %354 = vst [vmem:[#allocation2 + $0x8] sm:$0xf0] %v313
        %355 = vst [vmem:[#allocation2 + $0x10] sm:$0xf0] %v314
        %356 = vst [vmem:[#allocation2 + $0x18] sm:$0xf0] %v315
        %357 = vst [vmem:[#allocation2 + $0x20] sm:$0xf0] %v316
        %358 = vst [vmem:[#allocation2 + $0x28] sm:$0xf0] %v317
        %359 = vst [vmem:[#allocation2 + $0x30] sm:$0xf0] %v318
        %360 = vst [vmem:[#allocation2 + $0x38] sm:$0xf0] %v319
        %361 = vst [vmem:[#allocation2 + $0x40] sm:$0xf0] %v320
        %362 = vst [vmem:[#allocation2 + $0x48] sm:$0xf0] %v321
        %363 = vst [vmem:[#allocation2 + $0x50] sm:$0xf0] %v322
        %364 = vst [vmem:[#allocation2 + $0x58] sm:$0xf0] %v323
        %365 = vst [vmem:[#allocation2 + $0x60] sm:$0xf0] %v324
        %366 = vst [vmem:[#allocation2 + $0x68] sm:$0xf0] %v325
        %367 = vst [vmem:[#allocation2 + $0x70] sm:$0xf0] %v326
        %368 = vst [vmem:[#allocation2 + $0x78] sm:$0xf0] %v327
        %369 = vst [vmem:[#allocation2 + $0x80] sm:$0xf0] %v328
        %370 = vst [vmem:[#allocation2 + $0x88] sm:$0xf0] %v329
        %371 = vst [vmem:[#allocation2 + $0x90] sm:$0xf0] %v330
        %372 = vst [vmem:[#allocation2 + $0x98] sm:$0xf0] %v331
        %vm373 = vcmask 261124
        %374 = vst.msk [vmem:[#allocation2 + $0xa0] sm:$0xf0] %vm373, %v310
        %v375 = vld [vmem:[%s148] sm:$0xff]
        %v376 = vld [vmem:[%s148 + $0x8] sm:$0xff]
        %v377 = vld [vmem:[%s148 + $0x10] sm:$0xff]
        %v378 = vld [vmem:[%s148 + $0x18] sm:$0xff]
        %v379 = vld [vmem:[%s148 + $0x20] sm:$0xff]
        %v380 = vld [vmem:[%s148 + $0x28] sm:$0xff]
        %v381 = vld [vmem:[%s148 + $0x30] sm:$0xff]
        %v382 = vld [vmem:[%s148 + $0x38] sm:$0xff]
        %v383 = vld [vmem:[%s148 + $0x40] sm:$0xff]
        %v384 = vld [vmem:[%s148 + $0x48] sm:$0xff]
        %v385 = vld [vmem:[%s148 + $0x50] sm:$0xf]
        %v397 = vcombine.high %v375, %v375
        %v398 = vcombine.high %v376, %v376
        %v399 = vcombine.high %v377, %v377
        %v400 = vcombine.high %v378, %v378
        %v401 = vcombine.high %v379, %v379
        %v402 = vcombine.high %v380, %v380
        %v403 = vcombine.high %v381, %v381
        %v404 = vcombine.high %v382, %v382
        %v405 = vcombine.high %v383, %v383
        %v406 = vcombine.high %v384, %v384
        %407 = vrot.lane.b32.xlu0 %v375, 126
        %v408 = vpop.permute.xlu0 %407
        %409 = vrot.lane.b32.xlu0 %v397, 126
        %v410 = vpop.permute.xlu0 %409
        %411 = vrot.lane.b32.xlu0 %v376, 126
        %v412 = vpop.permute.xlu0 %411
        %413 = vrot.lane.b32.xlu0 %v398, 126
        %v414 = vpop.permute.xlu0 %413
        %415 = vrot.lane.b32.xlu0 %v377, 126
        %v416 = vpop.permute.xlu0 %415
        %417 = vrot.lane.b32.xlu0 %v399, 126
        %v418 = vpop.permute.xlu0 %417
        %419 = vrot.lane.b32.xlu0 %v378, 126
        %v420 = vpop.permute.xlu0 %419
        %421 = vrot.lane.b32.xlu0 %v400, 126
        %v422 = vpop.permute.xlu0 %421
        %423 = vrot.lane.b32.xlu0 %v379, 126
        %v424 = vpop.permute.xlu0 %423
        %425 = vrot.lane.b32.xlu0 %v401, 126
        %v426 = vpop.permute.xlu0 %425
        %427 = vrot.lane.b32.xlu0 %v380, 126
        %v428 = vpop.permute.xlu0 %427
        %429 = vrot.lane.b32.xlu0 %v402, 126
        %v430 = vpop.permute.xlu0 %429
        %431 = vrot.lane.b32.xlu0 %v381, 126
        %v432 = vpop.permute.xlu0 %431
        %433 = vrot.lane.b32.xlu0 %v403, 126
        %v434 = vpop.permute.xlu0 %433
        %435 = vrot.lane.b32.xlu0 %v382, 126
        %v436 = vpop.permute.xlu0 %435
        %437 = vrot.lane.b32.xlu0 %v404, 126
        %v438 = vpop.permute.xlu0 %437
        %439 = vrot.lane.b32.xlu0 %v383, 126
        %v440 = vpop.permute.xlu0 %439
        %441 = vrot.lane.b32.xlu0 %v405, 126
        %v442 = vpop.permute.xlu0 %441
        %443 = vrot.lane.b32.xlu0 %v384, 126
        %v444 = vpop.permute.xlu0 %443
        %445 = vrot.lane.b32.xlu0 %v406, 126
        %v446 = vpop.permute.xlu0 %445
        %447 = vrot.lane.b32.xlu0 %v385, 126
        %v448 = vpop.permute.xlu0 %447
        %vm449 = vcmask 1031168
        %v450 = vsel %vm449, %v408, %v410
        %v451 = vsel %vm449, %v410, %v412
        %v452 = vsel %vm449, %v412, %v414
        %v453 = vsel %vm449, %v414, %v416
        %v454 = vsel %vm449, %v416, %v418
        %v455 = vsel %vm449, %v418, %v420
        %v456 = vsel %vm449, %v420, %v422
        %v457 = vsel %vm449, %v422, %v424
        %v458 = vsel %vm449, %v424, %v426
        %v459 = vsel %vm449, %v426, %v428
        %v460 = vsel %vm449, %v428, %v430
        %v461 = vsel %vm449, %v430, %v432
        %v462 = vsel %vm449, %v432, %v434
        %v463 = vsel %vm449, %v434, %v436
        %v464 = vsel %vm449, %v436, %v438
        %v465 = vsel %vm449, %v438, %v440
        %v466 = vsel %vm449, %v440, %v442
        %v467 = vsel %vm449, %v442, %v444
        %v468 = vsel %vm449, %v444, %v446
        %v469 = vsel %vm449, %v446, %v448
        %491 = vst [vmem:[#allocation2 + $0xa8] sm:$0xf] %v450
        %492 = vst [vmem:[#allocation2 + $0xb0] sm:$0xf] %v451
        %493 = vst [vmem:[#allocation2 + $0xb8] sm:$0xf] %v452
        %494 = vst [vmem:[#allocation2 + $0xc0] sm:$0xf] %v453
        %495 = vst [vmem:[#allocation2 + $0xc8] sm:$0xf] %v454
        %496 = vst [vmem:[#allocation2 + $0xd0] sm:$0xf] %v455
        %497 = vst [vmem:[#allocation2 + $0xd8] sm:$0xf] %v456
        %498 = vst [vmem:[#allocation2 + $0xe0] sm:$0xf] %v457
        %499 = vst [vmem:[#allocation2 + $0xe8] sm:$0xf] %v458
        %500 = vst [vmem:[#allocation2 + $0xf0] sm:$0xf] %v459
        %501 = vst [vmem:[#allocation2 + $0xf8] sm:$0xf] %v460
        %502 = vst [vmem:[#allocation2 + $0x100] sm:$0xf] %v461
        %503 = vst [vmem:[#allocation2 + $0x108] sm:$0xf] %v462
        %504 = vst [vmem:[#allocation2 + $0x110] sm:$0xf] %v463
        %505 = vst [vmem:[#allocation2 + $0x118] sm:$0xf] %v464
        %506 = vst [vmem:[#allocation2 + $0x120] sm:$0xf] %v465
        %507 = vst [vmem:[#allocation2 + $0x128] sm:$0xf] %v466
        %508 = vst [vmem:[#allocation2 + $0x130] sm:$0xf] %v467
        %509 = vst [vmem:[#allocation2 + $0x138] sm:$0xf] %v468
        %510 = vst [vmem:[#allocation2 + $0x140] sm:$0xf] %v469
        %511 = vst.msk [vmem:[#allocation2 + $0x148] sm:$0xf] %vm234, %v448
        %v512 = vld [vmem:[%s148] sm:$0xff]
        %v513 = vld [vmem:[%s148 + $0x8] sm:$0xff]
        %v514 = vld [vmem:[%s148 + $0x10] sm:$0xff]
        %v515 = vld [vmem:[%s148 + $0x18] sm:$0xff]
        %v516 = vld [vmem:[%s148 + $0x20] sm:$0xff]
        %v517 = vld [vmem:[%s148 + $0x28] sm:$0xff]
        %v518 = vld [vmem:[%s148 + $0x30] sm:$0xff]
        %v519 = vld [vmem:[%s148 + $0x38] sm:$0xff]
        %v520 = vld [vmem:[%s148 + $0x40] sm:$0xff]
        %v521 = vld [vmem:[%s148 + $0x48] sm:$0xff]
        %v522 = vld [vmem:[%s148 + $0x50] sm:$0xf]
        %v534 = vcombine.low %v512, %v512
        %v535 = vcombine.low %v513, %v513
        %v536 = vcombine.low %v514, %v514
        %v537 = vcombine.low %v515, %v515
        %v538 = vcombine.low %v516, %v516
        %v539 = vcombine.low %v517, %v517
        %v540 = vcombine.low %v518, %v518
        %v541 = vcombine.low %v519, %v519
        %v542 = vcombine.low %v520, %v520
        %v543 = vcombine.low %v521, %v521
        %v544 = vcombine.low %v522, %v522
        %545 = vrot.lane.b32.xlu0 %v534, 110
        %v546 = vpop.permute.xlu0 %545
        %547 = vrot.lane.b32.xlu0 %v512, 110
        %v548 = vpop.permute.xlu0 %547
        %549 = vrot.lane.b32.xlu0 %v535, 110
        %v550 = vpop.permute.xlu0 %549
        %551 = vrot.lane.b32.xlu0 %v513, 110
        %v552 = vpop.permute.xlu0 %551
        %553 = vrot.lane.b32.xlu0 %v536, 110
        %v554 = vpop.permute.xlu0 %553
        %555 = vrot.lane.b32.xlu0 %v514, 110
        %v556 = vpop.permute.xlu0 %555
        %557 = vrot.lane.b32.xlu0 %v537, 110
        %v558 = vpop.permute.xlu0 %557
        %559 = vrot.lane.b32.xlu0 %v515, 110
        %v560 = vpop.permute.xlu0 %559
        %561 = vrot.lane.b32.xlu0 %v538, 110
        %v562 = vpop.permute.xlu0 %561
        %563 = vrot.lane.b32.xlu0 %v516, 110
        %v564 = vpop.permute.xlu0 %563
        %565 = vrot.lane.b32.xlu0 %v539, 110
        %v566 = vpop.permute.xlu0 %565
        %567 = vrot.lane.b32.xlu0 %v517, 110
        %v568 = vpop.permute.xlu0 %567
        %569 = vrot.lane.b32.xlu0 %v540, 110
        %v570 = vpop.permute.xlu0 %569
        %571 = vrot.lane.b32.xlu0 %v518, 110
        %v572 = vpop.permute.xlu0 %571
        %573 = vrot.lane.b32.xlu0 %v541, 110
        %v574 = vpop.permute.xlu0 %573
        %575 = vrot.lane.b32.xlu0 %v519, 110
        %v576 = vpop.permute.xlu0 %575
        %577 = vrot.lane.b32.xlu0 %v542, 110
        %v578 = vpop.permute.xlu0 %577
        %579 = vrot.lane.b32.xlu0 %v520, 110
        %v580 = vpop.permute.xlu0 %579
        %581 = vrot.lane.b32.xlu0 %v543, 110
        %v582 = vpop.permute.xlu0 %581
        %583 = vrot.lane.b32.xlu0 %v521, 110
        %v584 = vpop.permute.xlu0 %583
        %585 = vrot.lane.b32.xlu0 %v544, 110
        %v586 = vpop.permute.xlu0 %585
        %vm587 = vcmask 900096
        %v588 = vsel %vm587, %v546, %v548
        %v589 = vsel %vm587, %v548, %v550
        %v590 = vsel %vm587, %v550, %v552
        %v591 = vsel %vm587, %v552, %v554
        %v592 = vsel %vm587, %v554, %v556
        %v593 = vsel %vm587, %v556, %v558
        %v594 = vsel %vm587, %v558, %v560
        %v595 = vsel %vm587, %v560, %v562
        %v596 = vsel %vm587, %v562, %v564
        %v597 = vsel %vm587, %v564, %v566
        %v598 = vsel %vm587, %v566, %v568
        %v599 = vsel %vm587, %v568, %v570
        %v600 = vsel %vm587, %v570, %v572
        %v601 = vsel %vm587, %v572, %v574
        %v602 = vsel %vm587, %v574, %v576
        %v603 = vsel %vm587, %v576, %v578
        %v604 = vsel %vm587, %v578, %v580
        %v605 = vsel %vm587, %v580, %v582
        %v606 = vsel %vm587, %v582, %v584
        %v607 = vsel %vm587, %v584, %v586
        %629 = vst [vmem:[#allocation2 + $0xa8] sm:$0xf0] %v588
        %630 = vst [vmem:[#allocation2 + $0xb0] sm:$0xf0] %v589
        %631 = vst [vmem:[#allocation2 + $0xb8] sm:$0xf0] %v590
        %632 = vst [vmem:[#allocation2 + $0xc0] sm:$0xf0] %v591
        %633 = vst [vmem:[#allocation2 + $0xc8] sm:$0xf0] %v592
        %634 = vst [vmem:[#allocation2 + $0xd0] sm:$0xf0] %v593
        %635 = vst [vmem:[#allocation2 + $0xd8] sm:$0xf0] %v594
        %636 = vst [vmem:[#allocation2 + $0xe0] sm:$0xf0] %v595
        %637 = vst [vmem:[#allocation2 + $0xe8] sm:$0xf0] %v596
        %638 = vst [vmem:[#allocation2 + $0xf0] sm:$0xf0] %v597
        %639 = vst [vmem:[#allocation2 + $0xf8] sm:$0xf0] %v598
        %640 = vst [vmem:[#allocation2 + $0x100] sm:$0xf0] %v599
        %641 = vst [vmem:[#allocation2 + $0x108] sm:$0xf0] %v600
        %642 = vst [vmem:[#allocation2 + $0x110] sm:$0xf0] %v601
        %643 = vst [vmem:[#allocation2 + $0x118] sm:$0xf0] %v602
        %644 = vst [vmem:[#allocation2 + $0x120] sm:$0xf0] %v603
        %645 = vst [vmem:[#allocation2 + $0x128] sm:$0xf0] %v604
        %646 = vst [vmem:[#allocation2 + $0x130] sm:$0xf0] %v605
        %647 = vst [vmem:[#allocation2 + $0x138] sm:$0xf0] %v606
        %648 = vst [vmem:[#allocation2 + $0x140] sm:$0xf0] %v607
        %649 = vst.msk [vmem:[#allocation2 + $0x148] sm:$0xf0] %vm373, %v586
        %v650 = vld [vmem:[%s148] sm:$0xff]
        %v651 = vld [vmem:[%s148 + $0x8] sm:$0xff]
        %v652 = vld [vmem:[%s148 + $0x10] sm:$0xff]
        %v653 = vld [vmem:[%s148 + $0x18] sm:$0xff]
        %v654 = vld [vmem:[%s148 + $0x20] sm:$0xff]
        %v655 = vld [vmem:[%s148 + $0x28] sm:$0xff]
        %v656 = vld [vmem:[%s148 + $0x30] sm:$0xff]
        %v657 = vld [vmem:[%s148 + $0x38] sm:$0xff]
        %v658 = vld [vmem:[%s148 + $0x40] sm:$0xff]
        %v659 = vld [vmem:[%s148 + $0x48] sm:$0xff]
        %v660 = vld [vmem:[%s148 + $0x50] sm:$0xf]
        %v672 = vcombine.high %v650, %v650
        %v673 = vcombine.high %v651, %v651
        %v674 = vcombine.high %v652, %v652
        %v675 = vcombine.high %v653, %v653
        %v676 = vcombine.high %v654, %v654
        %v677 = vcombine.high %v655, %v655
        %v678 = vcombine.high %v656, %v656
        %v679 = vcombine.high %v657, %v657
        %v680 = vcombine.high %v658, %v658
        %v681 = vcombine.high %v659, %v659
        %682 = vrot.lane.b32.xlu0 %v650, 109
        %v683 = vpop.permute.xlu0 %682
        %684 = vrot.lane.b32.xlu0 %v672, 109
        %v685 = vpop.permute.xlu0 %684
        %686 = vrot.lane.b32.xlu0 %v651, 109
        %v687 = vpop.permute.xlu0 %686
        %688 = vrot.lane.b32.xlu0 %v673, 109
        %v689 = vpop.permute.xlu0 %688
        %690 = vrot.lane.b32.xlu0 %v652, 109
        %v691 = vpop.permute.xlu0 %690
        %692 = vrot.lane.b32.xlu0 %v674, 109
        %v693 = vpop.permute.xlu0 %692
        %694 = vrot.lane.b32.xlu0 %v653, 109
        %v695 = vpop.permute.xlu0 %694
        %696 = vrot.lane.b32.xlu0 %v675, 109
        %v697 = vpop.permute.xlu0 %696
        %698 = vrot.lane.b32.xlu0 %v654, 109
        %v699 = vpop.permute.xlu0 %698
        %700 = vrot.lane.b32.xlu0 %v676, 109
        %v701 = vpop.permute.xlu0 %700
        %702 = vrot.lane.b32.xlu0 %v655, 109
        %v703 = vpop.permute.xlu0 %702
        %704 = vrot.lane.b32.xlu0 %v677, 109
        %v705 = vpop.permute.xlu0 %704
        %706 = vrot.lane.b32.xlu0 %v656, 109
        %v707 = vpop.permute.xlu0 %706
        %708 = vrot.lane.b32.xlu0 %v678, 109
        %v709 = vpop.permute.xlu0 %708
        %710 = vrot.lane.b32.xlu0 %v657, 109
        %v711 = vpop.permute.xlu0 %710
        %712 = vrot.lane.b32.xlu0 %v679, 109
        %v713 = vpop.permute.xlu0 %712
        %714 = vrot.lane.b32.xlu0 %v658, 109
        %v715 = vpop.permute.xlu0 %714
        %716 = vrot.lane.b32.xlu0 %v680, 109
        %v717 = vpop.permute.xlu0 %716
        %718 = vrot.lane.b32.xlu0 %v659, 109
        %v719 = vpop.permute.xlu0 %718
        %720 = vrot.lane.b32.xlu0 %v681, 109
        %v721 = vpop.permute.xlu0 %720
        %722 = vrot.lane.b32.xlu0 %v660, 109
        %v723 = vpop.permute.xlu0 %722
        %vm724 = vcmask 891904
        %v725 = vsel %vm724, %v683, %v685
        %v726 = vsel %vm724, %v685, %v687
        %v727 = vsel %vm724, %v687, %v689
        %v728 = vsel %vm724, %v689, %v691
        %v729 = vsel %vm724, %v691, %v693
        %v730 = vsel %vm724, %v693, %v695
        %v731 = vsel %vm724, %v695, %v697
        %v732 = vsel %vm724, %v697, %v699
        %v733 = vsel %vm724, %v699, %v701
        %v734 = vsel %vm724, %v701, %v703
        %v735 = vsel %vm724, %v703, %v705
        %v736 = vsel %vm724, %v705, %v707
        %v737 = vsel %vm724, %v707, %v709
        %v738 = vsel %vm724, %v709, %v711
        %v739 = vsel %vm724, %v711, %v713
        %v740 = vsel %vm724, %v713, %v715
        %v741 = vsel %vm724, %v715, %v717
        %v742 = vsel %vm724, %v717, %v719
        %v743 = vsel %vm724, %v719, %v721
        %v744 = vsel %vm724, %v721, %v723
        %766 = vst [vmem:[#allocation2 + $0x150] sm:$0xf] %v725
        %767 = vst [vmem:[#allocation2 + $0x158] sm:$0xf] %v726
        %768 = vst [vmem:[#allocation2 + $0x160] sm:$0xf] %v727
        %769 = vst [vmem:[#allocation2 + $0x168] sm:$0xf] %v728
        %770 = vst [vmem:[#allocation2 + $0x170] sm:$0xf] %v729
        %771 = vst [vmem:[#allocation2 + $0x178] sm:$0xf] %v730
        %772 = vst [vmem:[#allocation2 + $0x180] sm:$0xf] %v731
        %773 = vst [vmem:[#allocation2 + $0x188] sm:$0xf] %v732
        %774 = vst [vmem:[#allocation2 + $0x190] sm:$0xf] %v733
        %775 = vst [vmem:[#allocation2 + $0x198] sm:$0xf] %v734
        %776 = vst [vmem:[#allocation2 + $0x1a0] sm:$0xf] %v735
        %777 = vst [vmem:[#allocation2 + $0x1a8] sm:$0xf] %v736
        %778 = vst [vmem:[#allocation2 + $0x1b0] sm:$0xf] %v737
        %779 = vst [vmem:[#allocation2 + $0x1b8] sm:$0xf] %v738
        %780 = vst [vmem:[#allocation2 + $0x1c0] sm:$0xf] %v739
        %781 = vst [vmem:[#allocation2 + $0x1c8] sm:$0xf] %v740
        %782 = vst [vmem:[#allocation2 + $0x1d0] sm:$0xf] %v741
        %783 = vst [vmem:[#allocation2 + $0x1d8] sm:$0xf] %v742
        %784 = vst [vmem:[#allocation2 + $0x1e0] sm:$0xf] %v743
        %785 = vst [vmem:[#allocation2 + $0x1e8] sm:$0xf] %v744
        %786 = vst.msk [vmem:[#allocation2 + $0x1f0] sm:$0xf] %vm234, %v723
        %v787 = vld [vmem:[%s148] sm:$0xff]
        %v788 = vld [vmem:[%s148 + $0x8] sm:$0xff]
        %v789 = vld [vmem:[%s148 + $0x10] sm:$0xff]
        %v790 = vld [vmem:[%s148 + $0x18] sm:$0xff]
        %v791 = vld [vmem:[%s148 + $0x20] sm:$0xff]
        %v792 = vld [vmem:[%s148 + $0x28] sm:$0xff]
        %v793 = vld [vmem:[%s148 + $0x30] sm:$0xff]
        %v794 = vld [vmem:[%s148 + $0x38] sm:$0xff]
        %v795 = vld [vmem:[%s148 + $0x40] sm:$0xff]
        %v796 = vld [vmem:[%s148 + $0x48] sm:$0xff]
        %v797 = vld [vmem:[%s148 + $0x50] sm:$0xf]
        %v809 = vcombine.low %v787, %v787
        %v810 = vcombine.low %v788, %v788
        %v811 = vcombine.low %v789, %v789
        %v812 = vcombine.low %v790, %v790
        %v813 = vcombine.low %v791, %v791
        %v814 = vcombine.low %v792, %v792
        %v815 = vcombine.low %v793, %v793
        %v816 = vcombine.low %v794, %v794
        %v817 = vcombine.low %v795, %v795
        %v818 = vcombine.low %v796, %v796
        %v819 = vcombine.low %v797, %v797
        %820 = vrot.lane.b32.xlu0 %v809, 108
        %v821 = vpop.permute.xlu0 %820
        %822 = vrot.lane.b32.xlu0 %v787, 108
        %v823 = vpop.permute.xlu0 %822
        %824 = vrot.lane.b32.xlu0 %v810, 108
        %v825 = vpop.permute.xlu0 %824
        %826 = vrot.lane.b32.xlu0 %v788, 108
        %v827 = vpop.permute.xlu0 %826
        %828 = vrot.lane.b32.xlu0 %v811, 108
        %v829 = vpop.permute.xlu0 %828
        %830 = vrot.lane.b32.xlu0 %v789, 108
        %v831 = vpop.permute.xlu0 %830
        %832 = vrot.lane.b32.xlu0 %v812, 108
        %v833 = vpop.permute.xlu0 %832
        %834 = vrot.lane.b32.xlu0 %v790, 108
        %v835 = vpop.permute.xlu0 %834
        %836 = vrot.lane.b32.xlu0 %v813, 108
        %v837 = vpop.permute.xlu0 %836
        %838 = vrot.lane.b32.xlu0 %v791, 108
        %v839 = vpop.permute.xlu0 %838
        %840 = vrot.lane.b32.xlu0 %v814, 108
        %v841 = vpop.permute.xlu0 %840
        %842 = vrot.lane.b32.xlu0 %v792, 108
        %v843 = vpop.permute.xlu0 %842
        %844 = vrot.lane.b32.xlu0 %v815, 108
        %v845 = vpop.permute.xlu0 %844
        %846 = vrot.lane.b32.xlu0 %v793, 108
        %v847 = vpop.permute.xlu0 %846
        %848 = vrot.lane.b32.xlu0 %v816, 108
        %v849 = vpop.permute.xlu0 %848
        %850 = vrot.lane.b32.xlu0 %v794, 108
        %v851 = vpop.permute.xlu0 %850
        %852 = vrot.lane.b32.xlu0 %v817, 108
        %v853 = vpop.permute.xlu0 %852
        %854 = vrot.lane.b32.xlu0 %v795, 108
        %v855 = vpop.permute.xlu0 %854
        %856 = vrot.lane.b32.xlu0 %v818, 108
        %v857 = vpop.permute.xlu0 %856
        %858 = vrot.lane.b32.xlu0 %v796, 108
        %v859 = vpop.permute.xlu0 %858
        %860 = vrot.lane.b32.xlu0 %v819, 108
        %v861 = vpop.permute.xlu0 %860
        %vm862 = vcmask 883712
        %v863 = vsel %vm862, %v821, %v823
        %v864 = vsel %vm862, %v823, %v825
        %v865 = vsel %vm862, %v825, %v827
        %v866 = vsel %vm862, %v827, %v829
        %v867 = vsel %vm862, %v829, %v831
        %v868 = vsel %vm862, %v831, %v833
        %v869 = vsel %vm862, %v833, %v835
        %v870 = vsel %vm862, %v835, %v837
        %v871 = vsel %vm862, %v837, %v839
        %v872 = vsel %vm862, %v839, %v841
        %v873 = vsel %vm862, %v841, %v843
        %v874 = vsel %vm862, %v843, %v845
        %v875 = vsel %vm862, %v845, %v847
        %v876 = vsel %vm862, %v847, %v849
        %v877 = vsel %vm862, %v849, %v851
        %v878 = vsel %vm862, %v851, %v853
        %v879 = vsel %vm862, %v853, %v855
        %v880 = vsel %vm862, %v855, %v857
        %v881 = vsel %vm862, %v857, %v859
        %v882 = vsel %vm862, %v859, %v861
        %904 = vst [vmem:[#allocation2 + $0x150] sm:$0xf0] %v863
        %905 = vst [vmem:[#allocation2 + $0x158] sm:$0xf0] %v864
        %906 = vst [vmem:[#allocation2 + $0x160] sm:$0xf0] %v865
        %907 = vst [vmem:[#allocation2 + $0x168] sm:$0xf0] %v866
        %908 = vst [vmem:[#allocation2 + $0x170] sm:$0xf0] %v867
        %909 = vst [vmem:[#allocation2 + $0x178] sm:$0xf0] %v868
        %910 = vst [vmem:[#allocation2 + $0x180] sm:$0xf0] %v869
        %911 = vst [vmem:[#allocation2 + $0x188] sm:$0xf0] %v870
        %912 = vst [vmem:[#allocation2 + $0x190] sm:$0xf0] %v871
        %913 = vst [vmem:[#allocation2 + $0x198] sm:$0xf0] %v872
        %914 = vst [vmem:[#allocation2 + $0x1a0] sm:$0xf0] %v873
        %915 = vst [vmem:[#allocation2 + $0x1a8] sm:$0xf0] %v874
        %916 = vst [vmem:[#allocation2 + $0x1b0] sm:$0xf0] %v875
        %917 = vst [vmem:[#allocation2 + $0x1b8] sm:$0xf0] %v876
        %918 = vst [vmem:[#allocation2 + $0x1c0] sm:$0xf0] %v877
        %919 = vst [vmem:[#allocation2 + $0x1c8] sm:$0xf0] %v878
        %920 = vst [vmem:[#allocation2 + $0x1d0] sm:$0xf0] %v879
        %921 = vst [vmem:[#allocation2 + $0x1d8] sm:$0xf0] %v880
        %922 = vst [vmem:[#allocation2 + $0x1e0] sm:$0xf0] %v881
        %923 = vst [vmem:[#allocation2 + $0x1e8] sm:$0xf0] %v882
        %924 = vst.msk [vmem:[#allocation2 + $0x1f0] sm:$0xf0] %vm373, %v861
        %v925 = vld [vmem:[%s148] sm:$0xff]
        %v926 = vld [vmem:[%s148 + $0x8] sm:$0xff]
        %v927 = vld [vmem:[%s148 + $0x10] sm:$0xff]
        %v928 = vld [vmem:[%s148 + $0x18] sm:$0xff]
        %v929 = vld [vmem:[%s148 + $0x20] sm:$0xff]
        %v930 = vld [vmem:[%s148 + $0x28] sm:$0xff]
        %v931 = vld [vmem:[%s148 + $0x30] sm:$0xff]
        %v932 = vld [vmem:[%s148 + $0x38] sm:$0xff]
        %v933 = vld [vmem:[%s148 + $0x40] sm:$0xff]
        %v934 = vld [vmem:[%s148 + $0x48] sm:$0xff]
        %v935 = vld [vmem:[%s148 + $0x50] sm:$0xf]
        %v947 = vcombine.high %v925, %v925
        %v948 = vcombine.high %v926, %v926
        %v949 = vcombine.high %v927, %v927
        %v950 = vcombine.high %v928, %v928
        %v951 = vcombine.high %v929, %v929
        %v952 = vcombine.high %v930, %v930
        %v953 = vcombine.high %v931, %v931
        %v954 = vcombine.high %v932, %v932
        %v955 = vcombine.high %v933, %v933
        %v956 = vcombine.high %v934, %v934
        %957 = vrot.lane.b32.xlu0 %v925, 92
        %v958 = vpop.permute.xlu0 %957
        %959 = vrot.lane.b32.xlu0 %v947, 92
        %v960 = vpop.permute.xlu0 %959
        %961 = vrot.lane.b32.xlu0 %v926, 92
        %v962 = vpop.permute.xlu0 %961
        %963 = vrot.lane.b32.xlu0 %v948, 92
        %v964 = vpop.permute.xlu0 %963
        %965 = vrot.lane.b32.xlu0 %v927, 92
        %v966 = vpop.permute.xlu0 %965
        %967 = vrot.lane.b32.xlu0 %v949, 92
        %v968 = vpop.permute.xlu0 %967
        %969 = vrot.lane.b32.xlu0 %v928, 92
        %v970 = vpop.permute.xlu0 %969
        %971 = vrot.lane.b32.xlu0 %v950, 92
        %v972 = vpop.permute.xlu0 %971
        %973 = vrot.lane.b32.xlu0 %v929, 92
        %v974 = vpop.permute.xlu0 %973
        %975 = vrot.lane.b32.xlu0 %v951, 92
        %v976 = vpop.permute.xlu0 %975
        %977 = vrot.lane.b32.xlu0 %v930, 92
        %v978 = vpop.permute.xlu0 %977
        %979 = vrot.lane.b32.xlu0 %v952, 92
        %v980 = vpop.permute.xlu0 %979
        %981 = vrot.lane.b32.xlu0 %v931, 92
        %v982 = vpop.permute.xlu0 %981
        %983 = vrot.lane.b32.xlu0 %v953, 92
        %v984 = vpop.permute.xlu0 %983
        %985 = vrot.lane.b32.xlu0 %v932, 92
        %v986 = vpop.permute.xlu0 %985
        %987 = vrot.lane.b32.xlu0 %v954, 92
        %v988 = vpop.permute.xlu0 %987
        %989 = vrot.lane.b32.xlu0 %v933, 92
        %v990 = vpop.permute.xlu0 %989
        %991 = vrot.lane.b32.xlu0 %v955, 92
        %v992 = vpop.permute.xlu0 %991
        %993 = vrot.lane.b32.xlu0 %v934, 92
        %v994 = vpop.permute.xlu0 %993
        %995 = vrot.lane.b32.xlu0 %v956, 92
        %v996 = vpop.permute.xlu0 %995
        %997 = vrot.lane.b32.xlu0 %v935, 92
        %v998 = vpop.permute.xlu0 %997
        %vm999 = vcmask 752640
        %v1000 = vsel %vm999, %v958, %v960
        %v1001 = vsel %vm999, %v960, %v962
        %v1002 = vsel %vm999, %v962, %v964
        %v1003 = vsel %vm999, %v964, %v966
        %v1004 = vsel %vm999, %v966, %v968
        %v1005 = vsel %vm999, %v968, %v970
        %v1006 = vsel %vm999, %v970, %v972
        %v1007 = vsel %vm999, %v972, %v974
        %v1008 = vsel %vm999, %v974, %v976
        %v1009 = vsel %vm999, %v976, %v978
        %v1010 = vsel %vm999, %v978, %v980
        %v1011 = vsel %vm999, %v980, %v982
        %v1012 = vsel %vm999, %v982, %v984
        %v1013 = vsel %vm999, %v984, %v986
        %v1014 = vsel %vm999, %v986, %v988
        %v1015 = vsel %vm999, %v988, %v990
        %v1016 = vsel %vm999, %v990, %v992
        %v1017 = vsel %vm999, %v992, %v994
        %v1018 = vsel %vm999, %v994, %v996
        %v1019 = vsel %vm999, %v996, %v998
        %1041 = vst [vmem:[#allocation2 + $0x1f8] sm:$0xf] %v1000
        %1042 = vst [vmem:[#allocation2 + $0x200] sm:$0xf] %v1001
        %1043 = vst [vmem:[#allocation2 + $0x208] sm:$0xf] %v1002
        %1044 = vst [vmem:[#allocation2 + $0x210] sm:$0xf] %v1003
        %1045 = vst [vmem:[#allocation2 + $0x218] sm:$0xf] %v1004
        %1046 = vst [vmem:[#allocation2 + $0x220] sm:$0xf] %v1005
        %1047 = vst [vmem:[#allocation2 + $0x228] sm:$0xf] %v1006
        %1048 = vst [vmem:[#allocation2 + $0x230] sm:$0xf] %v1007
        %1049 = vst [vmem:[#allocation2 + $0x238] sm:$0xf] %v1008
        %1050 = vst [vmem:[#allocation2 + $0x240] sm:$0xf] %v1009
        %1051 = vst [vmem:[#allocation2 + $0x248] sm:$0xf] %v1010
        %1052 = vst [vmem:[#allocation2 + $0x250] sm:$0xf] %v1011
        %1053 = vst [vmem:[#allocation2 + $0x258] sm:$0xf] %v1012
        %1054 = vst [vmem:[#allocation2 + $0x260] sm:$0xf] %v1013
        %1055 = vst [vmem:[#allocation2 + $0x268] sm:$0xf] %v1014
        %1056 = vst [vmem:[#allocation2 + $0x270] sm:$0xf] %v1015
        %1057 = vst [vmem:[#allocation2 + $0x278] sm:$0xf] %v1016
        %1058 = vst [vmem:[#allocation2 + $0x280] sm:$0xf] %v1017
        %1059 = vst [vmem:[#allocation2 + $0x288] sm:$0xf] %v1018
        %1060 = vst [vmem:[#allocation2 + $0x290] sm:$0xf] %v1019
        %1061 = vst.msk [vmem:[#allocation2 + $0x298] sm:$0xf] %vm234, %v998
        %v1062 = vld [vmem:[%s148] sm:$0xff]
        %v1063 = vld [vmem:[%s148 + $0x8] sm:$0xff]
        %v1064 = vld [vmem:[%s148 + $0x10] sm:$0xff]
        %v1065 = vld [vmem:[%s148 + $0x18] sm:$0xff]
        %v1066 = vld [vmem:[%s148 + $0x20] sm:$0xff]
        %v1067 = vld [vmem:[%s148 + $0x28] sm:$0xff]
        %v1068 = vld [vmem:[%s148 + $0x30] sm:$0xff]
        %v1069 = vld [vmem:[%s148 + $0x38] sm:$0xff]
        %v1070 = vld [vmem:[%s148 + $0x40] sm:$0xff]
        %v1071 = vld [vmem:[%s148 + $0x48] sm:$0xff]
        %v1072 = vld [vmem:[%s148 + $0x50] sm:$0xf]
        %v1084 = vcombine.low %v1062, %v1062
        %v1085 = vcombine.low %v1063, %v1063
        %v1086 = vcombine.low %v1064, %v1064
        %v1087 = vcombine.low %v1065, %v1065
        %v1088 = vcombine.low %v1066, %v1066
        %v1089 = vcombine.low %v1067, %v1067
        %v1090 = vcombine.low %v1068, %v1068
        %v1091 = vcombine.low %v1069, %v1069
        %v1092 = vcombine.low %v1070, %v1070
        %v1093 = vcombine.low %v1071, %v1071
        %v1094 = vcombine.low %v1072, %v1072
        %1095 = vrot.lane.b32.xlu0 %v1084, 91
        %v1096 = vpop.permute.xlu0 %1095
        %1097 = vrot.lane.b32.xlu0 %v1062, 91
        %v1098 = vpop.permute.xlu0 %1097
        %1099 = vrot.lane.b32.xlu0 %v1085, 91
        %v1100 = vpop.permute.xlu0 %1099
        %1101 = vrot.lane.b32.xlu0 %v1063, 91
        %v1102 = vpop.permute.xlu0 %1101
        %1103 = vrot.lane.b32.xlu0 %v1086, 91
        %v1104 = vpop.permute.xlu0 %1103
        %1105 = vrot.lane.b32.xlu0 %v1064, 91
        %v1106 = vpop.permute.xlu0 %1105
        %1107 = vrot.lane.b32.xlu0 %v1087, 91
        %v1108 = vpop.permute.xlu0 %1107
        %1109 = vrot.lane.b32.xlu0 %v1065, 91
        %v1110 = vpop.permute.xlu0 %1109
        %1111 = vrot.lane.b32.xlu0 %v1088, 91
        %v1112 = vpop.permute.xlu0 %1111
        %1113 = vrot.lane.b32.xlu0 %v1066, 91
        %v1114 = vpop.permute.xlu0 %1113
        %1115 = vrot.lane.b32.xlu0 %v1089, 91
        %v1116 = vpop.permute.xlu0 %1115
        %1117 = vrot.lane.b32.xlu0 %v1067, 91
        %v1118 = vpop.permute.xlu0 %1117
        %1119 = vrot.lane.b32.xlu0 %v1090, 91
        %v1120 = vpop.permute.xlu0 %1119
        %1121 = vrot.lane.b32.xlu0 %v1068, 91
        %v1122 = vpop.permute.xlu0 %1121
        %1123 = vrot.lane.b32.xlu0 %v1091, 91
        %v1124 = vpop.permute.xlu0 %1123
        %1125 = vrot.lane.b32.xlu0 %v1069, 91
        %v1126 = vpop.permute.xlu0 %1125
        %1127 = vrot.lane.b32.xlu0 %v1092, 91
        %v1128 = vpop.permute.xlu0 %1127
        %1129 = vrot.lane.b32.xlu0 %v1070, 91
        %v1130 = vpop.permute.xlu0 %1129
        %1131 = vrot.lane.b32.xlu0 %v1093, 91
        %v1132 = vpop.permute.xlu0 %1131
        %1133 = vrot.lane.b32.xlu0 %v1071, 91
        %v1134 = vpop.permute.xlu0 %1133
        %1135 = vrot.lane.b32.xlu0 %v1094, 91
        %v1136 = vpop.permute.xlu0 %1135
        %vm1137 = vcmask 744448
        %v1138 = vsel %vm1137, %v1096, %v1098
        %v1139 = vsel %vm1137, %v1098, %v1100
        %v1140 = vsel %vm1137, %v1100, %v1102
        %v1141 = vsel %vm1137, %v1102, %v1104
        %v1142 = vsel %vm1137, %v1104, %v1106
        %v1143 = vsel %vm1137, %v1106, %v1108
        %v1144 = vsel %vm1137, %v1108, %v1110
        %v1145 = vsel %vm1137, %v1110, %v1112
        %v1146 = vsel %vm1137, %v1112, %v1114
        %v1147 = vsel %vm1137, %v1114, %v1116
        %v1148 = vsel %vm1137, %v1116, %v1118
        %v1149 = vsel %vm1137, %v1118, %v1120
        %v1150 = vsel %vm1137, %v1120, %v1122
        %v1151 = vsel %vm1137, %v1122, %v1124
        %v1152 = vsel %vm1137, %v1124, %v1126
        %v1153 = vsel %vm1137, %v1126, %v1128
        %v1154 = vsel %vm1137, %v1128, %v1130
        %v1155 = vsel %vm1137, %v1130, %v1132
        %v1156 = vsel %vm1137, %v1132, %v1134
        %v1157 = vsel %vm1137, %v1134, %v1136
        %1179 = vst [vmem:[#allocation2 + $0x1f8] sm:$0xf0] %v1138
        %1180 = vst [vmem:[#allocation2 + $0x200] sm:$0xf0] %v1139
        %1181 = vst [vmem:[#allocation2 + $0x208] sm:$0xf0] %v1140
        %1182 = vst [vmem:[#allocation2 + $0x210] sm:$0xf0] %v1141
        %1183 = vst [vmem:[#allocation2 + $0x218] sm:$0xf0] %v1142
        %1184 = vst [vmem:[#allocation2 + $0x220] sm:$0xf0] %v1143
        %1185 = vst [vmem:[#allocation2 + $0x228] sm:$0xf0] %v1144
        %1186 = vst [vmem:[#allocation2 + $0x230] sm:$0xf0] %v1145
        %1187 = vst [vmem:[#allocation2 + $0x238] sm:$0xf0] %v1146
        %1188 = vst [vmem:[#allocation2 + $0x240] sm:$0xf0] %v1147
        %1189 = vst [vmem:[#allocation2 + $0x248] sm:$0xf0] %v1148
        %1190 = vst [vmem:[#allocation2 + $0x250] sm:$0xf0] %v1149
        %1191 = vst [vmem:[#allocation2 + $0x258] sm:$0xf0] %v1150
        %1192 = vst [vmem:[#allocation2 + $0x260] sm:$0xf0] %v1151
        %1193 = vst [vmem:[#allocation2 + $0x268] sm:$0xf0] %v1152
        %1194 = vst [vmem:[#allocation2 + $0x270] sm:$0xf0] %v1153
        %1195 = vst [vmem:[#allocation2 + $0x278] sm:$0xf0] %v1154
        %1196 = vst [vmem:[#allocation2 + $0x280] sm:$0xf0] %v1155
        %1197 = vst [vmem:[#allocation2 + $0x288] sm:$0xf0] %v1156
        %1198 = vst [vmem:[#allocation2 + $0x290] sm:$0xf0] %v1157
        %1199 = vst.msk [vmem:[#allocation2 + $0x298] sm:$0xf0] %vm373, %v1136
        %v1200 = vld [vmem:[%s148] sm:$0xff]
        %v1201 = vld [vmem:[%s148 + $0x8] sm:$0xff]
        %v1202 = vld [vmem:[%s148 + $0x10] sm:$0xff]
        %v1203 = vld [vmem:[%s148 + $0x18] sm:$0xff]
        %v1204 = vld [vmem:[%s148 + $0x20] sm:$0xff]
        %v1205 = vld [vmem:[%s148 + $0x28] sm:$0xff]
        %v1206 = vld [vmem:[%s148 + $0x30] sm:$0xff]
        %v1207 = vld [vmem:[%s148 + $0x38] sm:$0xff]
        %v1208 = vld [vmem:[%s148 + $0x40] sm:$0xff]
        %v1209 = vld [vmem:[%s148 + $0x48] sm:$0xff]
        %v1210 = vld [vmem:[%s148 + $0x50] sm:$0xf]
        %v1222 = vcombine.high %v1200, %v1200
        %v1223 = vcombine.high %v1201, %v1201
        %v1224 = vcombine.high %v1202, %v1202
        %v1225 = vcombine.high %v1203, %v1203
        %v1226 = vcombine.high %v1204, %v1204
        %v1227 = vcombine.high %v1205, %v1205
        %v1228 = vcombine.high %v1206, %v1206
        %v1229 = vcombine.high %v1207, %v1207
        %v1230 = vcombine.high %v1208, %v1208
        %v1231 = vcombine.high %v1209, %v1209
        %1232 = vrot.lane.b32.xlu0 %v1200, 90
        %v1233 = vpop.permute.xlu0 %1232
        %1234 = vrot.lane.b32.xlu0 %v1222, 90
        %v1235 = vpop.permute.xlu0 %1234
        %1236 = vrot.lane.b32.xlu0 %v1201, 90
        %v1237 = vpop.permute.xlu0 %1236
        %1238 = vrot.lane.b32.xlu0 %v1223, 90
        %v1239 = vpop.permute.xlu0 %1238
        %1240 = vrot.lane.b32.xlu0 %v1202, 90
        %v1241 = vpop.permute.xlu0 %1240
        %1242 = vrot.lane.b32.xlu0 %v1224, 90
        %v1243 = vpop.permute.xlu0 %1242
        %1244 = vrot.lane.b32.xlu0 %v1203, 90
        %v1245 = vpop.permute.xlu0 %1244
        %1246 = vrot.lane.b32.xlu0 %v1225, 90
        %v1247 = vpop.permute.xlu0 %1246
        %1248 = vrot.lane.b32.xlu0 %v1204, 90
        %v1249 = vpop.permute.xlu0 %1248
        %1250 = vrot.lane.b32.xlu0 %v1226, 90
        %v1251 = vpop.permute.xlu0 %1250
        %1252 = vrot.lane.b32.xlu0 %v1205, 90
        %v1253 = vpop.permute.xlu0 %1252
        %1254 = vrot.lane.b32.xlu0 %v1227, 90
        %v1255 = vpop.permute.xlu0 %1254
        %1256 = vrot.lane.b32.xlu0 %v1206, 90
        %v1257 = vpop.permute.xlu0 %1256
        %1258 = vrot.lane.b32.xlu0 %v1228, 90
        %v1259 = vpop.permute.xlu0 %1258
        %1260 = vrot.lane.b32.xlu0 %v1207, 90
        %v1261 = vpop.permute.xlu0 %1260
        %1262 = vrot.lane.b32.xlu0 %v1229, 90
        %v1263 = vpop.permute.xlu0 %1262
        %1264 = vrot.lane.b32.xlu0 %v1208, 90
        %v1265 = vpop.permute.xlu0 %1264
        %1266 = vrot.lane.b32.xlu0 %v1230, 90
        %v1267 = vpop.permute.xlu0 %1266
        %1268 = vrot.lane.b32.xlu0 %v1209, 90
        %v1269 = vpop.permute.xlu0 %1268
        %1270 = vrot.lane.b32.xlu0 %v1231, 90
        %v1271 = vpop.permute.xlu0 %1270
        %1272 = vrot.lane.b32.xlu0 %v1210, 90
        %v1273 = vpop.permute.xlu0 %1272
        %vm1274 = vcmask 736256
        %v1275 = vsel %vm1274, %v1233, %v1235
        %v1276 = vsel %vm1274, %v1235, %v1237
        %v1277 = vsel %vm1274, %v1237, %v1239
        %v1278 = vsel %vm1274, %v1239, %v1241
        %v1279 = vsel %vm1274, %v1241, %v1243
        %v1280 = vsel %vm1274, %v1243, %v1245
        %v1281 = vsel %vm1274, %v1245, %v1247
        %v1282 = vsel %vm1274, %v1247, %v1249
        %v1283 = vsel %vm1274, %v1249, %v1251
        %v1284 = vsel %vm1274, %v1251, %v1253
        %v1285 = vsel %vm1274, %v1253, %v1255
        %v1286 = vsel %vm1274, %v1255, %v1257
        %v1287 = vsel %vm1274, %v1257, %v1259
        %v1288 = vsel %vm1274, %v1259, %v1261
        %v1289 = vsel %vm1274, %v1261, %v1263
        %v1290 = vsel %vm1274, %v1263, %v1265
        %v1291 = vsel %vm1274, %v1265, %v1267
        %v1292 = vsel %vm1274, %v1267, %v1269
        %v1293 = vsel %vm1274, %v1269, %v1271
        %v1294 = vsel %vm1274, %v1271, %v1273
        %1316 = vst [vmem:[#allocation2 + $0x2a0] sm:$0xf] %v1275
        %1317 = vst [vmem:[#allocation2 + $0x2a8] sm:$0xf] %v1276
        %1318 = vst [vmem:[#allocation2 + $0x2b0] sm:$0xf] %v1277
        %1319 = vst [vmem:[#allocation2 + $0x2b8] sm:$0xf] %v1278
        %1320 = vst [vmem:[#allocation2 + $0x2c0] sm:$0xf] %v1279
        %1321 = vst [vmem:[#allocation2 + $0x2c8] sm:$0xf] %v1280
        %1322 = vst [vmem:[#allocation2 + $0x2d0] sm:$0xf] %v1281
        %1323 = vst [vmem:[#allocation2 + $0x2d8] sm:$0xf] %v1282
        %1324 = vst [vmem:[#allocation2 + $0x2e0] sm:$0xf] %v1283
        %1325 = vst [vmem:[#allocation2 + $0x2e8] sm:$0xf] %v1284
        %1326 = vst [vmem:[#allocation2 + $0x2f0] sm:$0xf] %v1285
        %1327 = vst [vmem:[#allocation2 + $0x2f8] sm:$0xf] %v1286
        %1328 = vst [vmem:[#allocation2 + $0x300] sm:$0xf] %v1287
        %1329 = vst [vmem:[#allocation2 + $0x308] sm:$0xf] %v1288
        %1330 = vst [vmem:[#allocation2 + $0x310] sm:$0xf] %v1289
        %1331 = vst [vmem:[#allocation2 + $0x318] sm:$0xf] %v1290
        %1332 = vst [vmem:[#allocation2 + $0x320] sm:$0xf] %v1291
        %1333 = vst [vmem:[#allocation2 + $0x328] sm:$0xf] %v1292
        %1334 = vst [vmem:[#allocation2 + $0x330] sm:$0xf] %v1293
        %1335 = vst [vmem:[#allocation2 + $0x338] sm:$0xf] %v1294
        %1336 = vst.msk [vmem:[#allocation2 + $0x340] sm:$0xf] %vm234, %v1273
        %v1337 = vld [vmem:[%s148 + $0x8] sm:$0xff]
        %v1338 = vld [vmem:[%s148 + $0x10] sm:$0xff]
        %v1339 = vld [vmem:[%s148 + $0x18] sm:$0xff]
        %v1340 = vld [vmem:[%s148 + $0x20] sm:$0xff]
        %v1341 = vld [vmem:[%s148 + $0x28] sm:$0xff]
        %v1342 = vld [vmem:[%s148 + $0x30] sm:$0xff]
        %v1343 = vld [vmem:[%s148 + $0x38] sm:$0xff]
        %v1344 = vld [vmem:[%s148 + $0x40] sm:$0xff]
        %v1345 = vld [vmem:[%s148 + $0x48] sm:$0xff]
        %v1346 = vld [vmem:[%s148 + $0x50] sm:$0xff]
        %v1347 = vld [vmem:[%s148 + $0x58] sm:$0xf]
        %v1359 = vcombine.low %v1337, %v1337
        %v1360 = vcombine.low %v1338, %v1338
        %v1361 = vcombine.low %v1339, %v1339
        %v1362 = vcombine.low %v1340, %v1340
        %v1363 = vcombine.low %v1341, %v1341
        %v1364 = vcombine.low %v1342, %v1342
        %v1365 = vcombine.low %v1343, %v1343
        %v1366 = vcombine.low %v1344, %v1344
        %v1367 = vcombine.low %v1345, %v1345
        %v1368 = vcombine.low %v1346, %v1346
        %v1369 = vcombine.low %v1347, %v1347
        %1370 = vrot.lane.b32.xlu0 %v1359, 60
        %v1371 = vpop.permute.xlu0 %1370
        %1372 = vrot.lane.b32.xlu0 %v1337, 60
        %v1373 = vpop.permute.xlu0 %1372
        %1374 = vrot.lane.b32.xlu0 %v1360, 60
        %v1375 = vpop.permute.xlu0 %1374
        %1376 = vrot.lane.b32.xlu0 %v1338, 60
        %v1377 = vpop.permute.xlu0 %1376
        %1378 = vrot.lane.b32.xlu0 %v1361, 60
        %v1379 = vpop.permute.xlu0 %1378
        %1380 = vrot.lane.b32.xlu0 %v1339, 60
        %v1381 = vpop.permute.xlu0 %1380
        %1382 = vrot.lane.b32.xlu0 %v1362, 60
        %v1383 = vpop.permute.xlu0 %1382
        %1384 = vrot.lane.b32.xlu0 %v1340, 60
        %v1385 = vpop.permute.xlu0 %1384
        %1386 = vrot.lane.b32.xlu0 %v1363, 60
        %v1387 = vpop.permute.xlu0 %1386
        %1388 = vrot.lane.b32.xlu0 %v1341, 60
        %v1389 = vpop.permute.xlu0 %1388
        %1390 = vrot.lane.b32.xlu0 %v1364, 60
        %v1391 = vpop.permute.xlu0 %1390
        %1392 = vrot.lane.b32.xlu0 %v1342, 60
        %v1393 = vpop.permute.xlu0 %1392
        %1394 = vrot.lane.b32.xlu0 %v1365, 60
        %v1395 = vpop.permute.xlu0 %1394
        %1396 = vrot.lane.b32.xlu0 %v1343, 60
        %v1397 = vpop.permute.xlu0 %1396
        %1398 = vrot.lane.b32.xlu0 %v1366, 60
        %v1399 = vpop.permute.xlu0 %1398
        %1400 = vrot.lane.b32.xlu0 %v1344, 60
        %v1401 = vpop.permute.xlu0 %1400
        %1402 = vrot.lane.b32.xlu0 %v1367, 60
        %v1403 = vpop.permute.xlu0 %1402
        %1404 = vrot.lane.b32.xlu0 %v1345, 60
        %v1405 = vpop.permute.xlu0 %1404
        %1406 = vrot.lane.b32.xlu0 %v1368, 60
        %v1407 = vpop.permute.xlu0 %1406
        %1408 = vrot.lane.b32.xlu0 %v1346, 60
        %v1409 = vpop.permute.xlu0 %1408
        %1410 = vrot.lane.b32.xlu0 %v1369, 60
        %v1411 = vpop.permute.xlu0 %1410
        %vm1412 = vcmask 490496
        %v1413 = vsel %vm1412, %v1371, %v1373
        %v1414 = vsel %vm1412, %v1373, %v1375
        %v1415 = vsel %vm1412, %v1375, %v1377
        %v1416 = vsel %vm1412, %v1377, %v1379
        %v1417 = vsel %vm1412, %v1379, %v1381
        %v1418 = vsel %vm1412, %v1381, %v1383
        %v1419 = vsel %vm1412, %v1383, %v1385
        %v1420 = vsel %vm1412, %v1385, %v1387
        %v1421 = vsel %vm1412, %v1387, %v1389
        %v1422 = vsel %vm1412, %v1389, %v1391
        %v1423 = vsel %vm1412, %v1391, %v1393
        %v1424 = vsel %vm1412, %v1393, %v1395
        %v1425 = vsel %vm1412, %v1395, %v1397
        %v1426 = vsel %vm1412, %v1397, %v1399
        %v1427 = vsel %vm1412, %v1399, %v1401
        %v1428 = vsel %vm1412, %v1401, %v1403
        %v1429 = vsel %vm1412, %v1403, %v1405
        %v1430 = vsel %vm1412, %v1405, %v1407
        %v1431 = vsel %vm1412, %v1407, %v1409
        %v1432 = vsel %vm1412, %v1409, %v1411
        %1454 = vst [vmem:[#allocation2 + $0x2a0] sm:$0xf0] %v1413
        %1455 = vst [vmem:[#allocation2 + $0x2a8] sm:$0xf0] %v1414
        %1456 = vst [vmem:[#allocation2 + $0x2b0] sm:$0xf0] %v1415
        %1457 = vst [vmem:[#allocation2 + $0x2b8] sm:$0xf0] %v1416
        %1458 = vst [vmem:[#allocation2 + $0x2c0] sm:$0xf0] %v1417
        %1459 = vst [vmem:[#allocation2 + $0x2c8] sm:$0xf0] %v1418
        %1460 = vst [vmem:[#allocation2 + $0x2d0] sm:$0xf0] %v1419
        %1461 = vst [vmem:[#allocation2 + $0x2d8] sm:$0xf0] %v1420
        %1462 = vst [vmem:[#allocation2 + $0x2e0] sm:$0xf0] %v1421
        %1463 = vst [vmem:[#allocation2 + $0x2e8] sm:$0xf0] %v1422
        %1464 = vst [vmem:[#allocation2 + $0x2f0] sm:$0xf0] %v1423
        %1465 = vst [vmem:[#allocation2 + $0x2f8] sm:$0xf0] %v1424
        %1466 = vst [vmem:[#allocation2 + $0x300] sm:$0xf0] %v1425
        %1467 = vst [vmem:[#allocation2 + $0x308] sm:$0xf0] %v1426
        %1468 = vst [vmem:[#allocation2 + $0x310] sm:$0xf0] %v1427
        %1469 = vst [vmem:[#allocation2 + $0x318] sm:$0xf0] %v1428
        %1470 = vst [vmem:[#allocation2 + $0x320] sm:$0xf0] %v1429
        %1471 = vst [vmem:[#allocation2 + $0x328] sm:$0xf0] %v1430
        %1472 = vst [vmem:[#allocation2 + $0x330] sm:$0xf0] %v1431
        %1473 = vst [vmem:[#allocation2 + $0x338] sm:$0xf0] %v1432
        %1474 = vst.msk [vmem:[#allocation2 + $0x340] sm:$0xf0] %vm373, %v1411
        %v1475 = vld [vmem:[%s148 + $0x8] sm:$0xff]
        %v1476 = vld [vmem:[%s148 + $0x10] sm:$0xff]
        %v1477 = vld [vmem:[%s148 + $0x18] sm:$0xff]
        %v1478 = vld [vmem:[%s148 + $0x20] sm:$0xff]
        %v1479 = vld [vmem:[%s148 + $0x28] sm:$0xff]
        %v1480 = vld [vmem:[%s148 + $0x30] sm:$0xff]
        %v1481 = vld [vmem:[%s148 + $0x38] sm:$0xff]
        %v1482 = vld [vmem:[%s148 + $0x40] sm:$0xff]
        %v1483 = vld [vmem:[%s148 + $0x48] sm:$0xff]
        %v1484 = vld [vmem:[%s148 + $0x50] sm:$0xff]
        %v1485 = vld [vmem:[%s148 + $0x58] sm:$0xf]
        %v1497 = vcombine.high %v1475, %v1475
        %v1498 = vcombine.high %v1476, %v1476
        %v1499 = vcombine.high %v1477, %v1477
        %v1500 = vcombine.high %v1478, %v1478
        %v1501 = vcombine.high %v1479, %v1479
        %v1502 = vcombine.high %v1480, %v1480
        %v1503 = vcombine.high %v1481, %v1481
        %v1504 = vcombine.high %v1482, %v1482
        %v1505 = vcombine.high %v1483, %v1483
        %v1506 = vcombine.high %v1484, %v1484
        %1507 = vrot.lane.b32.xlu0 %v1475, 59
        %v1508 = vpop.permute.xlu0 %1507
        %1509 = vrot.lane.b32.xlu0 %v1497, 59
        %v1510 = vpop.permute.xlu0 %1509
        %1511 = vrot.lane.b32.xlu0 %v1476, 59
        %v1512 = vpop.permute.xlu0 %1511
        %1513 = vrot.lane.b32.xlu0 %v1498, 59
        %v1514 = vpop.permute.xlu0 %1513
        %1515 = vrot.lane.b32.xlu0 %v1477, 59
        %v1516 = vpop.permute.xlu0 %1515
        %1517 = vrot.lane.b32.xlu0 %v1499, 59
        %v1518 = vpop.permute.xlu0 %1517
        %1519 = vrot.lane.b32.xlu0 %v1478, 59
        %v1520 = vpop.permute.xlu0 %1519
        %1521 = vrot.lane.b32.xlu0 %v1500, 59
        %v1522 = vpop.permute.xlu0 %1521
        %1523 = vrot.lane.b32.xlu0 %v1479, 59
        %v1524 = vpop.permute.xlu0 %1523
        %1525 = vrot.lane.b32.xlu0 %v1501, 59
        %v1526 = vpop.permute.xlu0 %1525
        %1527 = vrot.lane.b32.xlu0 %v1480, 59
        %v1528 = vpop.permute.xlu0 %1527
        %1529 = vrot.lane.b32.xlu0 %v1502, 59
        %v1530 = vpop.permute.xlu0 %1529
        %1531 = vrot.lane.b32.xlu0 %v1481, 59
        %v1532 = vpop.permute.xlu0 %1531
        %1533 = vrot.lane.b32.xlu0 %v1503, 59
        %v1534 = vpop.permute.xlu0 %1533
        %1535 = vrot.lane.b32.xlu0 %v1482, 59
        %v1536 = vpop.permute.xlu0 %1535
        %1537 = vrot.lane.b32.xlu0 %v1504, 59
        %v1538 = vpop.permute.xlu0 %1537
        %1539 = vrot.lane.b32.xlu0 %v1483, 59
        %v1540 = vpop.permute.xlu0 %1539
        %1541 = vrot.lane.b32.xlu0 %v1505, 59
        %v1542 = vpop.permute.xlu0 %1541
        %1543 = vrot.lane.b32.xlu0 %v1484, 59
        %v1544 = vpop.permute.xlu0 %1543
        %1545 = vrot.lane.b32.xlu0 %v1506, 59
        %v1546 = vpop.permute.xlu0 %1545
        %1547 = vrot.lane.b32.xlu0 %v1485, 59
        %v1548 = vpop.permute.xlu0 %1547
        %vm1549 = vcmask 482304
        %v1550 = vsel %vm1549, %v1508, %v1510
        %v1551 = vsel %vm1549, %v1510, %v1512
        %v1552 = vsel %vm1549, %v1512, %v1514
        %v1553 = vsel %vm1549, %v1514, %v1516
        %v1554 = vsel %vm1549, %v1516, %v1518
        %v1555 = vsel %vm1549, %v1518, %v1520
        %v1556 = vsel %vm1549, %v1520, %v1522
        %v1557 = vsel %vm1549, %v1522, %v1524
        %v1558 = vsel %vm1549, %v1524, %v1526
        %v1559 = vsel %vm1549, %v1526, %v1528
        %v1560 = vsel %vm1549, %v1528, %v1530
        %v1561 = vsel %vm1549, %v1530, %v1532
        %v1562 = vsel %vm1549, %v1532, %v1534
        %v1563 = vsel %vm1549, %v1534, %v1536
        %v1564 = vsel %vm1549, %v1536, %v1538
        %v1565 = vsel %vm1549, %v1538, %v1540
        %v1566 = vsel %vm1549, %v1540, %v1542
        %v1567 = vsel %vm1549, %v1542, %v1544
        %v1568 = vsel %vm1549, %v1544, %v1546
        %v1569 = vsel %vm1549, %v1546, %v1548
        %1591 = vst [vmem:[#allocation2 + $0x348] sm:$0xf] %v1550
        %1592 = vst [vmem:[#allocation2 + $0x350] sm:$0xf] %v1551
        %1593 = vst [vmem:[#allocation2 + $0x358] sm:$0xf] %v1552
        %1594 = vst [vmem:[#allocation2 + $0x360] sm:$0xf] %v1553
        %1595 = vst [vmem:[#allocation2 + $0x368] sm:$0xf] %v1554
        %1596 = vst [vmem:[#allocation2 + $0x370] sm:$0xf] %v1555
        %1597 = vst [vmem:[#allocation2 + $0x378] sm:$0xf] %v1556
        %1598 = vst [vmem:[#allocation2 + $0x380] sm:$0xf] %v1557
        %1599 = vst [vmem:[#allocation2 + $0x388] sm:$0xf] %v1558
        %1600 = vst [vmem:[#allocation2 + $0x390] sm:$0xf] %v1559
        %1601 = vst [vmem:[#allocation2 + $0x398] sm:$0xf] %v1560
        %1602 = vst [vmem:[#allocation2 + $0x3a0] sm:$0xf] %v1561
        %1603 = vst [vmem:[#allocation2 + $0x3a8] sm:$0xf] %v1562
        %1604 = vst [vmem:[#allocation2 + $0x3b0] sm:$0xf] %v1563
        %1605 = vst [vmem:[#allocation2 + $0x3b8] sm:$0xf] %v1564
        %1606 = vst [vmem:[#allocation2 + $0x3c0] sm:$0xf] %v1565
        %1607 = vst [vmem:[#allocation2 + $0x3c8] sm:$0xf] %v1566
        %1608 = vst [vmem:[#allocation2 + $0x3d0] sm:$0xf] %v1567
        %1609 = vst [vmem:[#allocation2 + $0x3d8] sm:$0xf] %v1568
        %1610 = vst [vmem:[#allocation2 + $0x3e0] sm:$0xf] %v1569
        %1611 = vst.msk [vmem:[#allocation2 + $0x3e8] sm:$0xf] %vm234, %v1548
        %v1612 = vld [vmem:[%s148 + $0x8] sm:$0xff]
        %v1613 = vld [vmem:[%s148 + $0x10] sm:$0xff]
        %v1614 = vld [vmem:[%s148 + $0x18] sm:$0xff]
        %v1615 = vld [vmem:[%s148 + $0x20] sm:$0xff]
        %v1616 = vld [vmem:[%s148 + $0x28] sm:$0xff]
        %v1617 = vld [vmem:[%s148 + $0x30] sm:$0xff]
        %v1618 = vld [vmem:[%s148 + $0x38] sm:$0xff]
        %v1619 = vld [vmem:[%s148 + $0x40] sm:$0xff]
        %v1620 = vld [vmem:[%s148 + $0x48] sm:$0xff]
        %v1621 = vld [vmem:[%s148 + $0x50] sm:$0xff]
        %v1622 = vld [vmem:[%s148 + $0x58] sm:$0xf]
        %v1634 = vcombine.low %v1612, %v1612
        %v1635 = vcombine.low %v1613, %v1613
        %v1636 = vcombine.low %v1614, %v1614
        %v1637 = vcombine.low %v1615, %v1615
        %v1638 = vcombine.low %v1616, %v1616
        %v1639 = vcombine.low %v1617, %v1617
        %v1640 = vcombine.low %v1618, %v1618
        %v1641 = vcombine.low %v1619, %v1619
        %v1642 = vcombine.low %v1620, %v1620
        %v1643 = vcombine.low %v1621, %v1621
        %v1644 = vcombine.low %v1622, %v1622
        %1645 = vrot.lane.b32.xlu0 %v1634, 58
        %v1646 = vpop.permute.xlu0 %1645
        %1647 = vrot.lane.b32.xlu0 %v1612, 58
        %v1648 = vpop.permute.xlu0 %1647
        %1649 = vrot.lane.b32.xlu0 %v1635, 58
        %v1650 = vpop.permute.xlu0 %1649
        %1651 = vrot.lane.b32.xlu0 %v1613, 58
        %v1652 = vpop.permute.xlu0 %1651
        %1653 = vrot.lane.b32.xlu0 %v1636, 58
        %v1654 = vpop.permute.xlu0 %1653
        %1655 = vrot.lane.b32.xlu0 %v1614, 58
        %v1656 = vpop.permute.xlu0 %1655
        %1657 = vrot.lane.b32.xlu0 %v1637, 58
        %v1658 = vpop.permute.xlu0 %1657
        %1659 = vrot.lane.b32.xlu0 %v1615, 58
        %v1660 = vpop.permute.xlu0 %1659
        %1661 = vrot.lane.b32.xlu0 %v1638, 58
        %v1662 = vpop.permute.xlu0 %1661
        %1663 = vrot.lane.b32.xlu0 %v1616, 58
        %v1664 = vpop.permute.xlu0 %1663
        %1665 = vrot.lane.b32.xlu0 %v1639, 58
        %v1666 = vpop.permute.xlu0 %1665
        %1667 = vrot.lane.b32.xlu0 %v1617, 58
        %v1668 = vpop.permute.xlu0 %1667
        %1669 = vrot.lane.b32.xlu0 %v1640, 58
        %v1670 = vpop.permute.xlu0 %1669
        %1671 = vrot.lane.b32.xlu0 %v1618, 58
        %v1672 = vpop.permute.xlu0 %1671
        %1673 = vrot.lane.b32.xlu0 %v1641, 58
        %v1674 = vpop.permute.xlu0 %1673
        %1675 = vrot.lane.b32.xlu0 %v1619, 58
        %v1676 = vpop.permute.xlu0 %1675
        %1677 = vrot.lane.b32.xlu0 %v1642, 58
        %v1678 = vpop.permute.xlu0 %1677
        %1679 = vrot.lane.b32.xlu0 %v1620, 58
        %v1680 = vpop.permute.xlu0 %1679
        %1681 = vrot.lane.b32.xlu0 %v1643, 58
        %v1682 = vpop.permute.xlu0 %1681
        %1683 = vrot.lane.b32.xlu0 %v1621, 58
        %v1684 = vpop.permute.xlu0 %1683
        %1685 = vrot.lane.b32.xlu0 %v1644, 58
        %v1686 = vpop.permute.xlu0 %1685
        %vm1687 = vcmask 474112
        %v1688 = vsel %vm1687, %v1646, %v1648
        %v1689 = vsel %vm1687, %v1648, %v1650
        %v1690 = vsel %vm1687, %v1650, %v1652
        %v1691 = vsel %vm1687, %v1652, %v1654
        %v1692 = vsel %vm1687, %v1654, %v1656
        %v1693 = vsel %vm1687, %v1656, %v1658
        %v1694 = vsel %vm1687, %v1658, %v1660
        %v1695 = vsel %vm1687, %v1660, %v1662
        %v1696 = vsel %vm1687, %v1662, %v1664
        %v1697 = vsel %vm1687, %v1664, %v1666
        %v1698 = vsel %vm1687, %v1666, %v1668
        %v1699 = vsel %vm1687, %v1668, %v1670
        %v1700 = vsel %vm1687, %v1670, %v1672
        %v1701 = vsel %vm1687, %v1672, %v1674
        %v1702 = vsel %vm1687, %v1674, %v1676
        %v1703 = vsel %vm1687, %v1676, %v1678
        %v1704 = vsel %vm1687, %v1678, %v1680
        %v1705 = vsel %vm1687, %v1680, %v1682
        %v1706 = vsel %vm1687, %v1682, %v1684
        %v1707 = vsel %vm1687, %v1684, %v1686
        %1729 = vst [vmem:[#allocation2 + $0x348] sm:$0xf0] %v1688
        %1730 = vst [vmem:[#allocation2 + $0x350] sm:$0xf0] %v1689
        %1731 = vst [vmem:[#allocation2 + $0x358] sm:$0xf0] %v1690
        %1732 = vst [vmem:[#allocation2 + $0x360] sm:$0xf0] %v1691
        %1733 = vst [vmem:[#allocation2 + $0x368] sm:$0xf0] %v1692
        %1734 = vst [vmem:[#allocation2 + $0x370] sm:$0xf0] %v1693
        %1735 = vst [vmem:[#allocation2 + $0x378] sm:$0xf0] %v1694
        %1736 = vst [vmem:[#allocation2 + $0x380] sm:$0xf0] %v1695
        %1737 = vst [vmem:[#allocation2 + $0x388] sm:$0xf0] %v1696
        %1738 = vst [vmem:[#allocation2 + $0x390] sm:$0xf0] %v1697
        %1739 = vst [vmem:[#allocation2 + $0x398] sm:$0xf0] %v1698
        %1740 = vst [vmem:[#allocation2 + $0x3a0] sm:$0xf0] %v1699
        %1741 = vst [vmem:[#allocation2 + $0x3a8] sm:$0xf0] %v1700
        %1742 = vst [vmem:[#allocation2 + $0x3b0] sm:$0xf0] %v1701
        %1743 = vst [vmem:[#allocation2 + $0x3b8] sm:$0xf0] %v1702
        %1744 = vst [vmem:[#allocation2 + $0x3c0] sm:$0xf0] %v1703
        %1745 = vst [vmem:[#allocation2 + $0x3c8] sm:$0xf0] %v1704
        %1746 = vst [vmem:[#allocation2 + $0x3d0] sm:$0xf0] %v1705
        %1747 = vst [vmem:[#allocation2 + $0x3d8] sm:$0xf0] %v1706
        %1748 = vst [vmem:[#allocation2 + $0x3e0] sm:$0xf0] %v1707
        %1749 = vst.msk [vmem:[#allocation2 + $0x3e8] sm:$0xf0] %vm373, %v1686
        %v1750 = vld [vmem:[%s148 + $0x8] sm:$0xff]
        %v1751 = vld [vmem:[%s148 + $0x10] sm:$0xff]
        %v1752 = vld [vmem:[%s148 + $0x18] sm:$0xff]
        %v1753 = vld [vmem:[%s148 + $0x20] sm:$0xff]
        %v1754 = vld [vmem:[%s148 + $0x28] sm:$0xff]
        %v1755 = vld [vmem:[%s148 + $0x30] sm:$0xff]
        %v1756 = vld [vmem:[%s148 + $0x38] sm:$0xff]
        %v1757 = vld [vmem:[%s148 + $0x40] sm:$0xff]
        %v1758 = vld [vmem:[%s148 + $0x48] sm:$0xff]
        %v1759 = vld [vmem:[%s148 + $0x50] sm:$0xff]
        %v1760 = vld [vmem:[%s148 + $0x58] sm:$0xf]
        %v1772 = vcombine.high %v1750, %v1750
        %v1773 = vcombine.high %v1751, %v1751
        %v1774 = vcombine.high %v1752, %v1752
        %v1775 = vcombine.high %v1753, %v1753
        %v1776 = vcombine.high %v1754, %v1754
        %v1777 = vcombine.high %v1755, %v1755
        %v1778 = vcombine.high %v1756, %v1756
        %v1779 = vcombine.high %v1757, %v1757
        %v1780 = vcombine.high %v1758, %v1758
        %v1781 = vcombine.high %v1759, %v1759
        %1782 = vrot.lane.b32.xlu0 %v1750, 42
        %v1783 = vpop.permute.xlu0 %1782
        %1784 = vrot.lane.b32.xlu0 %v1772, 42
        %v1785 = vpop.permute.xlu0 %1784
        %1786 = vrot.lane.b32.xlu0 %v1751, 42
        %v1787 = vpop.permute.xlu0 %1786
        %1788 = vrot.lane.b32.xlu0 %v1773, 42
        %v1789 = vpop.permute.xlu0 %1788
        %1790 = vrot.lane.b32.xlu0 %v1752, 42
        %v1791 = vpop.permute.xlu0 %1790
        %1792 = vrot.lane.b32.xlu0 %v1774, 42
        %v1793 = vpop.permute.xlu0 %1792
        %1794 = vrot.lane.b32.xlu0 %v1753, 42
        %v1795 = vpop.permute.xlu0 %1794
        %1796 = vrot.lane.b32.xlu0 %v1775, 42
        %v1797 = vpop.permute.xlu0 %1796
        %1798 = vrot.lane.b32.xlu0 %v1754, 42
        %v1799 = vpop.permute.xlu0 %1798
        %1800 = vrot.lane.b32.xlu0 %v1776, 42
        %v1801 = vpop.permute.xlu0 %1800
        %1802 = vrot.lane.b32.xlu0 %v1755, 42
        %v1803 = vpop.permute.xlu0 %1802
        %1804 = vrot.lane.b32.xlu0 %v1777, 42
        %v1805 = vpop.permute.xlu0 %1804
        %1806 = vrot.lane.b32.xlu0 %v1756, 42
        %v1807 = vpop.permute.xlu0 %1806
        %1808 = vrot.lane.b32.xlu0 %v1778, 42
        %v1809 = vpop.permute.xlu0 %1808
        %1810 = vrot.lane.b32.xlu0 %v1757, 42
        %v1811 = vpop.permute.xlu0 %1810
        %1812 = vrot.lane.b32.xlu0 %v1779, 42
        %v1813 = vpop.permute.xlu0 %1812
        %1814 = vrot.lane.b32.xlu0 %v1758, 42
        %v1815 = vpop.permute.xlu0 %1814
        %1816 = vrot.lane.b32.xlu0 %v1780, 42
        %v1817 = vpop.permute.xlu0 %1816
        %1818 = vrot.lane.b32.xlu0 %v1759, 42
        %v1819 = vpop.permute.xlu0 %1818
        %1820 = vrot.lane.b32.xlu0 %v1781, 42
        %v1821 = vpop.permute.xlu0 %1820
        %1822 = vrot.lane.b32.xlu0 %v1760, 42
        %v1823 = vpop.permute.xlu0 %1822
        %vm1824 = vcmask 343040
        %v1825 = vsel %vm1824, %v1783, %v1785
        %v1826 = vsel %vm1824, %v1785, %v1787
        %v1827 = vsel %vm1824, %v1787, %v1789
        %v1828 = vsel %vm1824, %v1789, %v1791
        %v1829 = vsel %vm1824, %v1791, %v1793
        %v1830 = vsel %vm1824, %v1793, %v1795
        %v1831 = vsel %vm1824, %v1795, %v1797
        %v1832 = vsel %vm1824, %v1797, %v1799
        %v1833 = vsel %vm1824, %v1799, %v1801
        %v1834 = vsel %vm1824, %v1801, %v1803
        %v1835 = vsel %vm1824, %v1803, %v1805
        %v1836 = vsel %vm1824, %v1805, %v1807
        %v1837 = vsel %vm1824, %v1807, %v1809
        %v1838 = vsel %vm1824, %v1809, %v1811
        %v1839 = vsel %vm1824, %v1811, %v1813
        %v1840 = vsel %vm1824, %v1813, %v1815
        %v1841 = vsel %vm1824, %v1815, %v1817
        %v1842 = vsel %vm1824, %v1817, %v1819
        %v1843 = vsel %vm1824, %v1819, %v1821
        %v1844 = vsel %vm1824, %v1821, %v1823
        %1866 = vst [vmem:[#allocation2 + $0x3f0] sm:$0xf] %v1825
        %1867 = vst [vmem:[#allocation2 + $0x3f8] sm:$0xf] %v1826
        %1868 = vst [vmem:[#allocation2 + $0x400] sm:$0xf] %v1827
        %1869 = vst [vmem:[#allocation2 + $0x408] sm:$0xf] %v1828
        %1870 = vst [vmem:[#allocation2 + $0x410] sm:$0xf] %v1829
        %1871 = vst [vmem:[#allocation2 + $0x418] sm:$0xf] %v1830
        %1872 = vst [vmem:[#allocation2 + $0x420] sm:$0xf] %v1831
        %1873 = vst [vmem:[#allocation2 + $0x428] sm:$0xf] %v1832
        %1874 = vst [vmem:[#allocation2 + $0x430] sm:$0xf] %v1833
        %1875 = vst [vmem:[#allocation2 + $0x438] sm:$0xf] %v1834
        %1876 = vst [vmem:[#allocation2 + $0x440] sm:$0xf] %v1835
        %1877 = vst [vmem:[#allocation2 + $0x448] sm:$0xf] %v1836
        %1878 = vst [vmem:[#allocation2 + $0x450] sm:$0xf] %v1837
        %1879 = vst [vmem:[#allocation2 + $0x458] sm:$0xf] %v1838
        %1880 = vst [vmem:[#allocation2 + $0x460] sm:$0xf] %v1839
        %1881 = vst [vmem:[#allocation2 + $0x468] sm:$0xf] %v1840
        %1882 = vst [vmem:[#allocation2 + $0x470] sm:$0xf] %v1841
        %1883 = vst [vmem:[#allocation2 + $0x478] sm:$0xf] %v1842
        %1884 = vst [vmem:[#allocation2 + $0x480] sm:$0xf] %v1843
        %1885 = vst [vmem:[#allocation2 + $0x488] sm:$0xf] %v1844
        %1886 = vst.msk [vmem:[#allocation2 + $0x490] sm:$0xf] %vm234, %v1823
        %v1887 = vld [vmem:[%s148 + $0x8] sm:$0xff]
        %v1888 = vld [vmem:[%s148 + $0x10] sm:$0xff]
        %v1889 = vld [vmem:[%s148 + $0x18] sm:$0xff]
        %v1890 = vld [vmem:[%s148 + $0x20] sm:$0xff]
        %v1891 = vld [vmem:[%s148 + $0x28] sm:$0xff]
        %v1892 = vld [vmem:[%s148 + $0x30] sm:$0xff]
        %v1893 = vld [vmem:[%s148 + $0x38] sm:$0xff]
        %v1894 = vld [vmem:[%s148 + $0x40] sm:$0xff]
        %v1895 = vld [vmem:[%s148 + $0x48] sm:$0xff]
        %v1896 = vld [vmem:[%s148 + $0x50] sm:$0xff]
        %v1897 = vld [vmem:[%s148 + $0x58] sm:$0xf]
        %v1909 = vcombine.low %v1887, %v1887
        %v1910 = vcombine.low %v1888, %v1888
        %v1911 = vcombine.low %v1889, %v1889
        %v1912 = vcombine.low %v1890, %v1890
        %v1913 = vcombine.low %v1891, %v1891
        %v1914 = vcombine.low %v1892, %v1892
        %v1915 = vcombine.low %v1893, %v1893
        %v1916 = vcombine.low %v1894, %v1894
        %v1917 = vcombine.low %v1895, %v1895
        %v1918 = vcombine.low %v1896, %v1896
        %v1919 = vcombine.low %v1897, %v1897
        %1920 = vrot.lane.b32.xlu0 %v1909, 41
        %v1921 = vpop.permute.xlu0 %1920
        %1922 = vrot.lane.b32.xlu0 %v1887, 41
        %v1923 = vpop.permute.xlu0 %1922
        %1924 = vrot.lane.b32.xlu0 %v1910, 41
        %v1925 = vpop.permute.xlu0 %1924
        %1926 = vrot.lane.b32.xlu0 %v1888, 41
        %v1927 = vpop.permute.xlu0 %1926
        %1928 = vrot.lane.b32.xlu0 %v1911, 41
        %v1929 = vpop.permute.xlu0 %1928
        %1930 = vrot.lane.b32.xlu0 %v1889, 41
        %v1931 = vpop.permute.xlu0 %1930
        %1932 = vrot.lane.b32.xlu0 %v1912, 41
        %v1933 = vpop.permute.xlu0 %1932
        %1934 = vrot.lane.b32.xlu0 %v1890, 41
        %v1935 = vpop.permute.xlu0 %1934
        %1936 = vrot.lane.b32.xlu0 %v1913, 41
        %v1937 = vpop.permute.xlu0 %1936
        %1938 = vrot.lane.b32.xlu0 %v1891, 41
        %v1939 = vpop.permute.xlu0 %1938
        %1940 = vrot.lane.b32.xlu0 %v1914, 41
        %v1941 = vpop.permute.xlu0 %1940
        %1942 = vrot.lane.b32.xlu0 %v1892, 41
        %v1943 = vpop.permute.xlu0 %1942
        %1944 = vrot.lane.b32.xlu0 %v1915, 41
        %v1945 = vpop.permute.xlu0 %1944
        %1946 = vrot.lane.b32.xlu0 %v1893, 41
        %v1947 = vpop.permute.xlu0 %1946
        %1948 = vrot.lane.b32.xlu0 %v1916, 41
        %v1949 = vpop.permute.xlu0 %1948
        %1950 = vrot.lane.b32.xlu0 %v1894, 41
        %v1951 = vpop.permute.xlu0 %1950
        %1952 = vrot.lane.b32.xlu0 %v1917, 41
        %v1953 = vpop.permute.xlu0 %1952
        %1954 = vrot.lane.b32.xlu0 %v1895, 41
        %v1955 = vpop.permute.xlu0 %1954
        %1956 = vrot.lane.b32.xlu0 %v1918, 41
        %v1957 = vpop.permute.xlu0 %1956
        %1958 = vrot.lane.b32.xlu0 %v1896, 41
        %v1959 = vpop.permute.xlu0 %1958
        %1960 = vrot.lane.b32.xlu0 %v1919, 41
        %v1961 = vpop.permute.xlu0 %1960
        %vm1962 = vcmask 334848
        %v1963 = vsel %vm1962, %v1921, %v1923
        %v1964 = vsel %vm1962, %v1923, %v1925
        %v1965 = vsel %vm1962, %v1925, %v1927
        %v1966 = vsel %vm1962, %v1927, %v1929
        %v1967 = vsel %vm1962, %v1929, %v1931
        %v1968 = vsel %vm1962, %v1931, %v1933
        %v1969 = vsel %vm1962, %v1933, %v1935
        %v1970 = vsel %vm1962, %v1935, %v1937
        %v1971 = vsel %vm1962, %v1937, %v1939
        %v1972 = vsel %vm1962, %v1939, %v1941
        %v1973 = vsel %vm1962, %v1941, %v1943
        %v1974 = vsel %vm1962, %v1943, %v1945
        %v1975 = vsel %vm1962, %v1945, %v1947
        %v1976 = vsel %vm1962, %v1947, %v1949
        %v1977 = vsel %vm1962, %v1949, %v1951
        %v1978 = vsel %vm1962, %v1951, %v1953
        %v1979 = vsel %vm1962, %v1953, %v1955
        %v1980 = vsel %vm1962, %v1955, %v1957
        %v1981 = vsel %vm1962, %v1957, %v1959
        %v1982 = vsel %vm1962, %v1959, %v1961
        %2004 = vst [vmem:[#allocation2 + $0x3f0] sm:$0xf0] %v1963
        %2005 = vst [vmem:[#allocation2 + $0x3f8] sm:$0xf0] %v1964
        %2006 = vst [vmem:[#allocation2 + $0x400] sm:$0xf0] %v1965
        %2007 = vst [vmem:[#allocation2 + $0x408] sm:$0xf0] %v1966
        %2008 = vst [vmem:[#allocation2 + $0x410] sm:$0xf0] %v1967
        %2009 = vst [vmem:[#allocation2 + $0x418] sm:$0xf0] %v1968
        %2010 = vst [vmem:[#allocation2 + $0x420] sm:$0xf0] %v1969
        %2011 = vst [vmem:[#allocation2 + $0x428] sm:$0xf0] %v1970
        %2012 = vst [vmem:[#allocation2 + $0x430] sm:$0xf0] %v1971
        %2013 = vst [vmem:[#allocation2 + $0x438] sm:$0xf0] %v1972
        %2014 = vst [vmem:[#allocation2 + $0x440] sm:$0xf0] %v1973
        %2015 = vst [vmem:[#allocation2 + $0x448] sm:$0xf0] %v1974
        %2016 = vst [vmem:[#allocation2 + $0x450] sm:$0xf0] %v1975
        %2017 = vst [vmem:[#allocation2 + $0x458] sm:$0xf0] %v1976
        %2018 = vst [vmem:[#allocation2 + $0x460] sm:$0xf0] %v1977
        %2019 = vst [vmem:[#allocation2 + $0x468] sm:$0xf0] %v1978
        %2020 = vst [vmem:[#allocation2 + $0x470] sm:$0xf0] %v1979
        %2021 = vst [vmem:[#allocation2 + $0x478] sm:$0xf0] %v1980
        %2022 = vst [vmem:[#allocation2 + $0x480] sm:$0xf0] %v1981
        %2023 = vst [vmem:[#allocation2 + $0x488] sm:$0xf0] %v1982
        %2024 = vst.msk [vmem:[#allocation2 + $0x490] sm:$0xf0] %vm373, %v1961
        %v2025 = vld [vmem:[%s148 + $0x8] sm:$0xff]
        %v2026 = vld [vmem:[%s148 + $0x10] sm:$0xff]
        %v2027 = vld [vmem:[%s148 + $0x18] sm:$0xff]
        %v2028 = vld [vmem:[%s148 + $0x20] sm:$0xff]
        %v2029 = vld [vmem:[%s148 + $0x28] sm:$0xff]
        %v2030 = vld [vmem:[%s148 + $0x30] sm:$0xff]
        %v2031 = vld [vmem:[%s148 + $0x38] sm:$0xff]
        %v2032 = vld [vmem:[%s148 + $0x40] sm:$0xff]
        %v2033 = vld [vmem:[%s148 + $0x48] sm:$0xff]
        %v2034 = vld [vmem:[%s148 + $0x50] sm:$0xff]
        %v2035 = vld [vmem:[%s148 + $0x58] sm:$0xf]
        %v2047 = vcombine.high %v2025, %v2025
        %v2048 = vcombine.high %v2026, %v2026
        %v2049 = vcombine.high %v2027, %v2027
        %v2050 = vcombine.high %v2028, %v2028
        %v2051 = vcombine.high %v2029, %v2029
        %v2052 = vcombine.high %v2030, %v2030
        %v2053 = vcombine.high %v2031, %v2031
        %v2054 = vcombine.high %v2032, %v2032
        %v2055 = vcombine.high %v2033, %v2033
        %v2056 = vcombine.high %v2034, %v2034
        %2057 = vrot.lane.b32.xlu0 %v2025, 40
        %v2058 = vpop.permute.xlu0 %2057
        %2059 = vrot.lane.b32.xlu0 %v2047, 40
        %v2060 = vpop.permute.xlu0 %2059
        %2061 = vrot.lane.b32.xlu0 %v2026, 40
        %v2062 = vpop.permute.xlu0 %2061
        %2063 = vrot.lane.b32.xlu0 %v2048, 40
        %v2064 = vpop.permute.xlu0 %2063
        %2065 = vrot.lane.b32.xlu0 %v2027, 40
        %v2066 = vpop.permute.xlu0 %2065
        %2067 = vrot.lane.b32.xlu0 %v2049, 40
        %v2068 = vpop.permute.xlu0 %2067
        %2069 = vrot.lane.b32.xlu0 %v2028, 40
        %v2070 = vpop.permute.xlu0 %2069
        %2071 = vrot.lane.b32.xlu0 %v2050, 40
        %v2072 = vpop.permute.xlu0 %2071
        %2073 = vrot.lane.b32.xlu0 %v2029, 40
        %v2074 = vpop.permute.xlu0 %2073
        %2075 = vrot.lane.b32.xlu0 %v2051, 40
        %v2076 = vpop.permute.xlu0 %2075
        %2077 = vrot.lane.b32.xlu0 %v2030, 40
        %v2078 = vpop.permute.xlu0 %2077
        %2079 = vrot.lane.b32.xlu0 %v2052, 40
        %v2080 = vpop.permute.xlu0 %2079
        %2081 = vrot.lane.b32.xlu0 %v2031, 40
        %v2082 = vpop.permute.xlu0 %2081
        %2083 = vrot.lane.b32.xlu0 %v2053, 40
        %v2084 = vpop.permute.xlu0 %2083
        %2085 = vrot.lane.b32.xlu0 %v2032, 40
        %v2086 = vpop.permute.xlu0 %2085
        %2087 = vrot.lane.b32.xlu0 %v2054, 40
        %v2088 = vpop.permute.xlu0 %2087
        %2089 = vrot.lane.b32.xlu0 %v2033, 40
        %v2090 = vpop.permute.xlu0 %2089
        %2091 = vrot.lane.b32.xlu0 %v2055, 40
        %v2092 = vpop.permute.xlu0 %2091
        %2093 = vrot.lane.b32.xlu0 %v2034, 40
        %v2094 = vpop.permute.xlu0 %2093
        %2095 = vrot.lane.b32.xlu0 %v2056, 40
        %v2096 = vpop.permute.xlu0 %2095
        %2097 = vrot.lane.b32.xlu0 %v2035, 40
        %v2098 = vpop.permute.xlu0 %2097
        %vm2099 = vcmask 326656
        %v2100 = vsel %vm2099, %v2058, %v2060
        %v2101 = vsel %vm2099, %v2060, %v2062
        %v2102 = vsel %vm2099, %v2062, %v2064
        %v2103 = vsel %vm2099, %v2064, %v2066
        %v2104 = vsel %vm2099, %v2066, %v2068
        %v2105 = vsel %vm2099, %v2068, %v2070
        %v2106 = vsel %vm2099, %v2070, %v2072
        %v2107 = vsel %vm2099, %v2072, %v2074
        %v2108 = vsel %vm2099, %v2074, %v2076
        %v2109 = vsel %vm2099, %v2076, %v2078
        %v2110 = vsel %vm2099, %v2078, %v2080
        %v2111 = vsel %vm2099, %v2080, %v2082
        %v2112 = vsel %vm2099, %v2082, %v2084
        %v2113 = vsel %vm2099, %v2084, %v2086
        %v2114 = vsel %vm2099, %v2086, %v2088
        %v2115 = vsel %vm2099, %v2088, %v2090
        %v2116 = vsel %vm2099, %v2090, %v2092
        %v2117 = vsel %vm2099, %v2092, %v2094
        %v2118 = vsel %vm2099, %v2094, %v2096
        %v2119 = vsel %vm2099, %v2096, %v2098
        %2141 = vst [vmem:[#allocation2 + $0x498] sm:$0xf] %v2100
        %2142 = vst [vmem:[#allocation2 + $0x4a0] sm:$0xf] %v2101
        %2143 = vst [vmem:[#allocation2 + $0x4a8] sm:$0xf] %v2102
        %2144 = vst [vmem:[#allocation2 + $0x4b0] sm:$0xf] %v2103
        %2145 = vst [vmem:[#allocation2 + $0x4b8] sm:$0xf] %v2104
        %2146 = vst [vmem:[#allocation2 + $0x4c0] sm:$0xf] %v2105
        %2147 = vst [vmem:[#allocation2 + $0x4c8] sm:$0xf] %v2106
        %2148 = vst [vmem:[#allocation2 + $0x4d0] sm:$0xf] %v2107
        %2149 = vst [vmem:[#allocation2 + $0x4d8] sm:$0xf] %v2108
        %2150 = vst [vmem:[#allocation2 + $0x4e0] sm:$0xf] %v2109
        %2151 = vst [vmem:[#allocation2 + $0x4e8] sm:$0xf] %v2110
        %2152 = vst [vmem:[#allocation2 + $0x4f0] sm:$0xf] %v2111
        %2153 = vst [vmem:[#allocation2 + $0x4f8] sm:$0xf] %v2112
        %2154 = vst [vmem:[#allocation2 + $0x500] sm:$0xf] %v2113
        %2155 = vst [vmem:[#allocation2 + $0x508] sm:$0xf] %v2114
        %2156 = vst [vmem:[#allocation2 + $0x510] sm:$0xf] %v2115
        %2157 = vst [vmem:[#allocation2 + $0x518] sm:$0xf] %v2116
        %2158 = vst [vmem:[#allocation2 + $0x520] sm:$0xf] %v2117
        %2159 = vst [vmem:[#allocation2 + $0x528] sm:$0xf] %v2118
        %2160 = vst [vmem:[#allocation2 + $0x530] sm:$0xf] %v2119
        %2161 = vst.msk [vmem:[#allocation2 + $0x538] sm:$0xf] %vm234, %v2098
        %v2162 = vld [vmem:[%s148 + $0x8] sm:$0xff]
        %v2163 = vld [vmem:[%s148 + $0x10] sm:$0xff]
        %v2164 = vld [vmem:[%s148 + $0x18] sm:$0xff]
        %v2165 = vld [vmem:[%s148 + $0x20] sm:$0xff]
        %v2166 = vld [vmem:[%s148 + $0x28] sm:$0xff]
        %v2167 = vld [vmem:[%s148 + $0x30] sm:$0xff]
        %v2168 = vld [vmem:[%s148 + $0x38] sm:$0xff]
        %v2169 = vld [vmem:[%s148 + $0x40] sm:$0xff]
        %v2170 = vld [vmem:[%s148 + $0x48] sm:$0xff]
        %v2171 = vld [vmem:[%s148 + $0x50] sm:$0xff]
        %v2172 = vld [vmem:[%s148 + $0x58] sm:$0xff]
        %v2184 = vcombine.low %v2162, %v2162
        %v2185 = vcombine.low %v2163, %v2163
        %v2186 = vcombine.low %v2164, %v2164
        %v2187 = vcombine.low %v2165, %v2165
        %v2188 = vcombine.low %v2166, %v2166
        %v2189 = vcombine.low %v2167, %v2167
        %v2190 = vcombine.low %v2168, %v2168
        %v2191 = vcombine.low %v2169, %v2169
        %v2192 = vcombine.low %v2170, %v2170
        %v2193 = vcombine.low %v2171, %v2171
        %v2194 = vcombine.low %v2172, %v2172
        %2195 = vrot.lane.b32.xlu0 %v2184, 24
        %v2196 = vpop.permute.xlu0 %2195
        %2197 = vrot.lane.b32.xlu0 %v2162, 24
        %v2198 = vpop.permute.xlu0 %2197
        %2199 = vrot.lane.b32.xlu0 %v2185, 24
        %v2200 = vpop.permute.xlu0 %2199
        %2201 = vrot.lane.b32.xlu0 %v2163, 24
        %v2202 = vpop.permute.xlu0 %2201
        %2203 = vrot.lane.b32.xlu0 %v2186, 24
        %v2204 = vpop.permute.xlu0 %2203
        %2205 = vrot.lane.b32.xlu0 %v2164, 24
        %v2206 = vpop.permute.xlu0 %2205
        %2207 = vrot.lane.b32.xlu0 %v2187, 24
        %v2208 = vpop.permute.xlu0 %2207
        %2209 = vrot.lane.b32.xlu0 %v2165, 24
        %v2210 = vpop.permute.xlu0 %2209
        %2211 = vrot.lane.b32.xlu0 %v2188, 24
        %v2212 = vpop.permute.xlu0 %2211
        %2213 = vrot.lane.b32.xlu0 %v2166, 24
        %v2214 = vpop.permute.xlu0 %2213
        %2215 = vrot.lane.b32.xlu0 %v2189, 24
        %v2216 = vpop.permute.xlu0 %2215
        %2217 = vrot.lane.b32.xlu0 %v2167, 24
        %v2218 = vpop.permute.xlu0 %2217
        %2219 = vrot.lane.b32.xlu0 %v2190, 24
        %v2220 = vpop.permute.xlu0 %2219
        %2221 = vrot.lane.b32.xlu0 %v2168, 24
        %v2222 = vpop.permute.xlu0 %2221
        %2223 = vrot.lane.b32.xlu0 %v2191, 24
        %v2224 = vpop.permute.xlu0 %2223
        %2225 = vrot.lane.b32.xlu0 %v2169, 24
        %v2226 = vpop.permute.xlu0 %2225
        %2227 = vrot.lane.b32.xlu0 %v2192, 24
        %v2228 = vpop.permute.xlu0 %2227
        %2229 = vrot.lane.b32.xlu0 %v2170, 24
        %v2230 = vpop.permute.xlu0 %2229
        %2231 = vrot.lane.b32.xlu0 %v2193, 24
        %v2232 = vpop.permute.xlu0 %2231
        %2233 = vrot.lane.b32.xlu0 %v2171, 24
        %v2234 = vpop.permute.xlu0 %2233
        %2235 = vrot.lane.b32.xlu0 %v2194, 24
        %v2236 = vpop.permute.xlu0 %2235
        %2237 = vrot.lane.b32.xlu0 %v2172, 24
        %v2238 = vpop.permute.xlu0 %2237
        %vm2239 = vcmask 195584
        %v2240 = vsel %vm2239, %v2196, %v2198
        %v2241 = vsel %vm2239, %v2198, %v2200
        %v2242 = vsel %vm2239, %v2200, %v2202
        %v2243 = vsel %vm2239, %v2202, %v2204
        %v2244 = vsel %vm2239, %v2204, %v2206
        %v2245 = vsel %vm2239, %v2206, %v2208
        %v2246 = vsel %vm2239, %v2208, %v2210
        %v2247 = vsel %vm2239, %v2210, %v2212
        %v2248 = vsel %vm2239, %v2212, %v2214
        %v2249 = vsel %vm2239, %v2214, %v2216
        %v2250 = vsel %vm2239, %v2216, %v2218
        %v2251 = vsel %vm2239, %v2218, %v2220
        %v2252 = vsel %vm2239, %v2220, %v2222
        %v2253 = vsel %vm2239, %v2222, %v2224
        %v2254 = vsel %vm2239, %v2224, %v2226
        %v2255 = vsel %vm2239, %v2226, %v2228
        %v2256 = vsel %vm2239, %v2228, %v2230
        %v2257 = vsel %vm2239, %v2230, %v2232
        %v2258 = vsel %vm2239, %v2232, %v2234
        %v2259 = vsel %vm2239, %v2234, %v2236
        %v2260 = vsel %vm2239, %v2236, %v2238
        %2282 = vst [vmem:[#allocation2 + $0x498] sm:$0xf0] %v2240
        %2283 = vst [vmem:[#allocation2 + $0x4a0] sm:$0xf0] %v2241
        %2284 = vst [vmem:[#allocation2 + $0x4a8] sm:$0xf0] %v2242
        %2285 = vst [vmem:[#allocation2 + $0x4b0] sm:$0xf0] %v2243
        %2286 = vst [vmem:[#allocation2 + $0x4b8] sm:$0xf0] %v2244
        %2287 = vst [vmem:[#allocation2 + $0x4c0] sm:$0xf0] %v2245
        %2288 = vst [vmem:[#allocation2 + $0x4c8] sm:$0xf0] %v2246
        %2289 = vst [vmem:[#allocation2 + $0x4d0] sm:$0xf0] %v2247
        %2290 = vst [vmem:[#allocation2 + $0x4d8] sm:$0xf0] %v2248
        %2291 = vst [vmem:[#allocation2 + $0x4e0] sm:$0xf0] %v2249
        %2292 = vst [vmem:[#allocation2 + $0x4e8] sm:$0xf0] %v2250
        %2293 = vst [vmem:[#allocation2 + $0x4f0] sm:$0xf0] %v2251
        %2294 = vst [vmem:[#allocation2 + $0x4f8] sm:$0xf0] %v2252
        %2295 = vst [vmem:[#allocation2 + $0x500] sm:$0xf0] %v2253
        %2296 = vst [vmem:[#allocation2 + $0x508] sm:$0xf0] %v2254
        %2297 = vst [vmem:[#allocation2 + $0x510] sm:$0xf0] %v2255
        %2298 = vst [vmem:[#allocation2 + $0x518] sm:$0xf0] %v2256
        %2299 = vst [vmem:[#allocation2 + $0x520] sm:$0xf0] %v2257
        %2300 = vst [vmem:[#allocation2 + $0x528] sm:$0xf0] %v2258
        %2301 = vst [vmem:[#allocation2 + $0x530] sm:$0xf0] %v2259
        %2302 = vst.msk [vmem:[#allocation2 + $0x538] sm:$0xf0] %vm373, %v2260
        %v2303 = vld [vmem:[%s148 + $0x8] sm:$0xff]
        %v2304 = vld [vmem:[%s148 + $0x10] sm:$0xff]
        %v2305 = vld [vmem:[%s148 + $0x18] sm:$0xff]
        %v2306 = vld [vmem:[%s148 + $0x20] sm:$0xff]
        %v2307 = vld [vmem:[%s148 + $0x28] sm:$0xff]
        %v2308 = vld [vmem:[%s148 + $0x30] sm:$0xff]
        %v2309 = vld [vmem:[%s148 + $0x38] sm:$0xff]
        %v2310 = vld [vmem:[%s148 + $0x40] sm:$0xff]
        %v2311 = vld [vmem:[%s148 + $0x48] sm:$0xff]
        %v2312 = vld [vmem:[%s148 + $0x50] sm:$0xff]
        %v2313 = vld [vmem:[%s148 + $0x58] sm:$0xff]
        %v2325 = vcombine.high %v2303, %v2303
        %v2326 = vcombine.high %v2304, %v2304
        %v2327 = vcombine.high %v2305, %v2305
        %v2328 = vcombine.high %v2306, %v2306
        %v2329 = vcombine.high %v2307, %v2307
        %v2330 = vcombine.high %v2308, %v2308
        %v2331 = vcombine.high %v2309, %v2309
        %v2332 = vcombine.high %v2310, %v2310
        %v2333 = vcombine.high %v2311, %v2311
        %v2334 = vcombine.high %v2312, %v2312
        %v2335 = vcombine.high %v2313, %v2313
        %2336 = vrot.lane.b32.xlu0 %v2303, 23
        %v2337 = vpop.permute.xlu0 %2336
        %2338 = vrot.lane.b32.xlu0 %v2325, 23
        %v2339 = vpop.permute.xlu0 %2338
        %2340 = vrot.lane.b32.xlu0 %v2304, 23
        %v2341 = vpop.permute.xlu0 %2340
        %2342 = vrot.lane.b32.xlu0 %v2326, 23
        %v2343 = vpop.permute.xlu0 %2342
        %2344 = vrot.lane.b32.xlu0 %v2305, 23
        %v2345 = vpop.permute.xlu0 %2344
        %2346 = vrot.lane.b32.xlu0 %v2327, 23
        %v2347 = vpop.permute.xlu0 %2346
        %2348 = vrot.lane.b32.xlu0 %v2306, 23
        %v2349 = vpop.permute.xlu0 %2348
        %2350 = vrot.lane.b32.xlu0 %v2328, 23
        %v2351 = vpop.permute.xlu0 %2350
        %2352 = vrot.lane.b32.xlu0 %v2307, 23
        %v2353 = vpop.permute.xlu0 %2352
        %2354 = vrot.lane.b32.xlu0 %v2329, 23
        %v2355 = vpop.permute.xlu0 %2354
        %2356 = vrot.lane.b32.xlu0 %v2308, 23
        %v2357 = vpop.permute.xlu0 %2356
        %2358 = vrot.lane.b32.xlu0 %v2330, 23
        %v2359 = vpop.permute.xlu0 %2358
        %2360 = vrot.lane.b32.xlu0 %v2309, 23
        %v2361 = vpop.permute.xlu0 %2360
        %2362 = vrot.lane.b32.xlu0 %v2331, 23
        %v2363 = vpop.permute.xlu0 %2362
        %2364 = vrot.lane.b32.xlu0 %v2310, 23
        %v2365 = vpop.permute.xlu0 %2364
        %2366 = vrot.lane.b32.xlu0 %v2332, 23
        %v2367 = vpop.permute.xlu0 %2366
        %2368 = vrot.lane.b32.xlu0 %v2311, 23
        %v2369 = vpop.permute.xlu0 %2368
        %2370 = vrot.lane.b32.xlu0 %v2333, 23
        %v2371 = vpop.permute.xlu0 %2370
        %2372 = vrot.lane.b32.xlu0 %v2312, 23
        %v2373 = vpop.permute.xlu0 %2372
        %2374 = vrot.lane.b32.xlu0 %v2334, 23
        %v2375 = vpop.permute.xlu0 %2374
        %2376 = vrot.lane.b32.xlu0 %v2313, 23
        %v2377 = vpop.permute.xlu0 %2376
        %2378 = vrot.lane.b32.xlu0 %v2335, 23
        %v2379 = vpop.permute.xlu0 %2378
        %vm2380 = vcmask 187392
        %v2381 = vsel %vm2380, %v2337, %v2339
        %v2382 = vsel %vm2380, %v2339, %v2341
        %v2383 = vsel %vm2380, %v2341, %v2343
        %v2384 = vsel %vm2380, %v2343, %v2345
        %v2385 = vsel %vm2380, %v2345, %v2347
        %v2386 = vsel %vm2380, %v2347, %v2349
        %v2387 = vsel %vm2380, %v2349, %v2351
        %v2388 = vsel %vm2380, %v2351, %v2353
        %v2389 = vsel %vm2380, %v2353, %v2355
        %v2390 = vsel %vm2380, %v2355, %v2357
        %v2391 = vsel %vm2380, %v2357, %v2359
        %v2392 = vsel %vm2380, %v2359, %v2361
        %v2393 = vsel %vm2380, %v2361, %v2363
        %v2394 = vsel %vm2380, %v2363, %v2365
        %v2395 = vsel %vm2380, %v2365, %v2367
        %v2396 = vsel %vm2380, %v2367, %v2369
        %v2397 = vsel %vm2380, %v2369, %v2371
        %v2398 = vsel %vm2380, %v2371, %v2373
        %v2399 = vsel %vm2380, %v2373, %v2375
        %v2400 = vsel %vm2380, %v2375, %v2377
        %v2401 = vsel %vm2380, %v2377, %v2379
        %2423 = vst [vmem:[#allocation2 + $0x540] sm:$0xf] %v2381
        %2424 = vst [vmem:[#allocation2 + $0x548] sm:$0xf] %v2382
        %2425 = vst [vmem:[#allocation2 + $0x550] sm:$0xf] %v2383
        %2426 = vst [vmem:[#allocation2 + $0x558] sm:$0xf] %v2384
        %2427 = vst [vmem:[#allocation2 + $0x560] sm:$0xf] %v2385
        %2428 = vst [vmem:[#allocation2 + $0x568] sm:$0xf] %v2386
        %2429 = vst [vmem:[#allocation2 + $0x570] sm:$0xf] %v2387
        %2430 = vst [vmem:[#allocation2 + $0x578] sm:$0xf] %v2388
        %2431 = vst [vmem:[#allocation2 + $0x580] sm:$0xf] %v2389
        %2432 = vst [vmem:[#allocation2 + $0x588] sm:$0xf] %v2390
        %2433 = vst [vmem:[#allocation2 + $0x590] sm:$0xf] %v2391
        %2434 = vst [vmem:[#allocation2 + $0x598] sm:$0xf] %v2392
        %2435 = vst [vmem:[#allocation2 + $0x5a0] sm:$0xf] %v2393
        %2436 = vst [vmem:[#allocation2 + $0x5a8] sm:$0xf] %v2394
        %2437 = vst [vmem:[#allocation2 + $0x5b0] sm:$0xf] %v2395
        %2438 = vst [vmem:[#allocation2 + $0x5b8] sm:$0xf] %v2396
        %2439 = vst [vmem:[#allocation2 + $0x5c0] sm:$0xf] %v2397
        %2440 = vst [vmem:[#allocation2 + $0x5c8] sm:$0xf] %v2398
        %2441 = vst [vmem:[#allocation2 + $0x5d0] sm:$0xf] %v2399
        %2442 = vst [vmem:[#allocation2 + $0x5d8] sm:$0xf] %v2400
        %2443 = vst.msk [vmem:[#allocation2 + $0x5e0] sm:$0xf] %vm234, %v2401
        %v2444 = vld [vmem:[%s148 + $0x8] sm:$0xff]
        %v2445 = vld [vmem:[%s148 + $0x10] sm:$0xff]
        %v2446 = vld [vmem:[%s148 + $0x18] sm:$0xff]
        %v2447 = vld [vmem:[%s148 + $0x20] sm:$0xff]
        %v2448 = vld [vmem:[%s148 + $0x28] sm:$0xff]
        %v2449 = vld [vmem:[%s148 + $0x30] sm:$0xff]
        %v2450 = vld [vmem:[%s148 + $0x38] sm:$0xff]
        %v2451 = vld [vmem:[%s148 + $0x40] sm:$0xff]
        %v2452 = vld [vmem:[%s148 + $0x48] sm:$0xff]
        %v2453 = vld [vmem:[%s148 + $0x50] sm:$0xff]
        %v2454 = vld [vmem:[%s148 + $0x58] sm:$0xff]
        %v2466 = vcombine.low %v2444, %v2444
        %v2467 = vcombine.low %v2445, %v2445
        %v2468 = vcombine.low %v2446, %v2446
        %v2469 = vcombine.low %v2447, %v2447
        %v2470 = vcombine.low %v2448, %v2448
        %v2471 = vcombine.low %v2449, %v2449
        %v2472 = vcombine.low %v2450, %v2450
        %v2473 = vcombine.low %v2451, %v2451
        %v2474 = vcombine.low %v2452, %v2452
        %v2475 = vcombine.low %v2453, %v2453
        %v2476 = vcombine.low %v2454, %v2454
        %2477 = vrot.lane.b32.xlu0 %v2466, 22
        %v2478 = vpop.permute.xlu0 %2477
        %2479 = vrot.lane.b32.xlu0 %v2444, 22
        %v2480 = vpop.permute.xlu0 %2479
        %2481 = vrot.lane.b32.xlu0 %v2467, 22
        %v2482 = vpop.permute.xlu0 %2481
        %2483 = vrot.lane.b32.xlu0 %v2445, 22
        %v2484 = vpop.permute.xlu0 %2483
        %2485 = vrot.lane.b32.xlu0 %v2468, 22
        %v2486 = vpop.permute.xlu0 %2485
        %2487 = vrot.lane.b32.xlu0 %v2446, 22
        %v2488 = vpop.permute.xlu0 %2487
        %2489 = vrot.lane.b32.xlu0 %v2469, 22
        %v2490 = vpop.permute.xlu0 %2489
        %2491 = vrot.lane.b32.xlu0 %v2447, 22
        %v2492 = vpop.permute.xlu0 %2491
        %2493 = vrot.lane.b32.xlu0 %v2470, 22
        %v2494 = vpop.permute.xlu0 %2493
        %2495 = vrot.lane.b32.xlu0 %v2448, 22
        %v2496 = vpop.permute.xlu0 %2495
        %2497 = vrot.lane.b32.xlu0 %v2471, 22
        %v2498 = vpop.permute.xlu0 %2497
        %2499 = vrot.lane.b32.xlu0 %v2449, 22
        %v2500 = vpop.permute.xlu0 %2499
        %2501 = vrot.lane.b32.xlu0 %v2472, 22
        %v2502 = vpop.permute.xlu0 %2501
        %2503 = vrot.lane.b32.xlu0 %v2450, 22
        %v2504 = vpop.permute.xlu0 %2503
        %2505 = vrot.lane.b32.xlu0 %v2473, 22
        %v2506 = vpop.permute.xlu0 %2505
        %2507 = vrot.lane.b32.xlu0 %v2451, 22
        %v2508 = vpop.permute.xlu0 %2507
        %2509 = vrot.lane.b32.xlu0 %v2474, 22
        %v2510 = vpop.permute.xlu0 %2509
        %2511 = vrot.lane.b32.xlu0 %v2452, 22
        %v2512 = vpop.permute.xlu0 %2511
        %2513 = vrot.lane.b32.xlu0 %v2475, 22
        %v2514 = vpop.permute.xlu0 %2513
        %2515 = vrot.lane.b32.xlu0 %v2453, 22
        %v2516 = vpop.permute.xlu0 %2515
        %2517 = vrot.lane.b32.xlu0 %v2476, 22
        %v2518 = vpop.permute.xlu0 %2517
        %2519 = vrot.lane.b32.xlu0 %v2454, 22
        %v2520 = vpop.permute.xlu0 %2519
        %vm2521 = vcmask 179200
        %v2522 = vsel %vm2521, %v2478, %v2480
        %v2523 = vsel %vm2521, %v2480, %v2482
        %v2524 = vsel %vm2521, %v2482, %v2484
        %v2525 = vsel %vm2521, %v2484, %v2486
        %v2526 = vsel %vm2521, %v2486, %v2488
        %v2527 = vsel %vm2521, %v2488, %v2490
        %v2528 = vsel %vm2521, %v2490, %v2492
        %v2529 = vsel %vm2521, %v2492, %v2494
        %v2530 = vsel %vm2521, %v2494, %v2496
        %v2531 = vsel %vm2521, %v2496, %v2498
        %v2532 = vsel %vm2521, %v2498, %v2500
        %v2533 = vsel %vm2521, %v2500, %v2502
        %v2534 = vsel %vm2521, %v2502, %v2504
        %v2535 = vsel %vm2521, %v2504, %v2506
        %v2536 = vsel %vm2521, %v2506, %v2508
        %v2537 = vsel %vm2521, %v2508, %v2510
        %v2538 = vsel %vm2521, %v2510, %v2512
        %v2539 = vsel %vm2521, %v2512, %v2514
        %v2540 = vsel %vm2521, %v2514, %v2516
        %v2541 = vsel %vm2521, %v2516, %v2518
        %v2542 = vsel %vm2521, %v2518, %v2520
        %2564 = vst [vmem:[#allocation2 + $0x540] sm:$0xf0] %v2522
        %2565 = vst [vmem:[#allocation2 + $0x548] sm:$0xf0] %v2523
        %2566 = vst [vmem:[#allocation2 + $0x550] sm:$0xf0] %v2524
        %2567 = vst [vmem:[#allocation2 + $0x558] sm:$0xf0] %v2525
        %2568 = vst [vmem:[#allocation2 + $0x560] sm:$0xf0] %v2526
        %2569 = vst [vmem:[#allocation2 + $0x568] sm:$0xf0] %v2527
        %2570 = vst [vmem:[#allocation2 + $0x570] sm:$0xf0] %v2528
        %2571 = vst [vmem:[#allocation2 + $0x578] sm:$0xf0] %v2529
        %2572 = vst [vmem:[#allocation2 + $0x580] sm:$0xf0] %v2530
        %2573 = vst [vmem:[#allocation2 + $0x588] sm:$0xf0] %v2531
        %2574 = vst [vmem:[#allocation2 + $0x590] sm:$0xf0] %v2532
        %2575 = vst [vmem:[#allocation2 + $0x598] sm:$0xf0] %v2533
        %2576 = vst [vmem:[#allocation2 + $0x5a0] sm:$0xf0] %v2534
        %2577 = vst [vmem:[#allocation2 + $0x5a8] sm:$0xf0] %v2535
        %2578 = vst [vmem:[#allocation2 + $0x5b0] sm:$0xf0] %v2536
        %2579 = vst [vmem:[#allocation2 + $0x5b8] sm:$0xf0] %v2537
        %2580 = vst [vmem:[#allocation2 + $0x5c0] sm:$0xf0] %v2538
        %2581 = vst [vmem:[#allocation2 + $0x5c8] sm:$0xf0] %v2539
        %2582 = vst [vmem:[#allocation2 + $0x5d0] sm:$0xf0] %v2540
        %2583 = vst [vmem:[#allocation2 + $0x5d8] sm:$0xf0] %v2541
        %2584 = vst.msk [vmem:[#allocation2 + $0x5e0] sm:$0xf0] %vm373, %v2542
        %v2585 = vld [vmem:[%s148 + $0x14] sm:$0xff]
        %v2586 = vld [vmem:[%s148 + $0x1c] sm:$0xff]
        %v2587 = vld [vmem:[%s148 + $0x24] sm:$0xff]
        %v2588 = vld [vmem:[%s148 + $0x2c] sm:$0xff]
        %v2589 = vld [vmem:[%s148 + $0x34] sm:$0xff]
        %v2590 = vld [vmem:[%s148 + $0x3c] sm:$0xff]
        %v2591 = vld [vmem:[%s148 + $0x44] sm:$0xff]
        %v2592 = vld [vmem:[%s148 + $0x4c] sm:$0xff]
        %v2593 = vld [vmem:[%s148 + $0x54] sm:$0xff]
        %v2594 = vld [vmem:[%s148 + $0x5c] sm:$0xff]
        %v2595 = vld [vmem:[%s148 + $0x64] sm:$0xf]
        %v2607 = vcombine.high %v2585, %v2585
        %v2608 = vcombine.high %v2586, %v2586
        %v2609 = vcombine.high %v2587, %v2587
        %v2610 = vcombine.high %v2588, %v2588
        %v2611 = vcombine.high %v2589, %v2589
        %v2612 = vcombine.high %v2590, %v2590
        %v2613 = vcombine.high %v2591, %v2591
        %v2614 = vcombine.high %v2592, %v2592
        %v2615 = vcombine.high %v2593, %v2593
        %v2616 = vcombine.high %v2594, %v2594
        %2617 = vrot.lane.b32.xlu0 %v2585, 120
        %v2618 = vpop.permute.xlu0 %2617
        %2619 = vrot.lane.b32.xlu0 %v2607, 120
        %v2620 = vpop.permute.xlu0 %2619
        %2621 = vrot.lane.b32.xlu0 %v2586, 120
        %v2622 = vpop.permute.xlu0 %2621
        %2623 = vrot.lane.b32.xlu0 %v2608, 120
        %v2624 = vpop.permute.xlu0 %2623
        %2625 = vrot.lane.b32.xlu0 %v2587, 120
        %v2626 = vpop.permute.xlu0 %2625
        %2627 = vrot.lane.b32.xlu0 %v2609, 120
        %v2628 = vpop.permute.xlu0 %2627
        %2629 = vrot.lane.b32.xlu0 %v2588, 120
        %v2630 = vpop.permute.xlu0 %2629
        %2631 = vrot.lane.b32.xlu0 %v2610, 120
        %v2632 = vpop.permute.xlu0 %2631
        %2633 = vrot.lane.b32.xlu0 %v2589, 120
        %v2634 = vpop.permute.xlu0 %2633
        %2635 = vrot.lane.b32.xlu0 %v2611, 120
        %v2636 = vpop.permute.xlu0 %2635
        %2637 = vrot.lane.b32.xlu0 %v2590, 120
        %v2638 = vpop.permute.xlu0 %2637
        %2639 = vrot.lane.b32.xlu0 %v2612, 120
        %v2640 = vpop.permute.xlu0 %2639
        %2641 = vrot.lane.b32.xlu0 %v2591, 120
        %v2642 = vpop.permute.xlu0 %2641
        %2643 = vrot.lane.b32.xlu0 %v2613, 120
        %v2644 = vpop.permute.xlu0 %2643
        %2645 = vrot.lane.b32.xlu0 %v2592, 120
        %v2646 = vpop.permute.xlu0 %2645
        %2647 = vrot.lane.b32.xlu0 %v2614, 120
        %v2648 = vpop.permute.xlu0 %2647
        %2649 = vrot.lane.b32.xlu0 %v2593, 120
        %v2650 = vpop.permute.xlu0 %2649
        %2651 = vrot.lane.b32.xlu0 %v2615, 120
        %v2652 = vpop.permute.xlu0 %2651
        %2653 = vrot.lane.b32.xlu0 %v2594, 120
        %v2654 = vpop.permute.xlu0 %2653
        %2655 = vrot.lane.b32.xlu0 %v2616, 120
        %v2656 = vpop.permute.xlu0 %2655
        %2657 = vrot.lane.b32.xlu0 %v2595, 120
        %v2658 = vpop.permute.xlu0 %2657
        %vm2659 = vcmask 982016
        %v2660 = vsel %vm2659, %v2618, %v2620
        %v2661 = vsel %vm2659, %v2620, %v2622
        %v2662 = vsel %vm2659, %v2622, %v2624
        %v2663 = vsel %vm2659, %v2624, %v2626
        %v2664 = vsel %vm2659, %v2626, %v2628
        %v2665 = vsel %vm2659, %v2628, %v2630
        %v2666 = vsel %vm2659, %v2630, %v2632
        %v2667 = vsel %vm2659, %v2632, %v2634
        %v2668 = vsel %vm2659, %v2634, %v2636
        %v2669 = vsel %vm2659, %v2636, %v2638
        %v2670 = vsel %vm2659, %v2638, %v2640
        %v2671 = vsel %vm2659, %v2640, %v2642
        %v2672 = vsel %vm2659, %v2642, %v2644
        %v2673 = vsel %vm2659, %v2644, %v2646
        %v2674 = vsel %vm2659, %v2646, %v2648
        %v2675 = vsel %vm2659, %v2648, %v2650
        %v2676 = vsel %vm2659, %v2650, %v2652
        %v2677 = vsel %vm2659, %v2652, %v2654
        %v2678 = vsel %vm2659, %v2654, %v2656
        %v2679 = vsel %vm2659, %v2656, %v2658
        %2701 = vst [vmem:[#allocation2 + $0x5e8] sm:$0xf] %v2660
        %2702 = vst [vmem:[#allocation2 + $0x5f0] sm:$0xf] %v2661
        %2703 = vst [vmem:[#allocation2 + $0x5f8] sm:$0xf] %v2662
        %2704 = vst [vmem:[#allocation2 + $0x600] sm:$0xf] %v2663
        %2705 = vst [vmem:[#allocation2 + $0x608] sm:$0xf] %v2664
        %2706 = vst [vmem:[#allocation2 + $0x610] sm:$0xf] %v2665
        %2707 = vst [vmem:[#allocation2 + $0x618] sm:$0xf] %v2666
        %2708 = vst [vmem:[#allocation2 + $0x620] sm:$0xf] %v2667
        %2709 = vst [vmem:[#allocation2 + $0x628] sm:$0xf] %v2668
        %2710 = vst [vmem:[#allocation2 + $0x630] sm:$0xf] %v2669
        %2711 = vst [vmem:[#allocation2 + $0x638] sm:$0xf] %v2670
        %2712 = vst [vmem:[#allocation2 + $0x640] sm:$0xf] %v2671
        %2713 = vst [vmem:[#allocation2 + $0x648] sm:$0xf] %v2672
        %2714 = vst [vmem:[#allocation2 + $0x650] sm:$0xf] %v2673
        %2715 = vst [vmem:[#allocation2 + $0x658] sm:$0xf] %v2674
        %2716 = vst [vmem:[#allocation2 + $0x660] sm:$0xf] %v2675
        %2717 = vst [vmem:[#allocation2 + $0x668] sm:$0xf] %v2676
        %2718 = vst [vmem:[#allocation2 + $0x670] sm:$0xf] %v2677
        %2719 = vst [vmem:[#allocation2 + $0x678] sm:$0xf] %v2678
        %2720 = vst [vmem:[#allocation2 + $0x680] sm:$0xf] %v2679
        %2721 = vst.msk [vmem:[#allocation2 + $0x688] sm:$0xf] %vm234, %v2658
        %v2722 = vld [vmem:[%s148 + $0x14] sm:$0xff]
        %v2723 = vld [vmem:[%s148 + $0x1c] sm:$0xff]
        %v2724 = vld [vmem:[%s148 + $0x24] sm:$0xff]
        %v2725 = vld [vmem:[%s148 + $0x2c] sm:$0xff]
        %v2726 = vld [vmem:[%s148 + $0x34] sm:$0xff]
        %v2727 = vld [vmem:[%s148 + $0x3c] sm:$0xff]
        %v2728 = vld [vmem:[%s148 + $0x44] sm:$0xff]
        %v2729 = vld [vmem:[%s148 + $0x4c] sm:$0xff]
        %v2730 = vld [vmem:[%s148 + $0x54] sm:$0xff]
        %v2731 = vld [vmem:[%s148 + $0x5c] sm:$0xff]
        %v2732 = vld [vmem:[%s148 + $0x64] sm:$0xf]
        %v2744 = vcombine.low %v2722, %v2722
        %v2745 = vcombine.low %v2723, %v2723
        %v2746 = vcombine.low %v2724, %v2724
        %v2747 = vcombine.low %v2725, %v2725
        %v2748 = vcombine.low %v2726, %v2726
        %v2749 = vcombine.low %v2727, %v2727
        %v2750 = vcombine.low %v2728, %v2728
        %v2751 = vcombine.low %v2729, %v2729
        %v2752 = vcombine.low %v2730, %v2730
        %v2753 = vcombine.low %v2731, %v2731
        %v2754 = vcombine.low %v2732, %v2732
        %2755 = vrot.lane.b32.xlu0 %v2744, 119
        %v2756 = vpop.permute.xlu0 %2755
        %2757 = vrot.lane.b32.xlu0 %v2722, 119
        %v2758 = vpop.permute.xlu0 %2757
        %2759 = vrot.lane.b32.xlu0 %v2745, 119
        %v2760 = vpop.permute.xlu0 %2759
        %2761 = vrot.lane.b32.xlu0 %v2723, 119
        %v2762 = vpop.permute.xlu0 %2761
        %2763 = vrot.lane.b32.xlu0 %v2746, 119
        %v2764 = vpop.permute.xlu0 %2763
        %2765 = vrot.lane.b32.xlu0 %v2724, 119
        %v2766 = vpop.permute.xlu0 %2765
        %2767 = vrot.lane.b32.xlu0 %v2747, 119
        %v2768 = vpop.permute.xlu0 %2767
        %2769 = vrot.lane.b32.xlu0 %v2725, 119
        %v2770 = vpop.permute.xlu0 %2769
        %2771 = vrot.lane.b32.xlu0 %v2748, 119
        %v2772 = vpop.permute.xlu0 %2771
        %2773 = vrot.lane.b32.xlu0 %v2726, 119
        %v2774 = vpop.permute.xlu0 %2773
        %2775 = vrot.lane.b32.xlu0 %v2749, 119
        %v2776 = vpop.permute.xlu0 %2775
        %2777 = vrot.lane.b32.xlu0 %v2727, 119
        %v2778 = vpop.permute.xlu0 %2777
        %2779 = vrot.lane.b32.xlu0 %v2750, 119
        %v2780 = vpop.permute.xlu0 %2779
        %2781 = vrot.lane.b32.xlu0 %v2728, 119
        %v2782 = vpop.permute.xlu0 %2781
        %2783 = vrot.lane.b32.xlu0 %v2751, 119
        %v2784 = vpop.permute.xlu0 %2783
        %2785 = vrot.lane.b32.xlu0 %v2729, 119
        %v2786 = vpop.permute.xlu0 %2785
        %2787 = vrot.lane.b32.xlu0 %v2752, 119
        %v2788 = vpop.permute.xlu0 %2787
        %2789 = vrot.lane.b32.xlu0 %v2730, 119
        %v2790 = vpop.permute.xlu0 %2789
        %2791 = vrot.lane.b32.xlu0 %v2753, 119
        %v2792 = vpop.permute.xlu0 %2791
        %2793 = vrot.lane.b32.xlu0 %v2731, 119
        %v2794 = vpop.permute.xlu0 %2793
        %2795 = vrot.lane.b32.xlu0 %v2754, 119
        %v2796 = vpop.permute.xlu0 %2795
        %vm2797 = vcmask 973824
        %v2798 = vsel %vm2797, %v2756, %v2758
        %v2799 = vsel %vm2797, %v2758, %v2760
        %v2800 = vsel %vm2797, %v2760, %v2762
        %v2801 = vsel %vm2797, %v2762, %v2764
        %v2802 = vsel %vm2797, %v2764, %v2766
        %v2803 = vsel %vm2797, %v2766, %v2768
        %v2804 = vsel %vm2797, %v2768, %v2770
        %v2805 = vsel %vm2797, %v2770, %v2772
        %v2806 = vsel %vm2797, %v2772, %v2774
        %v2807 = vsel %vm2797, %v2774, %v2776
        %v2808 = vsel %vm2797, %v2776, %v2778
        %v2809 = vsel %vm2797, %v2778, %v2780
        %v2810 = vsel %vm2797, %v2780, %v2782
        %v2811 = vsel %vm2797, %v2782, %v2784
        %v2812 = vsel %vm2797, %v2784, %v2786
        %v2813 = vsel %vm2797, %v2786, %v2788
        %v2814 = vsel %vm2797, %v2788, %v2790
        %v2815 = vsel %vm2797, %v2790, %v2792
        %v2816 = vsel %vm2797, %v2792, %v2794
        %v2817 = vsel %vm2797, %v2794, %v2796
        %2839 = vst [vmem:[#allocation2 + $0x5e8] sm:$0xf0] %v2798
        %2840 = vst [vmem:[#allocation2 + $0x5f0] sm:$0xf0] %v2799
        %2841 = vst [vmem:[#allocation2 + $0x5f8] sm:$0xf0] %v2800
        %2842 = vst [vmem:[#allocation2 + $0x600] sm:$0xf0] %v2801
        %2843 = vst [vmem:[#allocation2 + $0x608] sm:$0xf0] %v2802
        %2844 = vst [vmem:[#allocation2 + $0x610] sm:$0xf0] %v2803
        %2845 = vst [vmem:[#allocation2 + $0x618] sm:$0xf0] %v2804
        %2846 = vst [vmem:[#allocation2 + $0x620] sm:$0xf0] %v2805
        %2847 = vst [vmem:[#allocation2 + $0x628] sm:$0xf0] %v2806
        %2848 = vst [vmem:[#allocation2 + $0x630] sm:$0xf0] %v2807
        %2849 = vst [vmem:[#allocation2 + $0x638] sm:$0xf0] %v2808
        %2850 = vst [vmem:[#allocation2 + $0x640] sm:$0xf0] %v2809
        %2851 = vst [vmem:[#allocation2 + $0x648] sm:$0xf0] %v2810
        %2852 = vst [vmem:[#allocation2 + $0x650] sm:$0xf0] %v2811
        %2853 = vst [vmem:[#allocation2 + $0x658] sm:$0xf0] %v2812
        %2854 = vst [vmem:[#allocation2 + $0x660] sm:$0xf0] %v2813
        %2855 = vst [vmem:[#allocation2 + $0x668] sm:$0xf0] %v2814
        %2856 = vst [vmem:[#allocation2 + $0x670] sm:$0xf0] %v2815
        %2857 = vst [vmem:[#allocation2 + $0x678] sm:$0xf0] %v2816
        %2858 = vst [vmem:[#allocation2 + $0x680] sm:$0xf0] %v2817
        %2859 = vst.msk [vmem:[#allocation2 + $0x688] sm:$0xf0] %vm373, %v2796
        %v2860 = vld [vmem:[%s148 + $0x14] sm:$0xff]
        %v2861 = vld [vmem:[%s148 + $0x1c] sm:$0xff]
        %v2862 = vld [vmem:[%s148 + $0x24] sm:$0xff]
        %v2863 = vld [vmem:[%s148 + $0x2c] sm:$0xff]
        %v2864 = vld [vmem:[%s148 + $0x34] sm:$0xff]
        %v2865 = vld [vmem:[%s148 + $0x3c] sm:$0xff]
        %v2866 = vld [vmem:[%s148 + $0x44] sm:$0xff]
        %v2867 = vld [vmem:[%s148 + $0x4c] sm:$0xff]
        %v2868 = vld [vmem:[%s148 + $0x54] sm:$0xff]
        %v2869 = vld [vmem:[%s148 + $0x5c] sm:$0xff]
        %v2870 = vld [vmem:[%s148 + $0x64] sm:$0xf]
        %v2882 = vcombine.high %v2860, %v2860
        %v2883 = vcombine.high %v2861, %v2861
        %v2884 = vcombine.high %v2862, %v2862
        %v2885 = vcombine.high %v2863, %v2863
        %v2886 = vcombine.high %v2864, %v2864
        %v2887 = vcombine.high %v2865, %v2865
        %v2888 = vcombine.high %v2866, %v2866
        %v2889 = vcombine.high %v2867, %v2867
        %v2890 = vcombine.high %v2868, %v2868
        %v2891 = vcombine.high %v2869, %v2869
        %2892 = vrot.lane.b32.xlu0 %v2860, 118
        %v2893 = vpop.permute.xlu0 %2892
        %2894 = vrot.lane.b32.xlu0 %v2882, 118
        %v2895 = vpop.permute.xlu0 %2894
        %2896 = vrot.lane.b32.xlu0 %v2861, 118
        %v2897 = vpop.permute.xlu0 %2896
        %2898 = vrot.lane.b32.xlu0 %v2883, 118
        %v2899 = vpop.permute.xlu0 %2898
        %2900 = vrot.lane.b32.xlu0 %v2862, 118
        %v2901 = vpop.permute.xlu0 %2900
        %2902 = vrot.lane.b32.xlu0 %v2884, 118
        %v2903 = vpop.permute.xlu0 %2902
        %2904 = vrot.lane.b32.xlu0 %v2863, 118
        %v2905 = vpop.permute.xlu0 %2904
        %2906 = vrot.lane.b32.xlu0 %v2885, 118
        %v2907 = vpop.permute.xlu0 %2906
        %2908 = vrot.lane.b32.xlu0 %v2864, 118
        %v2909 = vpop.permute.xlu0 %2908
        %2910 = vrot.lane.b32.xlu0 %v2886, 118
        %v2911 = vpop.permute.xlu0 %2910
        %2912 = vrot.lane.b32.xlu0 %v2865, 118
        %v2913 = vpop.permute.xlu0 %2912
        %2914 = vrot.lane.b32.xlu0 %v2887, 118
        %v2915 = vpop.permute.xlu0 %2914
        %2916 = vrot.lane.b32.xlu0 %v2866, 118
        %v2917 = vpop.permute.xlu0 %2916
        %2918 = vrot.lane.b32.xlu0 %v2888, 118
        %v2919 = vpop.permute.xlu0 %2918
        %2920 = vrot.lane.b32.xlu0 %v2867, 118
        %v2921 = vpop.permute.xlu0 %2920
        %2922 = vrot.lane.b32.xlu0 %v2889, 118
        %v2923 = vpop.permute.xlu0 %2922
        %2924 = vrot.lane.b32.xlu0 %v2868, 118
        %v2925 = vpop.permute.xlu0 %2924
        %2926 = vrot.lane.b32.xlu0 %v2890, 118
        %v2927 = vpop.permute.xlu0 %2926
        %2928 = vrot.lane.b32.xlu0 %v2869, 118
        %v2929 = vpop.permute.xlu0 %2928
        %2930 = vrot.lane.b32.xlu0 %v2891, 118
        %v2931 = vpop.permute.xlu0 %2930
        %2932 = vrot.lane.b32.xlu0 %v2870, 118
        %v2933 = vpop.permute.xlu0 %2932
        %vm2934 = vcmask 965632
        %v2935 = vsel %vm2934, %v2893, %v2895
        %v2936 = vsel %vm2934, %v2895, %v2897
        %v2937 = vsel %vm2934, %v2897, %v2899
        %v2938 = vsel %vm2934, %v2899, %v2901
        %v2939 = vsel %vm2934, %v2901, %v2903
        %v2940 = vsel %vm2934, %v2903, %v2905
        %v2941 = vsel %vm2934, %v2905, %v2907
        %v2942 = vsel %vm2934, %v2907, %v2909
        %v2943 = vsel %vm2934, %v2909, %v2911
        %v2944 = vsel %vm2934, %v2911, %v2913
        %v2945 = vsel %vm2934, %v2913, %v2915
        %v2946 = vsel %vm2934, %v2915, %v2917
        %v2947 = vsel %vm2934, %v2917, %v2919
        %v2948 = vsel %vm2934, %v2919, %v2921
        %v2949 = vsel %vm2934, %v2921, %v2923
        %v2950 = vsel %vm2934, %v2923, %v2925
        %v2951 = vsel %vm2934, %v2925, %v2927
        %v2952 = vsel %vm2934, %v2927, %v2929
        %v2953 = vsel %vm2934, %v2929, %v2931
        %v2954 = vsel %vm2934, %v2931, %v2933
        %2976 = vst [vmem:[#allocation2 + $0x690] sm:$0xf] %v2935
        %2977 = vst [vmem:[#allocation2 + $0x698] sm:$0xf] %v2936
        %2978 = vst [vmem:[#allocation2 + $0x6a0] sm:$0xf] %v2937
        %2979 = vst [vmem:[#allocation2 + $0x6a8] sm:$0xf] %v2938
        %2980 = vst [vmem:[#allocation2 + $0x6b0] sm:$0xf] %v2939
        %2981 = vst [vmem:[#allocation2 + $0x6b8] sm:$0xf] %v2940
        %2982 = vst [vmem:[#allocation2 + $0x6c0] sm:$0xf] %v2941
        %2983 = vst [vmem:[#allocation2 + $0x6c8] sm:$0xf] %v2942
        %2984 = vst [vmem:[#allocation2 + $0x6d0] sm:$0xf] %v2943
        %2985 = vst [vmem:[#allocation2 + $0x6d8] sm:$0xf] %v2944
        %2986 = vst [vmem:[#allocation2 + $0x6e0] sm:$0xf] %v2945
        %2987 = vst [vmem:[#allocation2 + $0x6e8] sm:$0xf] %v2946
        %2988 = vst [vmem:[#allocation2 + $0x6f0] sm:$0xf] %v2947
        %2989 = vst [vmem:[#allocation2 + $0x6f8] sm:$0xf] %v2948
        %2990 = vst [vmem:[#allocation2 + $0x700] sm:$0xf] %v2949
        %2991 = vst [vmem:[#allocation2 + $0x708] sm:$0xf] %v2950
        %2992 = vst [vmem:[#allocation2 + $0x710] sm:$0xf] %v2951
        %2993 = vst [vmem:[#allocation2 + $0x718] sm:$0xf] %v2952
        %2994 = vst [vmem:[#allocation2 + $0x720] sm:$0xf] %v2953
        %2995 = vst [vmem:[#allocation2 + $0x728] sm:$0xf] %v2954
        %2996 = vst.msk [vmem:[#allocation2 + $0x730] sm:$0xf] %vm234, %v2933
        %v2997 = vld [vmem:[%s148 + $0x14] sm:$0xff]
        %v2998 = vld [vmem:[%s148 + $0x1c] sm:$0xff]
        %v2999 = vld [vmem:[%s148 + $0x24] sm:$0xff]
        %v3000 = vld [vmem:[%s148 + $0x2c] sm:$0xff]
        %v3001 = vld [vmem:[%s148 + $0x34] sm:$0xff]
        %v3002 = vld [vmem:[%s148 + $0x3c] sm:$0xff]
        %v3003 = vld [vmem:[%s148 + $0x44] sm:$0xff]
        %v3004 = vld [vmem:[%s148 + $0x4c] sm:$0xff]
        %v3005 = vld [vmem:[%s148 + $0x54] sm:$0xff]
        %v3006 = vld [vmem:[%s148 + $0x5c] sm:$0xff]
        %v3007 = vld [vmem:[%s148 + $0x64] sm:$0xf]
        %v3019 = vcombine.low %v2997, %v2997
        %v3020 = vcombine.low %v2998, %v2998
        %v3021 = vcombine.low %v2999, %v2999
        %v3022 = vcombine.low %v3000, %v3000
        %v3023 = vcombine.low %v3001, %v3001
        %v3024 = vcombine.low %v3002, %v3002
        %v3025 = vcombine.low %v3003, %v3003
        %v3026 = vcombine.low %v3004, %v3004
        %v3027 = vcombine.low %v3005, %v3005
        %v3028 = vcombine.low %v3006, %v3006
        %v3029 = vcombine.low %v3007, %v3007
        %3030 = vrot.lane.b32.xlu0 %v3019, 102
        %v3031 = vpop.permute.xlu0 %3030
        %3032 = vrot.lane.b32.xlu0 %v2997, 102
        %v3033 = vpop.permute.xlu0 %3032
        %3034 = vrot.lane.b32.xlu0 %v3020, 102
        %v3035 = vpop.permute.xlu0 %3034
        %3036 = vrot.lane.b32.xlu0 %v2998, 102
        %v3037 = vpop.permute.xlu0 %3036
        %3038 = vrot.lane.b32.xlu0 %v3021, 102
        %v3039 = vpop.permute.xlu0 %3038
        %3040 = vrot.lane.b32.xlu0 %v2999, 102
        %v3041 = vpop.permute.xlu0 %3040
        %3042 = vrot.lane.b32.xlu0 %v3022, 102
        %v3043 = vpop.permute.xlu0 %3042
        %3044 = vrot.lane.b32.xlu0 %v3000, 102
        %v3045 = vpop.permute.xlu0 %3044
        %3046 = vrot.lane.b32.xlu0 %v3023, 102
        %v3047 = vpop.permute.xlu0 %3046
        %3048 = vrot.lane.b32.xlu0 %v3001, 102
        %v3049 = vpop.permute.xlu0 %3048
        %3050 = vrot.lane.b32.xlu0 %v3024, 102
        %v3051 = vpop.permute.xlu0 %3050
        %3052 = vrot.lane.b32.xlu0 %v3002, 102
        %v3053 = vpop.permute.xlu0 %3052
        %3054 = vrot.lane.b32.xlu0 %v3025, 102
        %v3055 = vpop.permute.xlu0 %3054
        %3056 = vrot.lane.b32.xlu0 %v3003, 102
        %v3057 = vpop.permute.xlu0 %3056
        %3058 = vrot.lane.b32.xlu0 %v3026, 102
        %v3059 = vpop.permute.xlu0 %3058
        %3060 = vrot.lane.b32.xlu0 %v3004, 102
        %v3061 = vpop.permute.xlu0 %3060
        %3062 = vrot.lane.b32.xlu0 %v3027, 102
        %v3063 = vpop.permute.xlu0 %3062
        %3064 = vrot.lane.b32.xlu0 %v3005, 102
        %v3065 = vpop.permute.xlu0 %3064
        %3066 = vrot.lane.b32.xlu0 %v3028, 102
        %v3067 = vpop.permute.xlu0 %3066
        %3068 = vrot.lane.b32.xlu0 %v3006, 102
        %v3069 = vpop.permute.xlu0 %3068
        %3070 = vrot.lane.b32.xlu0 %v3029, 102
        %v3071 = vpop.permute.xlu0 %3070
        %vm3072 = vcmask 834560
        %v3073 = vsel %vm3072, %v3031, %v3033
        %v3074 = vsel %vm3072, %v3033, %v3035
        %v3075 = vsel %vm3072, %v3035, %v3037
        %v3076 = vsel %vm3072, %v3037, %v3039
        %v3077 = vsel %vm3072, %v3039, %v3041
        %v3078 = vsel %vm3072, %v3041, %v3043
        %v3079 = vsel %vm3072, %v3043, %v3045
        %v3080 = vsel %vm3072, %v3045, %v3047
        %v3081 = vsel %vm3072, %v3047, %v3049
        %v3082 = vsel %vm3072, %v3049, %v3051
        %v3083 = vsel %vm3072, %v3051, %v3053
        %v3084 = vsel %vm3072, %v3053, %v3055
        %v3085 = vsel %vm3072, %v3055, %v3057
        %v3086 = vsel %vm3072, %v3057, %v3059
        %v3087 = vsel %vm3072, %v3059, %v3061
        %v3088 = vsel %vm3072, %v3061, %v3063
        %v3089 = vsel %vm3072, %v3063, %v3065
        %v3090 = vsel %vm3072, %v3065, %v3067
        %v3091 = vsel %vm3072, %v3067, %v3069
        %v3092 = vsel %vm3072, %v3069, %v3071
        %3114 = vst [vmem:[#allocation2 + $0x690] sm:$0xf0] %v3073
        %3115 = vst [vmem:[#allocation2 + $0x698] sm:$0xf0] %v3074
        %3116 = vst [vmem:[#allocation2 + $0x6a0] sm:$0xf0] %v3075
        %3117 = vst [vmem:[#allocation2 + $0x6a8] sm:$0xf0] %v3076
        %3118 = vst [vmem:[#allocation2 + $0x6b0] sm:$0xf0] %v3077
        %3119 = vst [vmem:[#allocation2 + $0x6b8] sm:$0xf0] %v3078
        %3120 = vst [vmem:[#allocation2 + $0x6c0] sm:$0xf0] %v3079
        %3121 = vst [vmem:[#allocation2 + $0x6c8] sm:$0xf0] %v3080
        %3122 = vst [vmem:[#allocation2 + $0x6d0] sm:$0xf0] %v3081
        %3123 = vst [vmem:[#allocation2 + $0x6d8] sm:$0xf0] %v3082
        %3124 = vst [vmem:[#allocation2 + $0x6e0] sm:$0xf0] %v3083
        %3125 = vst [vmem:[#allocation2 + $0x6e8] sm:$0xf0] %v3084
        %3126 = vst [vmem:[#allocation2 + $0x6f0] sm:$0xf0] %v3085
        %3127 = vst [vmem:[#allocation2 + $0x6f8] sm:$0xf0] %v3086
        %3128 = vst [vmem:[#allocation2 + $0x700] sm:$0xf0] %v3087
        %3129 = vst [vmem:[#allocation2 + $0x708] sm:$0xf0] %v3088
        %3130 = vst [vmem:[#allocation2 + $0x710] sm:$0xf0] %v3089
        %3131 = vst [vmem:[#allocation2 + $0x718] sm:$0xf0] %v3090
        %3132 = vst [vmem:[#allocation2 + $0x720] sm:$0xf0] %v3091
        %3133 = vst [vmem:[#allocation2 + $0x728] sm:$0xf0] %v3092
        %3134 = vst.msk [vmem:[#allocation2 + $0x730] sm:$0xf0] %vm373, %v3071
        %v3135 = vld [vmem:[%s148 + $0x14] sm:$0xff]
        %v3136 = vld [vmem:[%s148 + $0x1c] sm:$0xff]
        %v3137 = vld [vmem:[%s148 + $0x24] sm:$0xff]
        %v3138 = vld [vmem:[%s148 + $0x2c] sm:$0xff]
        %v3139 = vld [vmem:[%s148 + $0x34] sm:$0xff]
        %v3140 = vld [vmem:[%s148 + $0x3c] sm:$0xff]
        %v3141 = vld [vmem:[%s148 + $0x44] sm:$0xff]
        %v3142 = vld [vmem:[%s148 + $0x4c] sm:$0xff]
        %v3143 = vld [vmem:[%s148 + $0x54] sm:$0xff]
        %v3144 = vld [vmem:[%s148 + $0x5c] sm:$0xff]
        %v3145 = vld [vmem:[%s148 + $0x64] sm:$0xf]
        %v3157 = vcombine.high %v3135, %v3135
        %v3158 = vcombine.high %v3136, %v3136
        %v3159 = vcombine.high %v3137, %v3137
        %v3160 = vcombine.high %v3138, %v3138
        %v3161 = vcombine.high %v3139, %v3139
        %v3162 = vcombine.high %v3140, %v3140
        %v3163 = vcombine.high %v3141, %v3141
        %v3164 = vcombine.high %v3142, %v3142
        %v3165 = vcombine.high %v3143, %v3143
        %v3166 = vcombine.high %v3144, %v3144
        %3167 = vrot.lane.b32.xlu0 %v3135, 101
        %v3168 = vpop.permute.xlu0 %3167
        %3169 = vrot.lane.b32.xlu0 %v3157, 101
        %v3170 = vpop.permute.xlu0 %3169
        %3171 = vrot.lane.b32.xlu0 %v3136, 101
        %v3172 = vpop.permute.xlu0 %3171
        %3173 = vrot.lane.b32.xlu0 %v3158, 101
        %v3174 = vpop.permute.xlu0 %3173
        %3175 = vrot.lane.b32.xlu0 %v3137, 101
        %v3176 = vpop.permute.xlu0 %3175
        %3177 = vrot.lane.b32.xlu0 %v3159, 101
        %v3178 = vpop.permute.xlu0 %3177
        %3179 = vrot.lane.b32.xlu0 %v3138, 101
        %v3180 = vpop.permute.xlu0 %3179
        %3181 = vrot.lane.b32.xlu0 %v3160, 101
        %v3182 = vpop.permute.xlu0 %3181
        %3183 = vrot.lane.b32.xlu0 %v3139, 101
        %v3184 = vpop.permute.xlu0 %3183
        %3185 = vrot.lane.b32.xlu0 %v3161, 101
        %v3186 = vpop.permute.xlu0 %3185
        %3187 = vrot.lane.b32.xlu0 %v3140, 101
        %v3188 = vpop.permute.xlu0 %3187
        %3189 = vrot.lane.b32.xlu0 %v3162, 101
        %v3190 = vpop.permute.xlu0 %3189
        %3191 = vrot.lane.b32.xlu0 %v3141, 101
        %v3192 = vpop.permute.xlu0 %3191
        %3193 = vrot.lane.b32.xlu0 %v3163, 101
        %v3194 = vpop.permute.xlu0 %3193
        %3195 = vrot.lane.b32.xlu0 %v3142, 101
        %v3196 = vpop.permute.xlu0 %3195
        %3197 = vrot.lane.b32.xlu0 %v3164, 101
        %v3198 = vpop.permute.xlu0 %3197
        %3199 = vrot.lane.b32.xlu0 %v3143, 101
        %v3200 = vpop.permute.xlu0 %3199
        %3201 = vrot.lane.b32.xlu0 %v3165, 101
        %v3202 = vpop.permute.xlu0 %3201
        %3203 = vrot.lane.b32.xlu0 %v3144, 101
        %v3204 = vpop.permute.xlu0 %3203
        %3205 = vrot.lane.b32.xlu0 %v3166, 101
        %v3206 = vpop.permute.xlu0 %3205
        %3207 = vrot.lane.b32.xlu0 %v3145, 101
        %v3208 = vpop.permute.xlu0 %3207
        %vm3209 = vcmask 826368
        %v3210 = vsel %vm3209, %v3168, %v3170
        %v3211 = vsel %vm3209, %v3170, %v3172
        %v3212 = vsel %vm3209, %v3172, %v3174
        %v3213 = vsel %vm3209, %v3174, %v3176
        %v3214 = vsel %vm3209, %v3176, %v3178
        %v3215 = vsel %vm3209, %v3178, %v3180
        %v3216 = vsel %vm3209, %v3180, %v3182
        %v3217 = vsel %vm3209, %v3182, %v3184
        %v3218 = vsel %vm3209, %v3184, %v3186
        %v3219 = vsel %vm3209, %v3186, %v3188
        %v3220 = vsel %vm3209, %v3188, %v3190
        %v3221 = vsel %vm3209, %v3190, %v3192
        %v3222 = vsel %vm3209, %v3192, %v3194
        %v3223 = vsel %vm3209, %v3194, %v3196
        %v3224 = vsel %vm3209, %v3196, %v3198
        %v3225 = vsel %vm3209, %v3198, %v3200
        %v3226 = vsel %vm3209, %v3200, %v3202
        %v3227 = vsel %vm3209, %v3202, %v3204
        %v3228 = vsel %vm3209, %v3204, %v3206
        %v3229 = vsel %vm3209, %v3206, %v3208
        %3251 = vst [vmem:[#allocation2 + $0x738] sm:$0xf] %v3210
        %3252 = vst [vmem:[#allocation2 + $0x740] sm:$0xf] %v3211
        %3253 = vst [vmem:[#allocation2 + $0x748] sm:$0xf] %v3212
        %3254 = vst [vmem:[#allocation2 + $0x750] sm:$0xf] %v3213
        %3255 = vst [vmem:[#allocation2 + $0x758] sm:$0xf] %v3214
        %3256 = vst [vmem:[#allocation2 + $0x760] sm:$0xf] %v3215
        %3257 = vst [vmem:[#allocation2 + $0x768] sm:$0xf] %v3216
        %3258 = vst [vmem:[#allocation2 + $0x770] sm:$0xf] %v3217
        %3259 = vst [vmem:[#allocation2 + $0x778] sm:$0xf] %v3218
        %3260 = vst [vmem:[#allocation2 + $0x780] sm:$0xf] %v3219
        %3261 = vst [vmem:[#allocation2 + $0x788] sm:$0xf] %v3220
        %3262 = vst [vmem:[#allocation2 + $0x790] sm:$0xf] %v3221
        %3263 = vst [vmem:[#allocation2 + $0x798] sm:$0xf] %v3222
        %3264 = vst [vmem:[#allocation2 + $0x7a0] sm:$0xf] %v3223
        %3265 = vst [vmem:[#allocation2 + $0x7a8] sm:$0xf] %v3224
        %3266 = vst [vmem:[#allocation2 + $0x7b0] sm:$0xf] %v3225
        %3267 = vst [vmem:[#allocation2 + $0x7b8] sm:$0xf] %v3226
        %3268 = vst [vmem:[#allocation2 + $0x7c0] sm:$0xf] %v3227
        %3269 = vst [vmem:[#allocation2 + $0x7c8] sm:$0xf] %v3228
        %3270 = vst [vmem:[#allocation2 + $0x7d0] sm:$0xf] %v3229
        %3271 = vst.msk [vmem:[#allocation2 + $0x7d8] sm:$0xf] %vm234, %v3208
        %v3272 = vld [vmem:[%s148 + $0x14] sm:$0xff]
        %v3273 = vld [vmem:[%s148 + $0x1c] sm:$0xff]
        %v3274 = vld [vmem:[%s148 + $0x24] sm:$0xff]
        %v3275 = vld [vmem:[%s148 + $0x2c] sm:$0xff]
        %v3276 = vld [vmem:[%s148 + $0x34] sm:$0xff]
        %v3277 = vld [vmem:[%s148 + $0x3c] sm:$0xff]
        %v3278 = vld [vmem:[%s148 + $0x44] sm:$0xff]
        %v3279 = vld [vmem:[%s148 + $0x4c] sm:$0xff]
        %v3280 = vld [vmem:[%s148 + $0x54] sm:$0xff]
        %v3281 = vld [vmem:[%s148 + $0x5c] sm:$0xff]
        %v3282 = vld [vmem:[%s148 + $0x64] sm:$0xf]
        %v3294 = vcombine.low %v3272, %v3272
        %v3295 = vcombine.low %v3273, %v3273
        %v3296 = vcombine.low %v3274, %v3274
        %v3297 = vcombine.low %v3275, %v3275
        %v3298 = vcombine.low %v3276, %v3276
        %v3299 = vcombine.low %v3277, %v3277
        %v3300 = vcombine.low %v3278, %v3278
        %v3301 = vcombine.low %v3279, %v3279
        %v3302 = vcombine.low %v3280, %v3280
        %v3303 = vcombine.low %v3281, %v3281
        %v3304 = vcombine.low %v3282, %v3282
        %3305 = vrot.lane.b32.xlu0 %v3294, 100
        %v3306 = vpop.permute.xlu0 %3305
        %3307 = vrot.lane.b32.xlu0 %v3272, 100
        %v3308 = vpop.permute.xlu0 %3307
        %3309 = vrot.lane.b32.xlu0 %v3295, 100
        %v3310 = vpop.permute.xlu0 %3309
        %3311 = vrot.lane.b32.xlu0 %v3273, 100
        %v3312 = vpop.permute.xlu0 %3311
        %3313 = vrot.lane.b32.xlu0 %v3296, 100
        %v3314 = vpop.permute.xlu0 %3313
        %3315 = vrot.lane.b32.xlu0 %v3274, 100
        %v3316 = vpop.permute.xlu0 %3315
        %3317 = vrot.lane.b32.xlu0 %v3297, 100
        %v3318 = vpop.permute.xlu0 %3317
        %3319 = vrot.lane.b32.xlu0 %v3275, 100
        %v3320 = vpop.permute.xlu0 %3319
        %3321 = vrot.lane.b32.xlu0 %v3298, 100
        %v3322 = vpop.permute.xlu0 %3321
        %3323 = vrot.lane.b32.xlu0 %v3276, 100
        %v3324 = vpop.permute.xlu0 %3323
        %3325 = vrot.lane.b32.xlu0 %v3299, 100
        %v3326 = vpop.permute.xlu0 %3325
        %3327 = vrot.lane.b32.xlu0 %v3277, 100
        %v3328 = vpop.permute.xlu0 %3327
        %3329 = vrot.lane.b32.xlu0 %v3300, 100
        %v3330 = vpop.permute.xlu0 %3329
        %3331 = vrot.lane.b32.xlu0 %v3278, 100
        %v3332 = vpop.permute.xlu0 %3331
        %3333 = vrot.lane.b32.xlu0 %v3301, 100
        %v3334 = vpop.permute.xlu0 %3333
        %3335 = vrot.lane.b32.xlu0 %v3279, 100
        %v3336 = vpop.permute.xlu0 %3335
        %3337 = vrot.lane.b32.xlu0 %v3302, 100
        %v3338 = vpop.permute.xlu0 %3337
        %3339 = vrot.lane.b32.xlu0 %v3280, 100
        %v3340 = vpop.permute.xlu0 %3339
        %3341 = vrot.lane.b32.xlu0 %v3303, 100
        %v3342 = vpop.permute.xlu0 %3341
        %3343 = vrot.lane.b32.xlu0 %v3281, 100
        %v3344 = vpop.permute.xlu0 %3343
        %3345 = vrot.lane.b32.xlu0 %v3304, 100
        %v3346 = vpop.permute.xlu0 %3345
        %vm3347 = vcmask 818176
        %v3348 = vsel %vm3347, %v3306, %v3308
        %v3349 = vsel %vm3347, %v3308, %v3310
        %v3350 = vsel %vm3347, %v3310, %v3312
        %v3351 = vsel %vm3347, %v3312, %v3314
        %v3352 = vsel %vm3347, %v3314, %v3316
        %v3353 = vsel %vm3347, %v3316, %v3318
        %v3354 = vsel %vm3347, %v3318, %v3320
        %v3355 = vsel %vm3347, %v3320, %v3322
        %v3356 = vsel %vm3347, %v3322, %v3324
        %v3357 = vsel %vm3347, %v3324, %v3326
        %v3358 = vsel %vm3347, %v3326, %v3328
        %v3359 = vsel %vm3347, %v3328, %v3330
        %v3360 = vsel %vm3347, %v3330, %v3332
        %v3361 = vsel %vm3347, %v3332, %v3334
        %v3362 = vsel %vm3347, %v3334, %v3336
        %v3363 = vsel %vm3347, %v3336, %v3338
        %v3364 = vsel %vm3347, %v3338, %v3340
        %v3365 = vsel %vm3347, %v3340, %v3342
        %v3366 = vsel %vm3347, %v3342, %v3344
        %v3367 = vsel %vm3347, %v3344, %v3346
        %3389 = vst [vmem:[#allocation2 + $0x738] sm:$0xf0] %v3348
        %3390 = vst [vmem:[#allocation2 + $0x740] sm:$0xf0] %v3349
        %3391 = vst [vmem:[#allocation2 + $0x748] sm:$0xf0] %v3350
        %3392 = vst [vmem:[#allocation2 + $0x750] sm:$0xf0] %v3351
        %3393 = vst [vmem:[#allocation2 + $0x758] sm:$0xf0] %v3352
        %3394 = vst [vmem:[#allocation2 + $0x760] sm:$0xf0] %v3353
        %3395 = vst [vmem:[#allocation2 + $0x768] sm:$0xf0] %v3354
        %3396 = vst [vmem:[#allocation2 + $0x770] sm:$0xf0] %v3355
        %3397 = vst [vmem:[#allocation2 + $0x778] sm:$0xf0] %v3356
        %3398 = vst [vmem:[#allocation2 + $0x780] sm:$0xf0] %v3357
        %3399 = vst [vmem:[#allocation2 + $0x788] sm:$0xf0] %v3358
        %3400 = vst [vmem:[#allocation2 + $0x790] sm:$0xf0] %v3359
        %3401 = vst [vmem:[#allocation2 + $0x798] sm:$0xf0] %v3360
        %3402 = vst [vmem:[#allocation2 + $0x7a0] sm:$0xf0] %v3361
        %3403 = vst [vmem:[#allocation2 + $0x7a8] sm:$0xf0] %v3362
        %3404 = vst [vmem:[#allocation2 + $0x7b0] sm:$0xf0] %v3363
        %3405 = vst [vmem:[#allocation2 + $0x7b8] sm:$0xf0] %v3364
        %3406 = vst [vmem:[#allocation2 + $0x7c0] sm:$0xf0] %v3365
        %3407 = vst [vmem:[#allocation2 + $0x7c8] sm:$0xf0] %v3366
        %3408 = vst [vmem:[#allocation2 + $0x7d0] sm:$0xf0] %v3367
        %3409 = vst.msk [vmem:[#allocation2 + $0x7d8] sm:$0xf0] %vm373, %v3346
        %v3410 = vld [vmem:[%s148 + $0x14] sm:$0xff]
        %v3411 = vld [vmem:[%s148 + $0x1c] sm:$0xff]
        %v3412 = vld [vmem:[%s148 + $0x24] sm:$0xff]
        %v3413 = vld [vmem:[%s148 + $0x2c] sm:$0xff]
        %v3414 = vld [vmem:[%s148 + $0x34] sm:$0xff]
        %v3415 = vld [vmem:[%s148 + $0x3c] sm:$0xff]
        %v3416 = vld [vmem:[%s148 + $0x44] sm:$0xff]
        %v3417 = vld [vmem:[%s148 + $0x4c] sm:$0xff]
        %v3418 = vld [vmem:[%s148 + $0x54] sm:$0xff]
        %v3419 = vld [vmem:[%s148 + $0x5c] sm:$0xff]
        %v3420 = vld [vmem:[%s148 + $0x64] sm:$0xf]
        %v3432 = vcombine.high %v3410, %v3410
        %v3433 = vcombine.high %v3411, %v3411
        %v3434 = vcombine.high %v3412, %v3412
        %v3435 = vcombine.high %v3413, %v3413
        %v3436 = vcombine.high %v3414, %v3414
        %v3437 = vcombine.high %v3415, %v3415
        %v3438 = vcombine.high %v3416, %v3416
        %v3439 = vcombine.high %v3417, %v3417
        %v3440 = vcombine.high %v3418, %v3418
        %v3441 = vcombine.high %v3419, %v3419
        %3442 = vrot.lane.b32.xlu0 %v3410, 84
        %v3443 = vpop.permute.xlu0 %3442
        %3444 = vrot.lane.b32.xlu0 %v3432, 84
        %v3445 = vpop.permute.xlu0 %3444
        %3446 = vrot.lane.b32.xlu0 %v3411, 84
        %v3447 = vpop.permute.xlu0 %3446
        %3448 = vrot.lane.b32.xlu0 %v3433, 84
        %v3449 = vpop.permute.xlu0 %3448
        %3450 = vrot.lane.b32.xlu0 %v3412, 84
        %v3451 = vpop.permute.xlu0 %3450
        %3452 = vrot.lane.b32.xlu0 %v3434, 84
        %v3453 = vpop.permute.xlu0 %3452
        %3454 = vrot.lane.b32.xlu0 %v3413, 84
        %v3455 = vpop.permute.xlu0 %3454
        %3456 = vrot.lane.b32.xlu0 %v3435, 84
        %v3457 = vpop.permute.xlu0 %3456
        %3458 = vrot.lane.b32.xlu0 %v3414, 84
        %v3459 = vpop.permute.xlu0 %3458
        %3460 = vrot.lane.b32.xlu0 %v3436, 84
        %v3461 = vpop.permute.xlu0 %3460
        %3462 = vrot.lane.b32.xlu0 %v3415, 84
        %v3463 = vpop.permute.xlu0 %3462
        %3464 = vrot.lane.b32.xlu0 %v3437, 84
        %v3465 = vpop.permute.xlu0 %3464
        %3466 = vrot.lane.b32.xlu0 %v3416, 84
        %v3467 = vpop.permute.xlu0 %3466
        %3468 = vrot.lane.b32.xlu0 %v3438, 84
        %v3469 = vpop.permute.xlu0 %3468
        %3470 = vrot.lane.b32.xlu0 %v3417, 84
        %v3471 = vpop.permute.xlu0 %3470
        %3472 = vrot.lane.b32.xlu0 %v3439, 84
        %v3473 = vpop.permute.xlu0 %3472
        %3474 = vrot.lane.b32.xlu0 %v3418, 84
        %v3475 = vpop.permute.xlu0 %3474
        %3476 = vrot.lane.b32.xlu0 %v3440, 84
        %v3477 = vpop.permute.xlu0 %3476
        %3478 = vrot.lane.b32.xlu0 %v3419, 84
        %v3479 = vpop.permute.xlu0 %3478
        %3480 = vrot.lane.b32.xlu0 %v3441, 84
        %v3481 = vpop.permute.xlu0 %3480
        %3482 = vrot.lane.b32.xlu0 %v3420, 84
        %v3483 = vpop.permute.xlu0 %3482
        %vm3484 = vcmask 687104
        %v3485 = vsel %vm3484, %v3443, %v3445
        %v3486 = vsel %vm3484, %v3445, %v3447
        %v3487 = vsel %vm3484, %v3447, %v3449
        %v3488 = vsel %vm3484, %v3449, %v3451
        %v3489 = vsel %vm3484, %v3451, %v3453
        %v3490 = vsel %vm3484, %v3453, %v3455
        %v3491 = vsel %vm3484, %v3455, %v3457
        %v3492 = vsel %vm3484, %v3457, %v3459
        %v3493 = vsel %vm3484, %v3459, %v3461
        %v3494 = vsel %vm3484, %v3461, %v3463
        %v3495 = vsel %vm3484, %v3463, %v3465
        %v3496 = vsel %vm3484, %v3465, %v3467
        %v3497 = vsel %vm3484, %v3467, %v3469
        %v3498 = vsel %vm3484, %v3469, %v3471
        %v3499 = vsel %vm3484, %v3471, %v3473
        %v3500 = vsel %vm3484, %v3473, %v3475
        %v3501 = vsel %vm3484, %v3475, %v3477
        %v3502 = vsel %vm3484, %v3477, %v3479
        %v3503 = vsel %vm3484, %v3479, %v3481
        %v3504 = vsel %vm3484, %v3481, %v3483
        %3526 = vst [vmem:[#allocation2 + $0x7e0] sm:$0xf] %v3485
        %3527 = vst [vmem:[#allocation2 + $0x7e8] sm:$0xf] %v3486
        %3528 = vst [vmem:[#allocation2 + $0x7f0] sm:$0xf] %v3487
        %3529 = vst [vmem:[#allocation2 + $0x7f8] sm:$0xf] %v3488
        %3530 = vst [vmem:[#allocation2 + $0x800] sm:$0xf] %v3489
        %3531 = vst [vmem:[#allocation2 + $0x808] sm:$0xf] %v3490
        %3532 = vst [vmem:[#allocation2 + $0x810] sm:$0xf] %v3491
        %3533 = vst [vmem:[#allocation2 + $0x818] sm:$0xf] %v3492
        %3534 = vst [vmem:[#allocation2 + $0x820] sm:$0xf] %v3493
        %3535 = vst [vmem:[#allocation2 + $0x828] sm:$0xf] %v3494
        %3536 = vst [vmem:[#allocation2 + $0x830] sm:$0xf] %v3495
        %3537 = vst [vmem:[#allocation2 + $0x838] sm:$0xf] %v3496
        %3538 = vst [vmem:[#allocation2 + $0x840] sm:$0xf] %v3497
        %3539 = vst [vmem:[#allocation2 + $0x848] sm:$0xf] %v3498
        %3540 = vst [vmem:[#allocation2 + $0x850] sm:$0xf] %v3499
        %3541 = vst [vmem:[#allocation2 + $0x858] sm:$0xf] %v3500
        %3542 = vst [vmem:[#allocation2 + $0x860] sm:$0xf] %v3501
        %3543 = vst [vmem:[#allocation2 + $0x868] sm:$0xf] %v3502
        %3544 = vst [vmem:[#allocation2 + $0x870] sm:$0xf] %v3503
        %3545 = vst [vmem:[#allocation2 + $0x878] sm:$0xf] %v3504
        %3546 = vst.msk [vmem:[#allocation2 + $0x880] sm:$0xf] %vm234, %v3483
        %v3547 = vld [vmem:[%s148 + $0x14] sm:$0xff]
        %v3548 = vld [vmem:[%s148 + $0x1c] sm:$0xff]
        %v3549 = vld [vmem:[%s148 + $0x24] sm:$0xff]
        %v3550 = vld [vmem:[%s148 + $0x2c] sm:$0xff]
        %v3551 = vld [vmem:[%s148 + $0x34] sm:$0xff]
        %v3552 = vld [vmem:[%s148 + $0x3c] sm:$0xff]
        %v3553 = vld [vmem:[%s148 + $0x44] sm:$0xff]
        %v3554 = vld [vmem:[%s148 + $0x4c] sm:$0xff]
        %v3555 = vld [vmem:[%s148 + $0x54] sm:$0xff]
        %v3556 = vld [vmem:[%s148 + $0x5c] sm:$0xff]
        %v3557 = vld [vmem:[%s148 + $0x64] sm:$0xf]
        %v3569 = vcombine.low %v3547, %v3547
        %v3570 = vcombine.low %v3548, %v3548
        %v3571 = vcombine.low %v3549, %v3549
        %v3572 = vcombine.low %v3550, %v3550
        %v3573 = vcombine.low %v3551, %v3551
        %v3574 = vcombine.low %v3552, %v3552
        %v3575 = vcombine.low %v3553, %v3553
        %v3576 = vcombine.low %v3554, %v3554
        %v3577 = vcombine.low %v3555, %v3555
        %v3578 = vcombine.low %v3556, %v3556
        %v3579 = vcombine.low %v3557, %v3557
        %3580 = vrot.lane.b32.xlu0 %v3569, 83
        %v3581 = vpop.permute.xlu0 %3580
        %3582 = vrot.lane.b32.xlu0 %v3547, 83
        %v3583 = vpop.permute.xlu0 %3582
        %3584 = vrot.lane.b32.xlu0 %v3570, 83
        %v3585 = vpop.permute.xlu0 %3584
        %3586 = vrot.lane.b32.xlu0 %v3548, 83
        %v3587 = vpop.permute.xlu0 %3586
        %3588 = vrot.lane.b32.xlu0 %v3571, 83
        %v3589 = vpop.permute.xlu0 %3588
        %3590 = vrot.lane.b32.xlu0 %v3549, 83
        %v3591 = vpop.permute.xlu0 %3590
        %3592 = vrot.lane.b32.xlu0 %v3572, 83
        %v3593 = vpop.permute.xlu0 %3592
        %3594 = vrot.lane.b32.xlu0 %v3550, 83
        %v3595 = vpop.permute.xlu0 %3594
        %3596 = vrot.lane.b32.xlu0 %v3573, 83
        %v3597 = vpop.permute.xlu0 %3596
        %3598 = vrot.lane.b32.xlu0 %v3551, 83
        %v3599 = vpop.permute.xlu0 %3598
        %3600 = vrot.lane.b32.xlu0 %v3574, 83
        %v3601 = vpop.permute.xlu0 %3600
        %3602 = vrot.lane.b32.xlu0 %v3552, 83
        %v3603 = vpop.permute.xlu0 %3602
        %3604 = vrot.lane.b32.xlu0 %v3575, 83
        %v3605 = vpop.permute.xlu0 %3604
        %3606 = vrot.lane.b32.xlu0 %v3553, 83
        %v3607 = vpop.permute.xlu0 %3606
        %3608 = vrot.lane.b32.xlu0 %v3576, 83
        %v3609 = vpop.permute.xlu0 %3608
        %3610 = vrot.lane.b32.xlu0 %v3554, 83
        %v3611 = vpop.permute.xlu0 %3610
        %3612 = vrot.lane.b32.xlu0 %v3577, 83
        %v3613 = vpop.permute.xlu0 %3612
        %3614 = vrot.lane.b32.xlu0 %v3555, 83
        %v3615 = vpop.permute.xlu0 %3614
        %3616 = vrot.lane.b32.xlu0 %v3578, 83
        %v3617 = vpop.permute.xlu0 %3616
        %3618 = vrot.lane.b32.xlu0 %v3556, 83
        %v3619 = vpop.permute.xlu0 %3618
        %3620 = vrot.lane.b32.xlu0 %v3579, 83
        %v3621 = vpop.permute.xlu0 %3620
        %vm3622 = vcmask 678912
        %v3623 = vsel %vm3622, %v3581, %v3583
        %v3624 = vsel %vm3622, %v3583, %v3585
        %v3625 = vsel %vm3622, %v3585, %v3587
        %v3626 = vsel %vm3622, %v3587, %v3589
        %v3627 = vsel %vm3622, %v3589, %v3591
        %v3628 = vsel %vm3622, %v3591, %v3593
        %v3629 = vsel %vm3622, %v3593, %v3595
        %v3630 = vsel %vm3622, %v3595, %v3597
        %v3631 = vsel %vm3622, %v3597, %v3599
        %v3632 = vsel %vm3622, %v3599, %v3601
        %v3633 = vsel %vm3622, %v3601, %v3603
        %v3634 = vsel %vm3622, %v3603, %v3605
        %v3635 = vsel %vm3622, %v3605, %v3607
        %v3636 = vsel %vm3622, %v3607, %v3609
        %v3637 = vsel %vm3622, %v3609, %v3611
        %v3638 = vsel %vm3622, %v3611, %v3613
        %v3639 = vsel %vm3622, %v3613, %v3615
        %v3640 = vsel %vm3622, %v3615, %v3617
        %v3641 = vsel %vm3622, %v3617, %v3619
        %v3642 = vsel %vm3622, %v3619, %v3621
        %3664 = vst [vmem:[#allocation2 + $0x7e0] sm:$0xf0] %v3623
        %3665 = vst [vmem:[#allocation2 + $0x7e8] sm:$0xf0] %v3624
        %3666 = vst [vmem:[#allocation2 + $0x7f0] sm:$0xf0] %v3625
        %3667 = vst [vmem:[#allocation2 + $0x7f8] sm:$0xf0] %v3626
        %3668 = vst [vmem:[#allocation2 + $0x800] sm:$0xf0] %v3627
        %3669 = vst [vmem:[#allocation2 + $0x808] sm:$0xf0] %v3628
        %3670 = vst [vmem:[#allocation2 + $0x810] sm:$0xf0] %v3629
        %3671 = vst [vmem:[#allocation2 + $0x818] sm:$0xf0] %v3630
        %3672 = vst [vmem:[#allocation2 + $0x820] sm:$0xf0] %v3631
        %3673 = vst [vmem:[#allocation2 + $0x828] sm:$0xf0] %v3632
        %3674 = vst [vmem:[#allocation2 + $0x830] sm:$0xf0] %v3633
        %3675 = vst [vmem:[#allocation2 + $0x838] sm:$0xf0] %v3634
        %3676 = vst [vmem:[#allocation2 + $0x840] sm:$0xf0] %v3635
        %3677 = vst [vmem:[#allocation2 + $0x848] sm:$0xf0] %v3636
        %3678 = vst [vmem:[#allocation2 + $0x850] sm:$0xf0] %v3637
        %3679 = vst [vmem:[#allocation2 + $0x858] sm:$0xf0] %v3638
        %3680 = vst [vmem:[#allocation2 + $0x860] sm:$0xf0] %v3639
        %3681 = vst [vmem:[#allocation2 + $0x868] sm:$0xf0] %v3640
        %3682 = vst [vmem:[#allocation2 + $0x870] sm:$0xf0] %v3641
        %3683 = vst [vmem:[#allocation2 + $0x878] sm:$0xf0] %v3642
        %3684 = vst.msk [vmem:[#allocation2 + $0x880] sm:$0xf0] %vm373, %v3621
        %v3685 = vld [vmem:[%s148 + $0x14] sm:$0xff]
        %v3686 = vld [vmem:[%s148 + $0x1c] sm:$0xff]
        %v3687 = vld [vmem:[%s148 + $0x24] sm:$0xff]
        %v3688 = vld [vmem:[%s148 + $0x2c] sm:$0xff]
        %v3689 = vld [vmem:[%s148 + $0x34] sm:$0xff]
        %v3690 = vld [vmem:[%s148 + $0x3c] sm:$0xff]
        %v3691 = vld [vmem:[%s148 + $0x44] sm:$0xff]
        %v3692 = vld [vmem:[%s148 + $0x4c] sm:$0xff]
        %v3693 = vld [vmem:[%s148 + $0x54] sm:$0xff]
        %v3694 = vld [vmem:[%s148 + $0x5c] sm:$0xff]
        %v3695 = vld [vmem:[%s148 + $0x64] sm:$0xf]
        %v3707 = vcombine.high %v3685, %v3685
        %v3708 = vcombine.high %v3686, %v3686
        %v3709 = vcombine.high %v3687, %v3687
        %v3710 = vcombine.high %v3688, %v3688
        %v3711 = vcombine.high %v3689, %v3689
        %v3712 = vcombine.high %v3690, %v3690
        %v3713 = vcombine.high %v3691, %v3691
        %v3714 = vcombine.high %v3692, %v3692
        %v3715 = vcombine.high %v3693, %v3693
        %v3716 = vcombine.high %v3694, %v3694
        %3717 = vrot.lane.b32.xlu0 %v3685, 82
        %v3718 = vpop.permute.xlu0 %3717
        %3719 = vrot.lane.b32.xlu0 %v3707, 82
        %v3720 = vpop.permute.xlu0 %3719
        %3721 = vrot.lane.b32.xlu0 %v3686, 82
        %v3722 = vpop.permute.xlu0 %3721
        %3723 = vrot.lane.b32.xlu0 %v3708, 82
        %v3724 = vpop.permute.xlu0 %3723
        %3725 = vrot.lane.b32.xlu0 %v3687, 82
        %v3726 = vpop.permute.xlu0 %3725
        %3727 = vrot.lane.b32.xlu0 %v3709, 82
        %v3728 = vpop.permute.xlu0 %3727
        %3729 = vrot.lane.b32.xlu0 %v3688, 82
        %v3730 = vpop.permute.xlu0 %3729
        %3731 = vrot.lane.b32.xlu0 %v3710, 82
        %v3732 = vpop.permute.xlu0 %3731
        %3733 = vrot.lane.b32.xlu0 %v3689, 82
        %v3734 = vpop.permute.xlu0 %3733
        %3735 = vrot.lane.b32.xlu0 %v3711, 82
        %v3736 = vpop.permute.xlu0 %3735
        %3737 = vrot.lane.b32.xlu0 %v3690, 82
        %v3738 = vpop.permute.xlu0 %3737
        %3739 = vrot.lane.b32.xlu0 %v3712, 82
        %v3740 = vpop.permute.xlu0 %3739
        %3741 = vrot.lane.b32.xlu0 %v3691, 82
        %v3742 = vpop.permute.xlu0 %3741
        %3743 = vrot.lane.b32.xlu0 %v3713, 82
        %v3744 = vpop.permute.xlu0 %3743
        %3745 = vrot.lane.b32.xlu0 %v3692, 82
        %v3746 = vpop.permute.xlu0 %3745
        %3747 = vrot.lane.b32.xlu0 %v3714, 82
        %v3748 = vpop.permute.xlu0 %3747
        %3749 = vrot.lane.b32.xlu0 %v3693, 82
        %v3750 = vpop.permute.xlu0 %3749
        %3751 = vrot.lane.b32.xlu0 %v3715, 82
        %v3752 = vpop.permute.xlu0 %3751
        %3753 = vrot.lane.b32.xlu0 %v3694, 82
        %v3754 = vpop.permute.xlu0 %3753
        %3755 = vrot.lane.b32.xlu0 %v3716, 82
        %v3756 = vpop.permute.xlu0 %3755
        %3757 = vrot.lane.b32.xlu0 %v3695, 82
        %v3758 = vpop.permute.xlu0 %3757
        %vm3759 = vcmask 670720
        %v3760 = vsel %vm3759, %v3718, %v3720
        %v3761 = vsel %vm3759, %v3720, %v3722
        %v3762 = vsel %vm3759, %v3722, %v3724
        %v3763 = vsel %vm3759, %v3724, %v3726
        %v3764 = vsel %vm3759, %v3726, %v3728
        %v3765 = vsel %vm3759, %v3728, %v3730
        %v3766 = vsel %vm3759, %v3730, %v3732
        %v3767 = vsel %vm3759, %v3732, %v3734
        %v3768 = vsel %vm3759, %v3734, %v3736
        %v3769 = vsel %vm3759, %v3736, %v3738
        %v3770 = vsel %vm3759, %v3738, %v3740
        %v3771 = vsel %vm3759, %v3740, %v3742
        %v3772 = vsel %vm3759, %v3742, %v3744
        %v3773 = vsel %vm3759, %v3744, %v3746
        %v3774 = vsel %vm3759, %v3746, %v3748
        %v3775 = vsel %vm3759, %v3748, %v3750
        %v3776 = vsel %vm3759, %v3750, %v3752
        %v3777 = vsel %vm3759, %v3752, %v3754
        %v3778 = vsel %vm3759, %v3754, %v3756
        %v3779 = vsel %vm3759, %v3756, %v3758
        %3801 = vst [vmem:[#allocation2 + $0x888] sm:$0xf] %v3760
        %3802 = vst [vmem:[#allocation2 + $0x890] sm:$0xf] %v3761
        %3803 = vst [vmem:[#allocation2 + $0x898] sm:$0xf] %v3762
        %3804 = vst [vmem:[#allocation2 + $0x8a0] sm:$0xf] %v3763
        %3805 = vst [vmem:[#allocation2 + $0x8a8] sm:$0xf] %v3764
        %3806 = vst [vmem:[#allocation2 + $0x8b0] sm:$0xf] %v3765
        %3807 = vst [vmem:[#allocation2 + $0x8b8] sm:$0xf] %v3766
        %3808 = vst [vmem:[#allocation2 + $0x8c0] sm:$0xf] %v3767
        %3809 = vst [vmem:[#allocation2 + $0x8c8] sm:$0xf] %v3768
        %3810 = vst [vmem:[#allocation2 + $0x8d0] sm:$0xf] %v3769
        %3811 = vst [vmem:[#allocation2 + $0x8d8] sm:$0xf] %v3770
        %3812 = vst [vmem:[#allocation2 + $0x8e0] sm:$0xf] %v3771
        %3813 = vst [vmem:[#allocation2 + $0x8e8] sm:$0xf] %v3772
        %3814 = vst [vmem:[#allocation2 + $0x8f0] sm:$0xf] %v3773
        %3815 = vst [vmem:[#allocation2 + $0x8f8] sm:$0xf] %v3774
        %3816 = vst [vmem:[#allocation2 + $0x900] sm:$0xf] %v3775
        %3817 = vst [vmem:[#allocation2 + $0x908] sm:$0xf] %v3776
        %3818 = vst [vmem:[#allocation2 + $0x910] sm:$0xf] %v3777
        %3819 = vst [vmem:[#allocation2 + $0x918] sm:$0xf] %v3778
        %3820 = vst [vmem:[#allocation2 + $0x920] sm:$0xf] %v3779
        %3821 = vst.msk [vmem:[#allocation2 + $0x928] sm:$0xf] %vm234, %v3758
        %v3822 = vld [vmem:[#allocation6] sm:$0xff]
        %v3823 = vld [vmem:[#allocation2] sm:$0xff]
        %v3824 = vld [vmem:[#allocation2 + $0x8] sm:$0xff]
        %v3825 = vld [vmem:[#allocation2 + $0x10] sm:$0xff]
        %v3826 = vld [vmem:[#allocation2 + $0x18] sm:$0xff]
        %v3827 = vld [vmem:[#allocation2 + $0x20] sm:$0xff]
        %v3828 = vld [vmem:[#allocation2 + $0x28] sm:$0xff]
        %v3829 = vld [vmem:[#allocation2 + $0x30] sm:$0xff]
        %v3830 = vld [vmem:[#allocation2 + $0x38] sm:$0xff]
        %v3831 = vld [vmem:[#allocation2 + $0x40] sm:$0xff]
        %v3832 = vld [vmem:[#allocation2 + $0x48] sm:$0xff]
        %v3833 = vld [vmem:[#allocation2 + $0x50] sm:$0xff]
        %v3834 = vld [vmem:[#allocation2 + $0x58] sm:$0xff]
        %v3835 = vld [vmem:[#allocation2 + $0x60] sm:$0xff]
        %v3836 = vld [vmem:[#allocation2 + $0x68] sm:$0xff]
        %v3837 = vld [vmem:[#allocation2 + $0x70] sm:$0xff]
        %v3838 = vld [vmem:[#allocation2 + $0x78] sm:$0xff]
        %v3839 = vld [vmem:[#allocation2 + $0x80] sm:$0xff]
        %v3840 = vld [vmem:[#allocation2 + $0x88] sm:$0xff]
        %v3841 = vld [vmem:[#allocation2 + $0x90] sm:$0xff]
        %v3842 = vld [vmem:[#allocation2 + $0x98] sm:$0xff]
        %v3843 = vld [vmem:[#allocation2 + $0xa0] sm:$0xff]
        %v3844 = vld [vmem:[#allocation2 + $0xa8] sm:$0xff]
        %v3845 = vld [vmem:[#allocation2 + $0xb0] sm:$0xff]
        %v3846 = vld [vmem:[#allocation2 + $0xb8] sm:$0xff]
        %v3847 = vld [vmem:[#allocation2 + $0xc0] sm:$0xff]
        %v3848 = vld [vmem:[#allocation2 + $0xc8] sm:$0xff]
        %v3849 = vld [vmem:[#allocation2 + $0xd0] sm:$0xff]
        %v3850 = vld [vmem:[#allocation2 + $0xd8] sm:$0xff]
        %v3851 = vld [vmem:[#allocation2 + $0xe0] sm:$0xff]
        %v3852 = vld [vmem:[#allocation2 + $0xe8] sm:$0xff]
        %v3853 = vld [vmem:[#allocation2 + $0xf0] sm:$0xff]
        %v3854 = vld [vmem:[#allocation2 + $0xf8] sm:$0xff]
        %v3855 = vld [vmem:[#allocation2 + $0x100] sm:$0xff]
        %v3856 = vld [vmem:[#allocation2 + $0x108] sm:$0xff]
        %v3857 = vld [vmem:[#allocation2 + $0x110] sm:$0xff]
        %v3858 = vld [vmem:[#allocation2 + $0x118] sm:$0xff]
        %v3859 = vld [vmem:[#allocation2 + $0x120] sm:$0xff]
        %v3860 = vld [vmem:[#allocation2 + $0x128] sm:$0xff]
        %v3861 = vld [vmem:[#allocation2 + $0x130] sm:$0xff]
        %v3862 = vld [vmem:[#allocation2 + $0x138] sm:$0xff]
        %v3863 = vld [vmem:[#allocation2 + $0x140] sm:$0xff]
        %v3864 = vld [vmem:[#allocation2 + $0x148] sm:$0xff]
        %v3865 = vld [vmem:[#allocation2 + $0x150] sm:$0xff]
        %v3866 = vld [vmem:[#allocation2 + $0x158] sm:$0xff]
        %v3867 = vld [vmem:[#allocation2 + $0x160] sm:$0xff]
        %v3868 = vld [vmem:[#allocation2 + $0x168] sm:$0xff]
        %v3869 = vld [vmem:[#allocation2 + $0x170] sm:$0xff]
        %v3870 = vld [vmem:[#allocation2 + $0x178] sm:$0xff]
        %v3871 = vld [vmem:[#allocation2 + $0x180] sm:$0xff]
        %v3872 = vld [vmem:[#allocation2 + $0x188] sm:$0xff]
        %v3873 = vld [vmem:[#allocation2 + $0x190] sm:$0xff]
        %v3874 = vld [vmem:[#allocation2 + $0x198] sm:$0xff]
        %v3875 = vld [vmem:[#allocation2 + $0x1a0] sm:$0xff]
        %v3876 = vld [vmem:[#allocation2 + $0x1a8] sm:$0xff]
        %v3877 = vld [vmem:[#allocation2 + $0x1b0] sm:$0xff]
        %v3878 = vld [vmem:[#allocation2 + $0x1b8] sm:$0xff]
        %v3879 = vld [vmem:[#allocation2 + $0x1c0] sm:$0xff]
        %v3880 = vld [vmem:[#allocation2 + $0x1c8] sm:$0xff]
        %v3881 = vld [vmem:[#allocation2 + $0x1d0] sm:$0xff]
        %v3882 = vld [vmem:[#allocation2 + $0x1d8] sm:$0xff]
        %v3883 = vld [vmem:[#allocation2 + $0x1e0] sm:$0xff]
        %v3884 = vld [vmem:[#allocation2 + $0x1e8] sm:$0xff]
        %v3885 = vld [vmem:[#allocation2 + $0x1f0] sm:$0xff]
        %v3886 = vld [vmem:[#allocation2 + $0x1f8] sm:$0xff]
        %v3887 = vld [vmem:[#allocation2 + $0x200] sm:$0xff]
        %v3888 = vld [vmem:[#allocation2 + $0x208] sm:$0xff]
        %v3889 = vld [vmem:[#allocation2 + $0x210] sm:$0xff]
        %v3890 = vld [vmem:[#allocation2 + $0x218] sm:$0xff]
        %v3891 = vld [vmem:[#allocation2 + $0x220] sm:$0xff]
        %v3892 = vld [vmem:[#allocation2 + $0x228] sm:$0xff]
        %v3893 = vld [vmem:[#allocation2 + $0x230] sm:$0xff]
        %v3894 = vld [vmem:[#allocation2 + $0x238] sm:$0xff]
        %v3895 = vld [vmem:[#allocation2 + $0x240] sm:$0xff]
        %v3896 = vld [vmem:[#allocation2 + $0x248] sm:$0xff]
        %v3897 = vld [vmem:[#allocation2 + $0x250] sm:$0xff]
        %v3898 = vld [vmem:[#allocation2 + $0x258] sm:$0xff]
        %v3899 = vld [vmem:[#allocation2 + $0x260] sm:$0xff]
        %v3900 = vld [vmem:[#allocation2 + $0x268] sm:$0xff]
        %v3901 = vld [vmem:[#allocation2 + $0x270] sm:$0xff]
        %v3902 = vld [vmem:[#allocation2 + $0x278] sm:$0xff]
        %v3903 = vld [vmem:[#allocation2 + $0x280] sm:$0xff]
        %v3904 = vld [vmem:[#allocation2 + $0x288] sm:$0xff]
        %v3905 = vld [vmem:[#allocation2 + $0x290] sm:$0xff]
        %v3906 = vld [vmem:[#allocation2 + $0x298] sm:$0xff]
        %v3907 = vld [vmem:[#allocation2 + $0x2a0] sm:$0xff]
        %v3908 = vld [vmem:[#allocation2 + $0x2a8] sm:$0xff]
        %v3909 = vld [vmem:[#allocation2 + $0x2b0] sm:$0xff]
        %v3910 = vld [vmem:[#allocation2 + $0x2b8] sm:$0xff]
        %v3911 = vld [vmem:[#allocation2 + $0x2c0] sm:$0xff]
        %v3912 = vld [vmem:[#allocation2 + $0x2c8] sm:$0xff]
        %v3913 = vld [vmem:[#allocation2 + $0x2d0] sm:$0xff]
        %v3914 = vld [vmem:[#allocation2 + $0x2d8] sm:$0xff]
        %v3915 = vld [vmem:[#allocation2 + $0x2e0] sm:$0xff]
        %v3916 = vld [vmem:[#allocation2 + $0x2e8] sm:$0xff]
        %v3917 = vld [vmem:[#allocation2 + $0x2f0] sm:$0xff]
        %v3918 = vld [vmem:[#allocation2 + $0x2f8] sm:$0xff]
        %v3919 = vld [vmem:[#allocation2 + $0x300] sm:$0xff]
        %v3920 = vld [vmem:[#allocation2 + $0x308] sm:$0xff]
        %v3921 = vld [vmem:[#allocation2 + $0x310] sm:$0xff]
        %v3922 = vld [vmem:[#allocation2 + $0x318] sm:$0xff]
        %v3923 = vld [vmem:[#allocation2 + $0x320] sm:$0xff]
        %v3924 = vld [vmem:[#allocation2 + $0x328] sm:$0xff]
        %v3925 = vld [vmem:[#allocation2 + $0x330] sm:$0xff]
        %v3926 = vld [vmem:[#allocation2 + $0x338] sm:$0xff]
        %v3927 = vld [vmem:[#allocation2 + $0x340] sm:$0xff]
        %v3928 = vld [vmem:[#allocation2 + $0x348] sm:$0xff]
        %v3929 = vld [vmem:[#allocation2 + $0x350] sm:$0xff]
        %v3930 = vld [vmem:[#allocation2 + $0x358] sm:$0xff]
        %v3931 = vld [vmem:[#allocation2 + $0x360] sm:$0xff]
        %v3932 = vld [vmem:[#allocation2 + $0x368] sm:$0xff]
        %v3933 = vld [vmem:[#allocation2 + $0x370] sm:$0xff]
        %v3934 = vld [vmem:[#allocation2 + $0x378] sm:$0xff]
        %v3935 = vld [vmem:[#allocation2 + $0x380] sm:$0xff]
        %v3936 = vld [vmem:[#allocation2 + $0x388] sm:$0xff]
        %v3937 = vld [vmem:[#allocation2 + $0x390] sm:$0xff]
        %v3938 = vld [vmem:[#allocation2 + $0x398] sm:$0xff]
        %v3939 = vld [vmem:[#allocation2 + $0x3a0] sm:$0xff]
        %v3940 = vld [vmem:[#allocation2 + $0x3a8] sm:$0xff]
        %v3941 = vld [vmem:[#allocation2 + $0x3b0] sm:$0xff]
        %v3942 = vld [vmem:[#allocation2 + $0x3b8] sm:$0xff]
        %v3943 = vld [vmem:[#allocation2 + $0x3c0] sm:$0xff]
        %v3944 = vld [vmem:[#allocation2 + $0x3c8] sm:$0xff]
        %v3945 = vld [vmem:[#allocation2 + $0x3d0] sm:$0xff]
        %v3946 = vld [vmem:[#allocation2 + $0x3d8] sm:$0xff]
        %v3947 = vld [vmem:[#allocation2 + $0x3e0] sm:$0xff]
        %v3948 = vld [vmem:[#allocation2 + $0x3e8] sm:$0xff]
        %v3949 = vld [vmem:[#allocation2 + $0x3f0] sm:$0xff]
        %v3950 = vld [vmem:[#allocation2 + $0x3f8] sm:$0xff]
        %v3951 = vld [vmem:[#allocation2 + $0x400] sm:$0xff]
        %v3952 = vld [vmem:[#allocation2 + $0x408] sm:$0xff]
        %v3953 = vld [vmem:[#allocation2 + $0x410] sm:$0xff]
        %v3954 = vld [vmem:[#allocation2 + $0x418] sm:$0xff]
        %v3955 = vld [vmem:[#allocation2 + $0x420] sm:$0xff]
        %v3956 = vld [vmem:[#allocation2 + $0x428] sm:$0xff]
        %v3957 = vld [vmem:[#allocation2 + $0x430] sm:$0xff]
        %v3958 = vld [vmem:[#allocation2 + $0x438] sm:$0xff]
        %v3959 = vld [vmem:[#allocation2 + $0x440] sm:$0xff]
        %v3960 = vld [vmem:[#allocation2 + $0x448] sm:$0xff]
        %v3961 = vld [vmem:[#allocation2 + $0x450] sm:$0xff]
        %v3962 = vld [vmem:[#allocation2 + $0x458] sm:$0xff]
        %v3963 = vld [vmem:[#allocation2 + $0x460] sm:$0xff]
        %v3964 = vld [vmem:[#allocation2 + $0x468] sm:$0xff]
        %v3965 = vld [vmem:[#allocation2 + $0x470] sm:$0xff]
        %v3966 = vld [vmem:[#allocation2 + $0x478] sm:$0xff]
        %v3967 = vld [vmem:[#allocation2 + $0x480] sm:$0xff]
        %v3968 = vld [vmem:[#allocation2 + $0x488] sm:$0xff]
        %v3969 = vld [vmem:[#allocation2 + $0x490] sm:$0xff]
        %v3970 = vld [vmem:[#allocation2 + $0x498] sm:$0xff]
        %v3971 = vld [vmem:[#allocation2 + $0x4a0] sm:$0xff]
        %v3972 = vld [vmem:[#allocation2 + $0x4a8] sm:$0xff]
        %v3973 = vld [vmem:[#allocation2 + $0x4b0] sm:$0xff]
        %v3974 = vld [vmem:[#allocation2 + $0x4b8] sm:$0xff]
        %v3975 = vld [vmem:[#allocation2 + $0x4c0] sm:$0xff]
        %v3976 = vld [vmem:[#allocation2 + $0x4c8] sm:$0xff]
        %v3977 = vld [vmem:[#allocation2 + $0x4d0] sm:$0xff]
        %v3978 = vld [vmem:[#allocation2 + $0x4d8] sm:$0xff]
        %v3979 = vld [vmem:[#allocation2 + $0x4e0] sm:$0xff]
        %v3980 = vld [vmem:[#allocation2 + $0x4e8] sm:$0xff]
        %v3981 = vld [vmem:[#allocation2 + $0x4f0] sm:$0xff]
        %v3982 = vld [vmem:[#allocation2 + $0x4f8] sm:$0xff]
        %v3983 = vld [vmem:[#allocation2 + $0x500] sm:$0xff]
        %v3984 = vld [vmem:[#allocation2 + $0x508] sm:$0xff]
        %v3985 = vld [vmem:[#allocation2 + $0x510] sm:$0xff]
        %v3986 = vld [vmem:[#allocation2 + $0x518] sm:$0xff]
        %v3987 = vld [vmem:[#allocation2 + $0x520] sm:$0xff]
        %v3988 = vld [vmem:[#allocation2 + $0x528] sm:$0xff]
        %v3989 = vld [vmem:[#allocation2 + $0x530] sm:$0xff]
        %v3990 = vld [vmem:[#allocation2 + $0x538] sm:$0xff]
        %v3991 = vld [vmem:[#allocation2 + $0x540] sm:$0xff]
        %v3992 = vld [vmem:[#allocation2 + $0x548] sm:$0xff]
        %v3993 = vld [vmem:[#allocation2 + $0x550] sm:$0xff]
        %v3994 = vld [vmem:[#allocation2 + $0x558] sm:$0xff]
        %v3995 = vld [vmem:[#allocation2 + $0x560] sm:$0xff]
        %v3996 = vld [vmem:[#allocation2 + $0x568] sm:$0xff]
        %v3997 = vld [vmem:[#allocation2 + $0x570] sm:$0xff]
        %v3998 = vld [vmem:[#allocation2 + $0x578] sm:$0xff]
        %v3999 = vld [vmem:[#allocation2 + $0x580] sm:$0xff]
        %v4000 = vld [vmem:[#allocation2 + $0x588] sm:$0xff]
        %v4001 = vld [vmem:[#allocation2 + $0x590] sm:$0xff]
        %v4002 = vld [vmem:[#allocation2 + $0x598] sm:$0xff]
        %v4003 = vld [vmem:[#allocation2 + $0x5a0] sm:$0xff]
        %v4004 = vld [vmem:[#allocation2 + $0x5a8] sm:$0xff]
        %v4005 = vld [vmem:[#allocation2 + $0x5b0] sm:$0xff]
        %v4006 = vld [vmem:[#allocation2 + $0x5b8] sm:$0xff]
        %v4007 = vld [vmem:[#allocation2 + $0x5c0] sm:$0xff]
        %v4008 = vld [vmem:[#allocation2 + $0x5c8] sm:$0xff]
        %v4009 = vld [vmem:[#allocation2 + $0x5d0] sm:$0xff]
        %v4010 = vld [vmem:[#allocation2 + $0x5d8] sm:$0xff]
        %v4011 = vld [vmem:[#allocation2 + $0x5e0] sm:$0xff]
        %v4012 = vld [vmem:[#allocation2 + $0x5e8] sm:$0xff]
        %v4013 = vld [vmem:[#allocation2 + $0x5f0] sm:$0xff]
        %v4014 = vld [vmem:[#allocation2 + $0x5f8] sm:$0xff]
        %v4015 = vld [vmem:[#allocation2 + $0x600] sm:$0xff]
        %v4016 = vld [vmem:[#allocation2 + $0x608] sm:$0xff]
        %v4017 = vld [vmem:[#allocation2 + $0x610] sm:$0xff]
        %v4018 = vld [vmem:[#allocation2 + $0x618] sm:$0xff]
        %v4019 = vld [vmem:[#allocation2 + $0x620] sm:$0xff]
        %v4020 = vld [vmem:[#allocation2 + $0x628] sm:$0xff]
        %v4021 = vld [vmem:[#allocation2 + $0x630] sm:$0xff]
        %v4022 = vld [vmem:[#allocation2 + $0x638] sm:$0xff]
        %v4023 = vld [vmem:[#allocation2 + $0x640] sm:$0xff]
        %v4024 = vld [vmem:[#allocation2 + $0x648] sm:$0xff]
        %v4025 = vld [vmem:[#allocation2 + $0x650] sm:$0xff]
        %v4026 = vld [vmem:[#allocation2 + $0x658] sm:$0xff]
        %v4027 = vld [vmem:[#allocation2 + $0x660] sm:$0xff]
        %v4028 = vld [vmem:[#allocation2 + $0x668] sm:$0xff]
        %v4029 = vld [vmem:[#allocation2 + $0x670] sm:$0xff]
        %v4030 = vld [vmem:[#allocation2 + $0x678] sm:$0xff]
        %v4031 = vld [vmem:[#allocation2 + $0x680] sm:$0xff]
        %v4032 = vld [vmem:[#allocation2 + $0x688] sm:$0xff]
        %v4033 = vld [vmem:[#allocation2 + $0x690] sm:$0xff]
        %v4034 = vld [vmem:[#allocation2 + $0x698] sm:$0xff]
        %v4035 = vld [vmem:[#allocation2 + $0x6a0] sm:$0xff]
        %v4036 = vld [vmem:[#allocation2 + $0x6a8] sm:$0xff]
        %v4037 = vld [vmem:[#allocation2 + $0x6b0] sm:$0xff]
        %v4038 = vld [vmem:[#allocation2 + $0x6b8] sm:$0xff]
        %v4039 = vld [vmem:[#allocation2 + $0x6c0] sm:$0xff]
        %v4040 = vld [vmem:[#allocation2 + $0x6c8] sm:$0xff]
        %v4041 = vld [vmem:[#allocation2 + $0x6d0] sm:$0xff]
        %v4042 = vld [vmem:[#allocation2 + $0x6d8] sm:$0xff]
        %v4043 = vld [vmem:[#allocation2 + $0x6e0] sm:$0xff]
        %v4044 = vld [vmem:[#allocation2 + $0x6e8] sm:$0xff]
        %v4045 = vld [vmem:[#allocation2 + $0x6f0] sm:$0xff]
        %v4046 = vld [vmem:[#allocation2 + $0x6f8] sm:$0xff]
        %v4047 = vld [vmem:[#allocation2 + $0x700] sm:$0xff]
        %v4048 = vld [vmem:[#allocation2 + $0x708] sm:$0xff]
        %v4049 = vld [vmem:[#allocation2 + $0x710] sm:$0xff]
        %v4050 = vld [vmem:[#allocation2 + $0x718] sm:$0xff]
        %v4051 = vld [vmem:[#allocation2 + $0x720] sm:$0xff]
        %v4052 = vld [vmem:[#allocation2 + $0x728] sm:$0xff]
        %v4053 = vld [vmem:[#allocation2 + $0x730] sm:$0xff]
        %v4054 = vld [vmem:[#allocation2 + $0x738] sm:$0xff]
        %v4055 = vld [vmem:[#allocation2 + $0x740] sm:$0xff]
        %v4056 = vld [vmem:[#allocation2 + $0x748] sm:$0xff]
        %v4057 = vld [vmem:[#allocation2 + $0x750] sm:$0xff]
        %v4058 = vld [vmem:[#allocation2 + $0x758] sm:$0xff]
        %v4059 = vld [vmem:[#allocation2 + $0x760] sm:$0xff]
        %v4060 = vld [vmem:[#allocation2 + $0x768] sm:$0xff]
        %v4061 = vld [vmem:[#allocation2 + $0x770] sm:$0xff]
        %v4062 = vld [vmem:[#allocation2 + $0x778] sm:$0xff]
        %v4063 = vld [vmem:[#allocation2 + $0x780] sm:$0xff]
        %v4064 = vld [vmem:[#allocation2 + $0x788] sm:$0xff]
        %v4065 = vld [vmem:[#allocation2 + $0x790] sm:$0xff]
        %v4066 = vld [vmem:[#allocation2 + $0x798] sm:$0xff]
        %v4067 = vld [vmem:[#allocation2 + $0x7a0] sm:$0xff]
        %v4068 = vld [vmem:[#allocation2 + $0x7a8] sm:$0xff]
        %v4069 = vld [vmem:[#allocation2 + $0x7b0] sm:$0xff]
        %v4070 = vld [vmem:[#allocation2 + $0x7b8] sm:$0xff]
        %v4071 = vld [vmem:[#allocation2 + $0x7c0] sm:$0xff]
        %v4072 = vld [vmem:[#allocation2 + $0x7c8] sm:$0xff]
        %v4073 = vld [vmem:[#allocation2 + $0x7d0] sm:$0xff]
        %v4074 = vld [vmem:[#allocation2 + $0x7d8] sm:$0xff]
        %v4075 = vld [vmem:[#allocation2 + $0x7e0] sm:$0xff]
        %v4076 = vld [vmem:[#allocation2 + $0x7e8] sm:$0xff]
        %v4077 = vld [vmem:[#allocation2 + $0x7f0] sm:$0xff]
        %v4078 = vld [vmem:[#allocation2 + $0x7f8] sm:$0xff]
        %v4079 = vld [vmem:[#allocation2 + $0x800] sm:$0xff]
        %v4080 = vld [vmem:[#allocation2 + $0x808] sm:$0xff]
        %v4081 = vld [vmem:[#allocation2 + $0x810] sm:$0xff]
        %v4082 = vld [vmem:[#allocation2 + $0x818] sm:$0xff]
        %v4083 = vld [vmem:[#allocation2 + $0x820] sm:$0xff]
        %v4084 = vld [vmem:[#allocation2 + $0x828] sm:$0xff]
        %v4085 = vld [vmem:[#allocation2 + $0x830] sm:$0xff]
        %v4086 = vld [vmem:[#allocation2 + $0x838] sm:$0xff]
        %v4087 = vld [vmem:[#allocation2 + $0x840] sm:$0xff]
        %v4088 = vld [vmem:[#allocation2 + $0x848] sm:$0xff]
        %v4089 = vld [vmem:[#allocation2 + $0x850] sm:$0xff]
        %v4090 = vld [vmem:[#allocation2 + $0x858] sm:$0xff]
        %v4091 = vld [vmem:[#allocation2 + $0x860] sm:$0xff]
        %v4092 = vld [vmem:[#allocation2 + $0x868] sm:$0xff]
        %v4093 = vld [vmem:[#allocation2 + $0x870] sm:$0xff]
        %v4094 = vld [vmem:[#allocation2 + $0x878] sm:$0xff]
        %v4095 = vld [vmem:[#allocation2 + $0x880] sm:$0xff]
        %v4096 = vld [vmem:[#allocation2 + $0x888] sm:$0xf]
        %v4097 = vld [vmem:[#allocation2 + $0x890] sm:$0xf]
        %v4098 = vld [vmem:[#allocation2 + $0x898] sm:$0xf]
        %v4099 = vld [vmem:[#allocation2 + $0x8a0] sm:$0xf]
        %v4100 = vld [vmem:[#allocation2 + $0x8a8] sm:$0xf]
        %v4101 = vld [vmem:[#allocation2 + $0x8b0] sm:$0xf]
        %v4102 = vld [vmem:[#allocation2 + $0x8b8] sm:$0xf]
        %v4103 = vld [vmem:[#allocation2 + $0x8c0] sm:$0xf]
        %v4104 = vld [vmem:[#allocation2 + $0x8c8] sm:$0xf]
        %v4105 = vld [vmem:[#allocation2 + $0x8d0] sm:$0xf]
        %v4106 = vld [vmem:[#allocation2 + $0x8d8] sm:$0xf]
        %v4107 = vld [vmem:[#allocation2 + $0x8e0] sm:$0xf]
        %v4108 = vld [vmem:[#allocation2 + $0x8e8] sm:$0xf]
        %v4109 = vld [vmem:[#allocation2 + $0x8f0] sm:$0xf]
        %v4110 = vld [vmem:[#allocation2 + $0x8f8] sm:$0xf]
        %v4111 = vld [vmem:[#allocation2 + $0x900] sm:$0xf]
        %v4112 = vld [vmem:[#allocation2 + $0x908] sm:$0xf]
        %v4113 = vld [vmem:[#allocation2 + $0x910] sm:$0xf]
        %v4114 = vld [vmem:[#allocation2 + $0x918] sm:$0xf]
        %v4115 = vld [vmem:[#allocation2 + $0x920] sm:$0xf]
        %v4116 = vld [vmem:[#allocation2 + $0x928] sm:$0xf]
        %v4118 = vsel %vm862, %v3822, 0
        %vm4120 = vcmask 1043456
        %v4122 = vsel %vm4120, %v4096, 0
        %v4125 = vsel %vm4120, %v4097, 0
        %v4128 = vsel %vm4120, %v4098, 0
        %v4131 = vsel %vm4120, %v4099, 0
        %v4134 = vsel %vm4120, %v4100, 0
        %v4137 = vsel %vm4120, %v4101, 0
        %v4140 = vsel %vm4120, %v4102, 0
        %v4143 = vsel %vm4120, %v4103, 0
        %v4146 = vsel %vm4120, %v4104, 0
        %v4149 = vsel %vm4120, %v4105, 0
        %v4152 = vsel %vm4120, %v4106, 0
        %v4155 = vsel %vm4120, %v4107, 0
        %v4158 = vsel %vm4120, %v4108, 0
        %v4161 = vsel %vm4120, %v4109, 0
        %v4164 = vsel %vm4120, %v4110, 0
        %v4167 = vsel %vm4120, %v4111, 0
        %v4170 = vsel %vm4120, %v4112, 0
        %v4173 = vsel %vm4120, %v4113, 0
        %v4176 = vsel %vm4120, %v4114, 0
        %v4179 = vsel %vm4120, %v4115, 0
        %v4182 = vsel %vm4120, %v4116, 0
        %4184 = vmatprep.subr.mxu0 0.0
        %4185 = vmatpush1.msra.mxu0 0.0
        %4186 = vmatprep.subr.mxu0 0.0
        %4187 = vmatpush1.msra.mxu0 0.0
        %4188 = vmatprep.subr.mxu0 %v4125
        %4189 = vmatpush1.msra.mxu0 %v4122
        %4190 = vmatprep.subr.mxu0 %v4076
        %4191 = vmatpush1.msra.mxu0 %v4075
        %4192 = vmatprep.subr.mxu0 %v4055
        %4193 = vmatpush1.msra.mxu0 %v4054
        %4194 = vmatprep.subr.mxu0 %v4034
        %4195 = vmatpush1.msra.mxu0 %v4033
        %4196 = vmatprep.subr.mxu0 %v4013
        %4197 = vmatpush1.msra.mxu0 %v4012
        %4198 = vmatprep.subr.mxu0 %v3992
        %4199 = vmatpush1.msra.mxu0 %v3991
        %4200 = vmatprep.subr.mxu0 %v3971
        %4201 = vmatpush1.msra.mxu0 %v3970
        %4202 = vmatprep.subr.mxu0 %v3950
        %4203 = vmatpush1.msra.mxu0 %v3949
        %4204 = vmatprep.subr.mxu0 %v3929
        %4205 = vmatpush1.msra.mxu0 %v3928
        %4206 = vmatprep.subr.mxu0 %v3908
        %4207 = vmatpush1.msra.mxu0 %v3907
        %4208 = vmatprep.subr.mxu0 %v3887
        %4209 = vmatpush1.msra.mxu0 %v3886
        %4210 = vmatprep.subr.mxu0 %v3866
        %4211 = vmatpush1.msra.mxu0 %v3865
        %4212 = vmatprep.subr.mxu0 %v3845
        %4213 = vmatpush1.msra.mxu0 %v3844
        %4214 = vmatprep.subr.mxu0 %v3824
        %4215 = vmatpush1.msra.mxu0 %v3823
        %4216 = vmatprep.subr.mxu0 0.0
        %4217 = vmatpush2.msra.mxu0 0.0
        %4218 = vmatprep.subr.mxu0 0.0
        %4219 = vmatpush2.msra.mxu0 0.0
        %4220 = vmatprep.subr.mxu0 0.0
        %4221 = vmatpush2.msra.mxu0 0.0
        %4222 = vmatprep.subr.mxu0 0.0
        %4223 = vmatpush2.msra.mxu0 0.0
        %4224 = vmatprep.subr.mxu0 0.0
        %4225 = vmatpush2.msra.mxu0 0.0
        %4226 = vmatprep.subr.mxu0 0.0
        %4227 = vmatpush2.msra.mxu0 0.0
        %4228 = vmatprep.subr.mxu0 0.0
        %4229 = vmatpush2.msra.mxu0 0.0
        %4230 = vmatprep.subr.mxu0 0.0
        %4231 = vmatpush2.msra.mxu0 0.0
        %4232 = vmatprep.subr.mxu0 0.0
        %4233 = vmatpush2.msra.mxu0 0.0
        %4234 = vmatprep.subr.mxu0 0.0
        %4235 = vmatpush2.msra.mxu0 0.0
        %4236 = vmatprep.subr.mxu0 0.0
        %4237 = vmatpush2.msra.mxu0 0.0
        %4238 = vmatprep.subr.mxu0 0.0
        %4239 = vmatpush2.msra.mxu0 0.0
        %4240 = vmatprep.subr.mxu0 0.0
        %4241 = vmatpush2.msra.mxu0 0.0
        %4242 = vmatprep.subr.mxu0 0.0
        %4243 = vmatpush2.msra.mxu0 0.0
        %4244 = vmatprep.subr.mxu0 0.0
        %4245 = vmatpush2.msra.mxu0 0.0
        %4246 = vmatprep.subr.mxu0 0.0
        %4247 = vmatpush2.msra.mxu0 0.0
        %4248 = vmatprep.mubr.f32.mxu0 0.0
        %4249 = vmatmul.mubr.f32.gmra.mxu0 %v4118
        %v4250 = vpop.f32.mrf.mxu0
        %v4251 = vadd.f32 0.0, %v4250
        %v4252 = vpop.f32.mrf.mxu0
        %v4253 = vadd.f32 0.0, %v4252
        %4254 = vdwg.mxu0
        %4255 = vmatprep.subr.mxu0 0.0
        %4256 = vmatpush1.msra.mxu0 0.0
        %4257 = vmatprep.subr.mxu0 0.0
        %4258 = vmatpush1.msra.mxu0 0.0
        %4259 = vmatprep.subr.mxu0 %v4131
        %4260 = vmatpush1.msra.mxu0 %v4128
        %4261 = vmatprep.subr.mxu0 %v4078
        %4262 = vmatpush1.msra.mxu0 %v4077
        %4263 = vmatprep.subr.mxu0 %v4057
        %4264 = vmatpush1.msra.mxu0 %v4056
        %4265 = vmatprep.subr.mxu0 %v4036
        %4266 = vmatpush1.msra.mxu0 %v4035
        %4267 = vmatprep.subr.mxu0 %v4015
        %4268 = vmatpush1.msra.mxu0 %v4014
        %4269 = vmatprep.subr.mxu0 %v3994
        %4270 = vmatpush1.msra.mxu0 %v3993
        %4271 = vmatprep.subr.mxu0 %v3973
        %4272 = vmatpush1.msra.mxu0 %v3972
        %4273 = vmatprep.subr.mxu0 %v3952
        %4274 = vmatpush1.msra.mxu0 %v3951
        %4275 = vmatprep.subr.mxu0 %v3931
        %4276 = vmatpush1.msra.mxu0 %v3930
        %4277 = vmatprep.subr.mxu0 %v3910
        %4278 = vmatpush1.msra.mxu0 %v3909
        %4279 = vmatprep.subr.mxu0 %v3889
        %4280 = vmatpush1.msra.mxu0 %v3888
        %4281 = vmatprep.subr.mxu0 %v3868
        %4282 = vmatpush1.msra.mxu0 %v3867
        %4283 = vmatprep.subr.mxu0 %v3847
        %4284 = vmatpush1.msra.mxu0 %v3846
        %4285 = vmatprep.subr.mxu0 %v3826
        %4286 = vmatpush1.msra.mxu0 %v3825
        %4287 = vmatprep.subr.mxu0 0.0
        %4288 = vmatpush2.msra.mxu0 0.0
        %4289 = vmatprep.subr.mxu0 0.0
        %4290 = vmatpush2.msra.mxu0 0.0
        %4291 = vmatprep.subr.mxu0 0.0
        %4292 = vmatpush2.msra.mxu0 0.0
        %4293 = vmatprep.subr.mxu0 0.0
        %4294 = vmatpush2.msra.mxu0 0.0
        %4295 = vmatprep.subr.mxu0 0.0
        %4296 = vmatpush2.msra.mxu0 0.0
        %4297 = vmatprep.subr.mxu0 0.0
        %4298 = vmatpush2.msra.mxu0 0.0
        %4299 = vmatprep.subr.mxu0 0.0
        %4300 = vmatpush2.msra.mxu0 0.0
        %4301 = vmatprep.subr.mxu0 0.0
        %4302 = vmatpush2.msra.mxu0 0.0
        %4303 = vmatprep.subr.mxu0 0.0
        %4304 = vmatpush2.msra.mxu0 0.0
        %4305 = vmatprep.subr.mxu0 0.0
        %4306 = vmatpush2.msra.mxu0 0.0
        %4307 = vmatprep.subr.mxu0 0.0
        %4308 = vmatpush2.msra.mxu0 0.0
        %4309 = vmatprep.subr.mxu0 0.0
        %4310 = vmatpush2.msra.mxu0 0.0
        %4311 = vmatprep.subr.mxu0 0.0
        %4312 = vmatpush2.msra.mxu0 0.0
        %4313 = vmatprep.subr.mxu0 0.0
        %4314 = vmatpush2.msra.mxu0 0.0
        %4315 = vmatprep.subr.mxu0 0.0
        %4316 = vmatpush2.msra.mxu0 0.0
        %4317 = vmatprep.subr.mxu0 0.0
        %4318 = vmatpush2.msra.mxu0 0.0
        %4319 = vmatprep.mubr.f32.mxu0 0.0
        %4320 = vmatmul.mubr.f32.gmra.mxu0 %v4118
        %v4321 = vpop.f32.mrf.mxu0
        %v4322 = vadd.f32 0.0, %v4321
        %v4323 = vpop.f32.mrf.mxu0
        %v4324 = vadd.f32 0.0, %v4323
        %4325 = vdwg.mxu0
        %4326 = vmatprep.subr.mxu0 0.0
        %4327 = vmatpush1.msra.mxu0 0.0
        %4328 = vmatprep.subr.mxu0 0.0
        %4329 = vmatpush1.msra.mxu0 0.0
        %4330 = vmatprep.subr.mxu0 %v4137
        %4331 = vmatpush1.msra.mxu0 %v4134
        %4332 = vmatprep.subr.mxu0 %v4080
        %4333 = vmatpush1.msra.mxu0 %v4079
        %4334 = vmatprep.subr.mxu0 %v4059
        %4335 = vmatpush1.msra.mxu0 %v4058
        %4336 = vmatprep.subr.mxu0 %v4038
        %4337 = vmatpush1.msra.mxu0 %v4037
        %4338 = vmatprep.subr.mxu0 %v4017
        %4339 = vmatpush1.msra.mxu0 %v4016
        %4340 = vmatprep.subr.mxu0 %v3996
        %4341 = vmatpush1.msra.mxu0 %v3995
        %4342 = vmatprep.subr.mxu0 %v3975
        %4343 = vmatpush1.msra.mxu0 %v3974
        %4344 = vmatprep.subr.mxu0 %v3954
        %4345 = vmatpush1.msra.mxu0 %v3953
        %4346 = vmatprep.subr.mxu0 %v3933
        %4347 = vmatpush1.msra.mxu0 %v3932
        %4348 = vmatprep.subr.mxu0 %v3912
        %4349 = vmatpush1.msra.mxu0 %v3911
        %4350 = vmatprep.subr.mxu0 %v3891
        %4351 = vmatpush1.msra.mxu0 %v3890
        %4352 = vmatprep.subr.mxu0 %v3870
        %4353 = vmatpush1.msra.mxu0 %v3869
        %4354 = vmatprep.subr.mxu0 %v3849
        %4355 = vmatpush1.msra.mxu0 %v3848
        %4356 = vmatprep.subr.mxu0 %v3828
        %4357 = vmatpush1.msra.mxu0 %v3827
        %4358 = vmatprep.subr.mxu0 0.0
        %4359 = vmatpush2.msra.mxu0 0.0
        %4360 = vmatprep.subr.mxu0 0.0
        %4361 = vmatpush2.msra.mxu0 0.0
        %4362 = vmatprep.subr.mxu0 0.0
        %4363 = vmatpush2.msra.mxu0 0.0
        %4364 = vmatprep.subr.mxu0 0.0
        %4365 = vmatpush2.msra.mxu0 0.0
        %4366 = vmatprep.subr.mxu0 0.0
        %4367 = vmatpush2.msra.mxu0 0.0
        %4368 = vmatprep.subr.mxu0 0.0
        %4369 = vmatpush2.msra.mxu0 0.0
        %4370 = vmatprep.subr.mxu0 0.0
        %4371 = vmatpush2.msra.mxu0 0.0
        %4372 = vmatprep.subr.mxu0 0.0
        %4373 = vmatpush2.msra.mxu0 0.0
        %4374 = vmatprep.subr.mxu0 0.0
        %4375 = vmatpush2.msra.mxu0 0.0
        %4376 = vmatprep.subr.mxu0 0.0
        %4377 = vmatpush2.msra.mxu0 0.0
        %4378 = vmatprep.subr.mxu0 0.0
        %4379 = vmatpush2.msra.mxu0 0.0
        %4380 = vmatprep.subr.mxu0 0.0
        %4381 = vmatpush2.msra.mxu0 0.0
        %4382 = vmatprep.subr.mxu0 0.0
        %4383 = vmatpush2.msra.mxu0 0.0
        %4384 = vmatprep.subr.mxu0 0.0
        %4385 = vmatpush2.msra.mxu0 0.0
        %4386 = vmatprep.subr.mxu0 0.0
        %4387 = vmatpush2.msra.mxu0 0.0
        %4388 = vmatprep.subr.mxu0 0.0
        %4389 = vmatpush2.msra.mxu0 0.0
        %4390 = vmatprep.mubr.f32.mxu0 0.0
        %4391 = vmatmul.mubr.f32.gmra.mxu0 %v4118
        %v4392 = vpop.f32.mrf.mxu0
        %v4393 = vadd.f32 0.0, %v4392
        %v4394 = vpop.f32.mrf.mxu0
        %v4395 = vadd.f32 0.0, %v4394
        %4396 = vdwg.mxu0
        %4397 = vmatprep.subr.mxu0 0.0
        %4398 = vmatpush1.msra.mxu0 0.0
        %4399 = vmatprep.subr.mxu0 0.0
        %4400 = vmatpush1.msra.mxu0 0.0
        %4401 = vmatprep.subr.mxu0 %v4143
        %4402 = vmatpush1.msra.mxu0 %v4140
        %4403 = vmatprep.subr.mxu0 %v4082
        %4404 = vmatpush1.msra.mxu0 %v4081
        %4405 = vmatprep.subr.mxu0 %v4061
        %4406 = vmatpush1.msra.mxu0 %v4060
        %4407 = vmatprep.subr.mxu0 %v4040
        %4408 = vmatpush1.msra.mxu0 %v4039
        %4409 = vmatprep.subr.mxu0 %v4019
        %4410 = vmatpush1.msra.mxu0 %v4018
        %4411 = vmatprep.subr.mxu0 %v3998
        %4412 = vmatpush1.msra.mxu0 %v3997
        %4413 = vmatprep.subr.mxu0 %v3977
        %4414 = vmatpush1.msra.mxu0 %v3976
        %4415 = vmatprep.subr.mxu0 %v3956
        %4416 = vmatpush1.msra.mxu0 %v3955
        %4417 = vmatprep.subr.mxu0 %v3935
        %4418 = vmatpush1.msra.mxu0 %v3934
        %4419 = vmatprep.subr.mxu0 %v3914
        %4420 = vmatpush1.msra.mxu0 %v3913
        %4421 = vmatprep.subr.mxu0 %v3893
        %4422 = vmatpush1.msra.mxu0 %v3892
        %4423 = vmatprep.subr.mxu0 %v3872
        %4424 = vmatpush1.msra.mxu0 %v3871
        %4425 = vmatprep.subr.mxu0 %v3851
        %4426 = vmatpush1.msra.mxu0 %v3850
        %4427 = vmatprep.subr.mxu0 %v3830
        %4428 = vmatpush1.msra.mxu0 %v3829
        %4429 = vmatprep.subr.mxu0 0.0
        %4430 = vmatpush2.msra.mxu0 0.0
        %4431 = vmatprep.subr.mxu0 0.0
        %4432 = vmatpush2.msra.mxu0 0.0
        %4433 = vmatprep.subr.mxu0 0.0
        %4434 = vmatpush2.msra.mxu0 0.0
        %4435 = vmatprep.subr.mxu0 0.0
        %4436 = vmatpush2.msra.mxu0 0.0
        %4437 = vmatprep.subr.mxu0 0.0
        %4438 = vmatpush2.msra.mxu0 0.0
        %4439 = vmatprep.subr.mxu0 0.0
        %4440 = vmatpush2.msra.mxu0 0.0
        %4441 = vmatprep.subr.mxu0 0.0
        %4442 = vmatpush2.msra.mxu0 0.0
        %4443 = vmatprep.subr.mxu0 0.0
        %4444 = vmatpush2.msra.mxu0 0.0
        %4445 = vmatprep.subr.mxu0 0.0
        %4446 = vmatpush2.msra.mxu0 0.0
        %4447 = vmatprep.subr.mxu0 0.0
        %4448 = vmatpush2.msra.mxu0 0.0
        %4449 = vmatprep.subr.mxu0 0.0
        %4450 = vmatpush2.msra.mxu0 0.0
        %4451 = vmatprep.subr.mxu0 0.0
        %4452 = vmatpush2.msra.mxu0 0.0
        %4453 = vmatprep.subr.mxu0 0.0
        %4454 = vmatpush2.msra.mxu0 0.0
        %4455 = vmatprep.subr.mxu0 0.0
        %4456 = vmatpush2.msra.mxu0 0.0
        %4457 = vmatprep.subr.mxu0 0.0
        %4458 = vmatpush2.msra.mxu0 0.0
        %4459 = vmatprep.subr.mxu0 0.0
        %4460 = vmatpush2.msra.mxu0 0.0
        %4461 = vmatprep.mubr.f32.mxu0 0.0
        %4462 = vmatmul.mubr.f32.gmra.mxu0 %v4118
        %v4463 = vpop.f32.mrf.mxu0
        %v4464 = vadd.f32 0.0, %v4463
        %v4465 = vpop.f32.mrf.mxu0
        %v4466 = vadd.f32 0.0, %v4465
        %4467 = vdwg.mxu0
        %4468 = vmatprep.subr.mxu0 0.0
        %4469 = vmatpush1.msra.mxu0 0.0
        %4470 = vmatprep.subr.mxu0 0.0
        %4471 = vmatpush1.msra.mxu0 0.0
        %4472 = vmatprep.subr.mxu0 %v4149
        %4473 = vmatpush1.msra.mxu0 %v4146
        %4474 = vmatprep.subr.mxu0 %v4084
        %4475 = vmatpush1.msra.mxu0 %v4083
        %4476 = vmatprep.subr.mxu0 %v4063
        %4477 = vmatpush1.msra.mxu0 %v4062
        %4478 = vmatprep.subr.mxu0 %v4042
        %4479 = vmatpush1.msra.mxu0 %v4041
        %4480 = vmatprep.subr.mxu0 %v4021
        %4481 = vmatpush1.msra.mxu0 %v4020
        %4482 = vmatprep.subr.mxu0 %v4000
        %4483 = vmatpush1.msra.mxu0 %v3999
        %4484 = vmatprep.subr.mxu0 %v3979
        %4485 = vmatpush1.msra.mxu0 %v3978
        %4486 = vmatprep.subr.mxu0 %v3958
        %4487 = vmatpush1.msra.mxu0 %v3957
        %4488 = vmatprep.subr.mxu0 %v3937
        %4489 = vmatpush1.msra.mxu0 %v3936
        %4490 = vmatprep.subr.mxu0 %v3916
        %4491 = vmatpush1.msra.mxu0 %v3915
        %4492 = vmatprep.subr.mxu0 %v3895
        %4493 = vmatpush1.msra.mxu0 %v3894
        %4494 = vmatprep.subr.mxu0 %v3874
        %4495 = vmatpush1.msra.mxu0 %v3873
        %4496 = vmatprep.subr.mxu0 %v3853
        %4497 = vmatpush1.msra.mxu0 %v3852
        %4498 = vmatprep.subr.mxu0 %v3832
        %4499 = vmatpush1.msra.mxu0 %v3831
        %4500 = vmatprep.subr.mxu0 0.0
        %4501 = vmatpush2.msra.mxu0 0.0
        %4502 = vmatprep.subr.mxu0 0.0
        %4503 = vmatpush2.msra.mxu0 0.0
        %4504 = vmatprep.subr.mxu0 0.0
        %4505 = vmatpush2.msra.mxu0 0.0
        %4506 = vmatprep.subr.mxu0 0.0
        %4507 = vmatpush2.msra.mxu0 0.0
        %4508 = vmatprep.subr.mxu0 0.0
        %4509 = vmatpush2.msra.mxu0 0.0
        %4510 = vmatprep.subr.mxu0 0.0
        %4511 = vmatpush2.msra.mxu0 0.0
        %4512 = vmatprep.subr.mxu0 0.0
        %4513 = vmatpush2.msra.mxu0 0.0
        %4514 = vmatprep.subr.mxu0 0.0
        %4515 = vmatpush2.msra.mxu0 0.0
        %4516 = vmatprep.subr.mxu0 0.0
        %4517 = vmatpush2.msra.mxu0 0.0
        %4518 = vmatprep.subr.mxu0 0.0
        %4519 = vmatpush2.msra.mxu0 0.0
        %4520 = vmatprep.subr.mxu0 0.0
        %4521 = vmatpush2.msra.mxu0 0.0
        %4522 = vmatprep.subr.mxu0 0.0
        %4523 = vmatpush2.msra.mxu0 0.0
        %4524 = vmatprep.subr.mxu0 0.0
        %4525 = vmatpush2.msra.mxu0 0.0
        %4526 = vmatprep.subr.mxu0 0.0
        %4527 = vmatpush2.msra.mxu0 0.0
        %4528 = vmatprep.subr.mxu0 0.0
        %4529 = vmatpush2.msra.mxu0 0.0
        %4530 = vmatprep.subr.mxu0 0.0
        %4531 = vmatpush2.msra.mxu0 0.0
        %4532 = vmatprep.mubr.f32.mxu0 0.0
        %4533 = vmatmul.mubr.f32.gmra.mxu0 %v4118
        %v4534 = vpop.f32.mrf.mxu0
        %v4535 = vadd.f32 0.0, %v4534
        %v4536 = vpop.f32.mrf.mxu0
        %v4537 = vadd.f32 0.0, %v4536
        %4538 = vdwg.mxu0
        %4539 = vmatprep.subr.mxu0 0.0
        %4540 = vmatpush1.msra.mxu0 0.0
        %4541 = vmatprep.subr.mxu0 0.0
        %4542 = vmatpush1.msra.mxu0 0.0
        %4543 = vmatprep.subr.mxu0 %v4155
        %4544 = vmatpush1.msra.mxu0 %v4152
        %4545 = vmatprep.subr.mxu0 %v4086
        %4546 = vmatpush1.msra.mxu0 %v4085
        %4547 = vmatprep.subr.mxu0 %v4065
        %4548 = vmatpush1.msra.mxu0 %v4064
        %4549 = vmatprep.subr.mxu0 %v4044
        %4550 = vmatpush1.msra.mxu0 %v4043
        %4551 = vmatprep.subr.mxu0 %v4023
        %4552 = vmatpush1.msra.mxu0 %v4022
        %4553 = vmatprep.subr.mxu0 %v4002
        %4554 = vmatpush1.msra.mxu0 %v4001
        %4555 = vmatprep.subr.mxu0 %v3981
        %4556 = vmatpush1.msra.mxu0 %v3980
        %4557 = vmatprep.subr.mxu0 %v3960
        %4558 = vmatpush1.msra.mxu0 %v3959
        %4559 = vmatprep.subr.mxu0 %v3939
        %4560 = vmatpush1.msra.mxu0 %v3938
        %4561 = vmatprep.subr.mxu0 %v3918
        %4562 = vmatpush1.msra.mxu0 %v3917
        %4563 = vmatprep.subr.mxu0 %v3897
        %4564 = vmatpush1.msra.mxu0 %v3896
        %4565 = vmatprep.subr.mxu0 %v3876
        %4566 = vmatpush1.msra.mxu0 %v3875
        %4567 = vmatprep.subr.mxu0 %v3855
        %4568 = vmatpush1.msra.mxu0 %v3854
        %4569 = vmatprep.subr.mxu0 %v3834
        %4570 = vmatpush1.msra.mxu0 %v3833
        %4571 = vmatprep.subr.mxu0 0.0
        %4572 = vmatpush2.msra.mxu0 0.0
        %4573 = vmatprep.subr.mxu0 0.0
        %4574 = vmatpush2.msra.mxu0 0.0
        %4575 = vmatprep.subr.mxu0 0.0
        %4576 = vmatpush2.msra.mxu0 0.0
        %4577 = vmatprep.subr.mxu0 0.0
        %4578 = vmatpush2.msra.mxu0 0.0
        %4579 = vmatprep.subr.mxu0 0.0
        %4580 = vmatpush2.msra.mxu0 0.0
        %4581 = vmatprep.subr.mxu0 0.0
        %4582 = vmatpush2.msra.mxu0 0.0
        %4583 = vmatprep.subr.mxu0 0.0
        %4584 = vmatpush2.msra.mxu0 0.0
        %4585 = vmatprep.subr.mxu0 0.0
        %4586 = vmatpush2.msra.mxu0 0.0
        %4587 = vmatprep.subr.mxu0 0.0
        %4588 = vmatpush2.msra.mxu0 0.0
        %4589 = vmatprep.subr.mxu0 0.0
        %4590 = vmatpush2.msra.mxu0 0.0
        %4591 = vmatprep.subr.mxu0 0.0
        %4592 = vmatpush2.msra.mxu0 0.0
        %4593 = vmatprep.subr.mxu0 0.0
        %4594 = vmatpush2.msra.mxu0 0.0
        %4595 = vmatprep.subr.mxu0 0.0
        %4596 = vmatpush2.msra.mxu0 0.0
        %4597 = vmatprep.subr.mxu0 0.0
        %4598 = vmatpush2.msra.mxu0 0.0
        %4599 = vmatprep.subr.mxu0 0.0
        %4600 = vmatpush2.msra.mxu0 0.0
        %4601 = vmatprep.subr.mxu0 0.0
        %4602 = vmatpush2.msra.mxu0 0.0
        %4603 = vmatprep.mubr.f32.mxu0 0.0
        %4604 = vmatmul.mubr.f32.gmra.mxu0 %v4118
        %v4605 = vpop.f32.mrf.mxu0
        %v4606 = vadd.f32 0.0, %v4605
        %v4607 = vpop.f32.mrf.mxu0
        %v4608 = vadd.f32 0.0, %v4607
        %4609 = vdwg.mxu0
        %4610 = vmatprep.subr.mxu0 0.0
        %4611 = vmatpush1.msra.mxu0 0.0
        %4612 = vmatprep.subr.mxu0 0.0
        %4613 = vmatpush1.msra.mxu0 0.0
        %4614 = vmatprep.subr.mxu0 %v4161
        %4615 = vmatpush1.msra.mxu0 %v4158
        %4616 = vmatprep.subr.mxu0 %v4088
        %4617 = vmatpush1.msra.mxu0 %v4087
        %4618 = vmatprep.subr.mxu0 %v4067
        %4619 = vmatpush1.msra.mxu0 %v4066
        %4620 = vmatprep.subr.mxu0 %v4046
        %4621 = vmatpush1.msra.mxu0 %v4045
        %4622 = vmatprep.subr.mxu0 %v4025
        %4623 = vmatpush1.msra.mxu0 %v4024
        %4624 = vmatprep.subr.mxu0 %v4004
        %4625 = vmatpush1.msra.mxu0 %v4003
        %4626 = vmatprep.subr.mxu0 %v3983
        %4627 = vmatpush1.msra.mxu0 %v3982
        %4628 = vmatprep.subr.mxu0 %v3962
        %4629 = vmatpush1.msra.mxu0 %v3961
        %4630 = vmatprep.subr.mxu0 %v3941
        %4631 = vmatpush1.msra.mxu0 %v3940
        %4632 = vmatprep.subr.mxu0 %v3920
        %4633 = vmatpush1.msra.mxu0 %v3919
        %4634 = vmatprep.subr.mxu0 %v3899
        %4635 = vmatpush1.msra.mxu0 %v3898
        %4636 = vmatprep.subr.mxu0 %v3878
        %4637 = vmatpush1.msra.mxu0 %v3877
        %4638 = vmatprep.subr.mxu0 %v3857
        %4639 = vmatpush1.msra.mxu0 %v3856
        %4640 = vmatprep.subr.mxu0 %v3836
        %4641 = vmatpush1.msra.mxu0 %v3835
        %4642 = vmatprep.subr.mxu0 0.0
        %4643 = vmatpush2.msra.mxu0 0.0
        %4644 = vmatprep.subr.mxu0 0.0
        %4645 = vmatpush2.msra.mxu0 0.0
        %4646 = vmatprep.subr.mxu0 0.0
        %4647 = vmatpush2.msra.mxu0 0.0
        %4648 = vmatprep.subr.mxu0 0.0
        %4649 = vmatpush2.msra.mxu0 0.0
        %4650 = vmatprep.subr.mxu0 0.0
        %4651 = vmatpush2.msra.mxu0 0.0
        %4652 = vmatprep.subr.mxu0 0.0
        %4653 = vmatpush2.msra.mxu0 0.0
        %4654 = vmatprep.subr.mxu0 0.0
        %4655 = vmatpush2.msra.mxu0 0.0
        %4656 = vmatprep.subr.mxu0 0.0
        %4657 = vmatpush2.msra.mxu0 0.0
        %4658 = vmatprep.subr.mxu0 0.0
        %4659 = vmatpush2.msra.mxu0 0.0
        %4660 = vmatprep.subr.mxu0 0.0
        %4661 = vmatpush2.msra.mxu0 0.0
        %4662 = vmatprep.subr.mxu0 0.0
        %4663 = vmatpush2.msra.mxu0 0.0
        %4664 = vmatprep.subr.mxu0 0.0
        %4665 = vmatpush2.msra.mxu0 0.0
        %4666 = vmatprep.subr.mxu0 0.0
        %4667 = vmatpush2.msra.mxu0 0.0
        %4668 = vmatprep.subr.mxu0 0.0
        %4669 = vmatpush2.msra.mxu0 0.0
        %4670 = vmatprep.subr.mxu0 0.0
        %4671 = vmatpush2.msra.mxu0 0.0
        %4672 = vmatprep.subr.mxu0 0.0
        %4673 = vmatpush2.msra.mxu0 0.0
        %4674 = vmatprep.mubr.f32.mxu0 0.0
        %4675 = vmatmul.mubr.f32.gmra.mxu0 %v4118
        %v4676 = vpop.f32.mrf.mxu0
        %v4677 = vadd.f32 0.0, %v4676
        %v4678 = vpop.f32.mrf.mxu0
        %v4679 = vadd.f32 0.0, %v4678
        %4680 = vdwg.mxu0
        %4681 = vmatprep.subr.mxu0 0.0
        %4682 = vmatpush1.msra.mxu0 0.0
        %4683 = vmatprep.subr.mxu0 0.0
        %4684 = vmatpush1.msra.mxu0 0.0
        %4685 = vmatprep.subr.mxu0 %v4167
        %4686 = vmatpush1.msra.mxu0 %v4164
        %4687 = vmatprep.subr.mxu0 %v4090
        %4688 = vmatpush1.msra.mxu0 %v4089
        %4689 = vmatprep.subr.mxu0 %v4069
        %4690 = vmatpush1.msra.mxu0 %v4068
        %4691 = vmatprep.subr.mxu0 %v4048
        %4692 = vmatpush1.msra.mxu0 %v4047
        %4693 = vmatprep.subr.mxu0 %v4027
        %4694 = vmatpush1.msra.mxu0 %v4026
        %4695 = vmatprep.subr.mxu0 %v4006
        %4696 = vmatpush1.msra.mxu0 %v4005
        %4697 = vmatprep.subr.mxu0 %v3985
        %4698 = vmatpush1.msra.mxu0 %v3984
        %4699 = vmatprep.subr.mxu0 %v3964
        %4700 = vmatpush1.msra.mxu0 %v3963
        %4701 = vmatprep.subr.mxu0 %v3943
        %4702 = vmatpush1.msra.mxu0 %v3942
        %4703 = vmatprep.subr.mxu0 %v3922
        %4704 = vmatpush1.msra.mxu0 %v3921
        %4705 = vmatprep.subr.mxu0 %v3901
        %4706 = vmatpush1.msra.mxu0 %v3900
        %4707 = vmatprep.subr.mxu0 %v3880
        %4708 = vmatpush1.msra.mxu0 %v3879
        %4709 = vmatprep.subr.mxu0 %v3859
        %4710 = vmatpush1.msra.mxu0 %v3858
        %4711 = vmatprep.subr.mxu0 %v3838
        %4712 = vmatpush1.msra.mxu0 %v3837
        %4713 = vmatprep.subr.mxu0 0.0
        %4714 = vmatpush2.msra.mxu0 0.0
        %4715 = vmatprep.subr.mxu0 0.0
        %4716 = vmatpush2.msra.mxu0 0.0
        %4717 = vmatprep.subr.mxu0 0.0
        %4718 = vmatpush2.msra.mxu0 0.0
        %4719 = vmatprep.subr.mxu0 0.0
        %4720 = vmatpush2.msra.mxu0 0.0
        %4721 = vmatprep.subr.mxu0 0.0
        %4722 = vmatpush2.msra.mxu0 0.0
        %4723 = vmatprep.subr.mxu0 0.0
        %4724 = vmatpush2.msra.mxu0 0.0
        %4725 = vmatprep.subr.mxu0 0.0
        %4726 = vmatpush2.msra.mxu0 0.0
        %4727 = vmatprep.subr.mxu0 0.0
        %4728 = vmatpush2.msra.mxu0 0.0
        %4729 = vmatprep.subr.mxu0 0.0
        %4730 = vmatpush2.msra.mxu0 0.0
        %4731 = vmatprep.subr.mxu0 0.0
        %4732 = vmatpush2.msra.mxu0 0.0
        %4733 = vmatprep.subr.mxu0 0.0
        %4734 = vmatpush2.msra.mxu0 0.0
        %4735 = vmatprep.subr.mxu0 0.0
        %4736 = vmatpush2.msra.mxu0 0.0
        %4737 = vmatprep.subr.mxu0 0.0
        %4738 = vmatpush2.msra.mxu0 0.0
        %4739 = vmatprep.subr.mxu0 0.0
        %4740 = vmatpush2.msra.mxu0 0.0
        %4741 = vmatprep.subr.mxu0 0.0
        %4742 = vmatpush2.msra.mxu0 0.0
        %4743 = vmatprep.subr.mxu0 0.0
        %4744 = vmatpush2.msra.mxu0 0.0
        %4745 = vmatprep.mubr.f32.mxu0 0.0
        %4746 = vmatmul.mubr.f32.gmra.mxu0 %v4118
        %v4747 = vpop.f32.mrf.mxu0
        %v4748 = vadd.f32 0.0, %v4747
        %v4749 = vpop.f32.mrf.mxu0
        %v4750 = vadd.f32 0.0, %v4749
        %4751 = vdwg.mxu0
        %4752 = vmatprep.subr.mxu0 0.0
        %4753 = vmatpush1.msra.mxu0 0.0
        %4754 = vmatprep.subr.mxu0 0.0
        %4755 = vmatpush1.msra.mxu0 0.0
        %4756 = vmatprep.subr.mxu0 %v4173
        %4757 = vmatpush1.msra.mxu0 %v4170
        %4758 = vmatprep.subr.mxu0 %v4092
        %4759 = vmatpush1.msra.mxu0 %v4091
        %4760 = vmatprep.subr.mxu0 %v4071
        %4761 = vmatpush1.msra.mxu0 %v4070
        %4762 = vmatprep.subr.mxu0 %v4050
        %4763 = vmatpush1.msra.mxu0 %v4049
        %4764 = vmatprep.subr.mxu0 %v4029
        %4765 = vmatpush1.msra.mxu0 %v4028
        %4766 = vmatprep.subr.mxu0 %v4008
        %4767 = vmatpush1.msra.mxu0 %v4007
        %4768 = vmatprep.subr.mxu0 %v3987
        %4769 = vmatpush1.msra.mxu0 %v3986
        %4770 = vmatprep.subr.mxu0 %v3966
        %4771 = vmatpush1.msra.mxu0 %v3965
        %4772 = vmatprep.subr.mxu0 %v3945
        %4773 = vmatpush1.msra.mxu0 %v3944
        %4774 = vmatprep.subr.mxu0 %v3924
        %4775 = vmatpush1.msra.mxu0 %v3923
        %4776 = vmatprep.subr.mxu0 %v3903
        %4777 = vmatpush1.msra.mxu0 %v3902
        %4778 = vmatprep.subr.mxu0 %v3882
        %4779 = vmatpush1.msra.mxu0 %v3881
        %4780 = vmatprep.subr.mxu0 %v3861
        %4781 = vmatpush1.msra.mxu0 %v3860
        %4782 = vmatprep.subr.mxu0 %v3840
        %4783 = vmatpush1.msra.mxu0 %v3839
        %4784 = vmatprep.subr.mxu0 0.0
        %4785 = vmatpush2.msra.mxu0 0.0
        %4786 = vmatprep.subr.mxu0 0.0
        %4787 = vmatpush2.msra.mxu0 0.0
        %4788 = vmatprep.subr.mxu0 0.0
        %4789 = vmatpush2.msra.mxu0 0.0
        %4790 = vmatprep.subr.mxu0 0.0
        %4791 = vmatpush2.msra.mxu0 0.0
        %4792 = vmatprep.subr.mxu0 0.0
        %4793 = vmatpush2.msra.mxu0 0.0
        %4794 = vmatprep.subr.mxu0 0.0
        %4795 = vmatpush2.msra.mxu0 0.0
        %4796 = vmatprep.subr.mxu0 0.0
        %4797 = vmatpush2.msra.mxu0 0.0
        %4798 = vmatprep.subr.mxu0 0.0
        %4799 = vmatpush2.msra.mxu0 0.0
        %4800 = vmatprep.subr.mxu0 0.0
        %4801 = vmatpush2.msra.mxu0 0.0
        %4802 = vmatprep.subr.mxu0 0.0
        %4803 = vmatpush2.msra.mxu0 0.0
        %4804 = vmatprep.subr.mxu0 0.0
        %4805 = vmatpush2.msra.mxu0 0.0
        %4806 = vmatprep.subr.mxu0 0.0
        %4807 = vmatpush2.msra.mxu0 0.0
        %4808 = vmatprep.subr.mxu0 0.0
        %4809 = vmatpush2.msra.mxu0 0.0
        %4810 = vmatprep.subr.mxu0 0.0
        %4811 = vmatpush2.msra.mxu0 0.0
        %4812 = vmatprep.subr.mxu0 0.0
        %4813 = vmatpush2.msra.mxu0 0.0
        %4814 = vmatprep.subr.mxu0 0.0
        %4815 = vmatpush2.msra.mxu0 0.0
        %4816 = vmatprep.mubr.f32.mxu0 0.0
        %4817 = vmatmul.mubr.f32.gmra.mxu0 %v4118
        %v4818 = vpop.f32.mrf.mxu0
        %v4819 = vadd.f32 0.0, %v4818
        %v4820 = vpop.f32.mrf.mxu0
        %v4821 = vadd.f32 0.0, %v4820
        %4822 = vdwg.mxu0
        %4823 = vmatprep.subr.mxu0 0.0
        %4824 = vmatpush1.msra.mxu0 0.0
        %4825 = vmatprep.subr.mxu0 0.0
        %4826 = vmatpush1.msra.mxu0 0.0
        %4827 = vmatprep.subr.mxu0 %v4179
        %4828 = vmatpush1.msra.mxu0 %v4176
        %4829 = vmatprep.subr.mxu0 %v4094
        %4830 = vmatpush1.msra.mxu0 %v4093
        %4831 = vmatprep.subr.mxu0 %v4073
        %4832 = vmatpush1.msra.mxu0 %v4072
        %4833 = vmatprep.subr.mxu0 %v4052
        %4834 = vmatpush1.msra.mxu0 %v4051
        %4835 = vmatprep.subr.mxu0 %v4031
        %4836 = vmatpush1.msra.mxu0 %v4030
        %4837 = vmatprep.subr.mxu0 %v4010
        %4838 = vmatpush1.msra.mxu0 %v4009
        %4839 = vmatprep.subr.mxu0 %v3989
        %4840 = vmatpush1.msra.mxu0 %v3988
        %4841 = vmatprep.subr.mxu0 %v3968
        %4842 = vmatpush1.msra.mxu0 %v3967
        %4843 = vmatprep.subr.mxu0 %v3947
        %4844 = vmatpush1.msra.mxu0 %v3946
        %4845 = vmatprep.subr.mxu0 %v3926
        %4846 = vmatpush1.msra.mxu0 %v3925
        %4847 = vmatprep.subr.mxu0 %v3905
        %4848 = vmatpush1.msra.mxu0 %v3904
        %4849 = vmatprep.subr.mxu0 %v3884
        %4850 = vmatpush1.msra.mxu0 %v3883
        %4851 = vmatprep.subr.mxu0 %v3863
        %4852 = vmatpush1.msra.mxu0 %v3862
        %4853 = vmatprep.subr.mxu0 %v3842
        %4854 = vmatpush1.msra.mxu0 %v3841
        %4855 = vmatprep.subr.mxu0 0.0
        %4856 = vmatpush2.msra.mxu0 0.0
        %4857 = vmatprep.subr.mxu0 0.0
        %4858 = vmatpush2.msra.mxu0 0.0
        %4859 = vmatprep.subr.mxu0 0.0
        %4860 = vmatpush2.msra.mxu0 0.0
        %4861 = vmatprep.subr.mxu0 0.0
        %4862 = vmatpush2.msra.mxu0 0.0
        %4863 = vmatprep.subr.mxu0 0.0
        %4864 = vmatpush2.msra.mxu0 0.0
        %4865 = vmatprep.subr.mxu0 0.0
        %4866 = vmatpush2.msra.mxu0 0.0
        %4867 = vmatprep.subr.mxu0 0.0
        %4868 = vmatpush2.msra.mxu0 0.0
        %4869 = vmatprep.subr.mxu0 0.0
        %4870 = vmatpush2.msra.mxu0 0.0
        %4871 = vmatprep.subr.mxu0 0.0
        %4872 = vmatpush2.msra.mxu0 0.0
        %4873 = vmatprep.subr.mxu0 0.0
        %4874 = vmatpush2.msra.mxu0 0.0
        %4875 = vmatprep.subr.mxu0 0.0
        %4876 = vmatpush2.msra.mxu0 0.0
        %4877 = vmatprep.subr.mxu0 0.0
        %4878 = vmatpush2.msra.mxu0 0.0
        %4879 = vmatprep.subr.mxu0 0.0
        %4880 = vmatpush2.msra.mxu0 0.0
        %4881 = vmatprep.subr.mxu0 0.0
        %4882 = vmatpush2.msra.mxu0 0.0
        %4883 = vmatprep.subr.mxu0 0.0
        %4884 = vmatpush2.msra.mxu0 0.0
        %4885 = vmatprep.subr.mxu0 0.0
        %4886 = vmatpush2.msra.mxu0 0.0
        %4887 = vmatprep.mubr.f32.mxu0 0.0
        %4888 = vmatmul.mubr.f32.gmra.mxu0 %v4118
        %v4889 = vpop.f32.mrf.mxu0
        %v4890 = vadd.f32 0.0, %v4889
        %v4891 = vpop.f32.mrf.mxu0
        %v4892 = vadd.f32 0.0, %v4891
        %4893 = vdwg.mxu0
        %4894 = vmatprep.subr.mxu0 0.0
        %4895 = vmatpush1.msra.mxu0 0.0
        %4896 = vmatprep.subr.mxu0 0.0
        %4897 = vmatpush1.msra.mxu0 0.0
        %4898 = vmatprep.subr.mxu0 0.0
        %4899 = vmatpush1.msra.mxu0 %v4182
        %4900 = vmatprep.subr.mxu0 0.0
        %4901 = vmatpush1.msra.mxu0 %v4095
        %4902 = vmatprep.subr.mxu0 0.0
        %4903 = vmatpush1.msra.mxu0 %v4074
        %4904 = vmatprep.subr.mxu0 0.0
        %4905 = vmatpush1.msra.mxu0 %v4053
        %4906 = vmatprep.subr.mxu0 0.0
        %4907 = vmatpush1.msra.mxu0 %v4032
        %4908 = vmatprep.subr.mxu0 0.0
        %4909 = vmatpush1.msra.mxu0 %v4011
        %4910 = vmatprep.subr.mxu0 0.0
        %4911 = vmatpush1.msra.mxu0 %v3990
        %4912 = vmatprep.subr.mxu0 0.0
        %4913 = vmatpush1.msra.mxu0 %v3969
        %4914 = vmatprep.subr.mxu0 0.0
        %4915 = vmatpush1.msra.mxu0 %v3948
        %4916 = vmatprep.subr.mxu0 0.0
        %4917 = vmatpush1.msra.mxu0 %v3927
        %4918 = vmatprep.subr.mxu0 0.0
        %4919 = vmatpush1.msra.mxu0 %v3906
        %4920 = vmatprep.subr.mxu0 0.0
        %4921 = vmatpush1.msra.mxu0 %v3885
        %4922 = vmatprep.subr.mxu0 0.0
        %4923 = vmatpush1.msra.mxu0 %v3864
        %4924 = vmatprep.subr.mxu0 0.0
        %4925 = vmatpush1.msra.mxu0 %v3843
        %4926 = vmatprep.subr.mxu0 0.0
        %4927 = vmatpush2.msra.mxu0 0.0
        %4928 = vmatprep.subr.mxu0 0.0
        %4929 = vmatpush2.msra.mxu0 0.0
        %4930 = vmatprep.subr.mxu0 0.0
        %4931 = vmatpush2.msra.mxu0 0.0
        %4932 = vmatprep.subr.mxu0 0.0
        %4933 = vmatpush2.msra.mxu0 0.0
        %4934 = vmatprep.subr.mxu0 0.0
        %4935 = vmatpush2.msra.mxu0 0.0
        %4936 = vmatprep.subr.mxu0 0.0
        %4937 = vmatpush2.msra.mxu0 0.0
        %4938 = vmatprep.subr.mxu0 0.0
        %4939 = vmatpush2.msra.mxu0 0.0
        %4940 = vmatprep.subr.mxu0 0.0
        %4941 = vmatpush2.msra.mxu0 0.0
        %4942 = vmatprep.subr.mxu0 0.0
        %4943 = vmatpush2.msra.mxu0 0.0
        %4944 = vmatprep.subr.mxu0 0.0
        %4945 = vmatpush2.msra.mxu0 0.0
        %4946 = vmatprep.subr.mxu0 0.0
        %4947 = vmatpush2.msra.mxu0 0.0
        %4948 = vmatprep.subr.mxu0 0.0
        %4949 = vmatpush2.msra.mxu0 0.0
        %4950 = vmatprep.subr.mxu0 0.0
        %4951 = vmatpush2.msra.mxu0 0.0
        %4952 = vmatprep.subr.mxu0 0.0
        %4953 = vmatpush2.msra.mxu0 0.0
        %4954 = vmatprep.subr.mxu0 0.0
        %4955 = vmatpush2.msra.mxu0 0.0
        %4956 = vmatprep.subr.mxu0 0.0
        %4957 = vmatpush2.msra.mxu0 0.0
        %4958 = vmatprep.mubr.f32.mxu0 0.0
        %4959 = vmatmul.mubr.f32.gmra.mxu0 %v4118
        %v4960 = vpop.f32.mrf.mxu0
        %v4961 = vadd.f32 0.0, %v4960
        %v4962 = vpop.f32.mrf.mxu0
        %4963 = vdwg.mxu0
        %4964 = vst [vmem:[%s172] sm:$0xff] %v4251
        %4965 = vst [vmem:[%s172 + $0x8] sm:$0xff] %v4253
        %4966 = vst [vmem:[%s172 + $0x10] sm:$0xff] %v4322
        %4967 = vst [vmem:[%s172 + $0x18] sm:$0xff] %v4324
        %4968 = vst [vmem:[%s172 + $0x20] sm:$0xff] %v4393
        %4969 = vst [vmem:[%s172 + $0x28] sm:$0xff] %v4395
        %4970 = vst [vmem:[%s172 + $0x30] sm:$0xff] %v4464
        %4971 = vst [vmem:[%s172 + $0x38] sm:$0xff] %v4466
        %4972 = vst [vmem:[%s172 + $0x40] sm:$0xff] %v4535
        %4973 = vst [vmem:[%s172 + $0x48] sm:$0xff] %v4537
        %4974 = vst [vmem:[%s172 + $0x50] sm:$0xff] %v4606
        %4975 = vst [vmem:[%s172 + $0x58] sm:$0xff] %v4608
        %4976 = vst [vmem:[%s172 + $0x60] sm:$0xff] %v4677
        %4977 = vst [vmem:[%s172 + $0x68] sm:$0xff] %v4679
        %4978 = vst [vmem:[%s172 + $0x70] sm:$0xff] %v4748
        %4979 = vst [vmem:[%s172 + $0x78] sm:$0xff] %v4750
        %4980 = vst [vmem:[%s172 + $0x80] sm:$0xff] %v4819
        %4981 = vst [vmem:[%s172 + $0x88] sm:$0xff] %v4821
        %4982 = vst [vmem:[%s172 + $0x90] sm:$0xff] %v4890
        %4983 = vst [vmem:[%s172 + $0x98] sm:$0xff] %v4892
        %vm4984 = vcmask 261120
        %4985 = vst.msk [vmem:[%s172 + $0xa0] sm:$0xff] %vm4984, %v4961
        %s4986 = sand.u32 %s75, 1
        %s4987 = scalar_lea.sflag [#allocation5], %s4986
        %s4988 = sand.u32 %s75, 1
        %s4989 = smul.addr %s4988, 168
        %s4990 = scalar_lea.vmem [#allocation8], %s4989
        // Predicated region
        $region37: #{tpu_custom_call.1} parent=27 // pred_check
          %p4991 = pneg %p85
        $region38: #{tpu_custom_call.1} parent=27 // pred_check_branch
          %4993 = sbr.rel (%p4991) target = $region40
        $region39: #{tpu_custom_call.1} parent=27 // pred_region
          %s4995 = ssub.s32 2688, 2688
          %4996 = vsyncadd %s4987, %s4995
          %s4997 = smul.addr %s20, 21
          %s4998 = smul.addr %s4997, 128
          %s4999 = scalar_lea.hbm %s2, %s4998
          %s5001 = sshll.u32 %s4990, 4
          %s5002 = int_to_ptr.vmem [resolvable:$true] %s5001
          %5004 = dma.vmem_to_hbm [thread:$0]  %s5002, 2688, %s4999, %s4987
        $region40: #{tpu_custom_call.1} parent=27 // pred_fallthru
          _
      $region28: #{tpu_custom_call.1} parent=5 // pred_fallthru
        _
      %p5005 = scmp.le.s32.totalorder 2, %s15
      // Predicated region
      $region41: #{tpu_custom_call.1} parent=5 // pred_check
        %p5006 = pneg %p5005
      $region42: #{tpu_custom_call.1} parent=5 // pred_check_branch
        %5008 = sbr.rel (%p5006) target = $region44
      $region43: #{tpu_custom_call.1} parent=5 // pred_region
        %s5009 = ssub.s32 %s15, 2
        // Predicated region
        $region45: #{tpu_custom_call.1} parent=43 // pred_check
          %p5010 = pneg %p91
        $region46: #{tpu_custom_call.1} parent=43 // pred_check_branch
          %5012 = sbr.rel (%p5010) target = $region48
        $region47: #{tpu_custom_call.1} parent=43 // pred_region
          %s5013 = sand.u32 %s76, 1
          %s5014 = scalar_lea.sflag [#allocation5], %s5013
          %s5015 = sand.u32 %s76, 1
          %s5016 = smul.addr %s5015, 168
          %s5017 = scalar_lea.vmem [#allocation8], %s5016
          %5018 = dma.done %s5014, 2688
        $region48: #{tpu_custom_call.1} parent=43 // pred_fallthru
          _
      $region44: #{tpu_custom_call.1} parent=5 // pred_fallthru
        _
    $region6: #{tpu_custom_call.1} parent=1 // loop_footer
      %s19 = sadd.s32 1, %s15
    $region7: #{tpu_custom_call.1} parent=1 // loop_footer_branch
      %14 = sbr.rel target = $region3
    $region8: #{tpu_custom_call.1} parent=1 // loop_exit
      _
    %5019 = vsyncpa [#allocation4], 1
    %s5020 = scalar_lea.sflag [#allocation4], 1
    %5021 = vsyncpa %s5020, 1
    %5022 = vsyncpa [#allocation7], 1
    %5023 = vsyncpa [#allocation5], 1
    %s5024 = scalar_lea.sflag [#allocation5], 1
    %5025 = vsyncpa %s5024, 1

</llo_original>
